<compile_context>
chip_gen: v7x
topology: tpu7x:2x2x1
jax: 0.10.0
libtpu: 0.0.40
codegen_flags: <defaults>
</compile_context>

<pallas_src>
import jax
import jax.numpy as jnp
from jax.experimental import pallas as pl
from jax.experimental.pallas import tpu as pltpu

IN_FEATURES = 2
HIDDEN = 8
OUT_FEATURES = 1

SUB = 8            # sublanes per vreg
LANE = 128         # lanes per vreg
C = LANE           # lane width of one batch row-slab
MAX_TILE_R = 512   # rows per grid step (512*128 f32 = 256 KiB per plane)

# Packed-parameter layout inside the flat (33,) f32 SMEM array.
_W1_OFF = 0        # w1[j, i] at 2*j + i   (16 values)
_B1_OFF = 16       # b1[j]                 (8 values)
_W2_OFF = 24       # w2[j]                 (8 values)
_B2_OFF = 32       # b2                    (1 value)


def _net_kernel(p_ref, x_ref, o_ref):
    # p_ref: SMEM (33,) f32 packed params
    # x_ref: VMEM (2, TILE_R, C) f32  -- batch on (sublane, lane)
    # o_ref: VMEM (TILE_R, C) f32
    x0 = x_ref[0]                                   # (TILE_R, C)
    x1 = x_ref[1]
    # Accumulator seeded with b2 (saves the final bias add).
    y = jnp.full_like(x0, p_ref[_B2_OFF])
    # Fully unrolled VPU FMA chain + EUP tanh; no MXU, no cross-lane reduce.
    for j in range(HIDDEN):
        h_j = jnp.tanh(p_ref[_W1_OFF + 2 * j] * x0
                       + p_ref[_W1_OFF + 2 * j + 1] * x1
                       + p_ref[_B1_OFF + j])
        y = y + p_ref[_W2_OFF + j] * h_j
    o_ref[...] = y.astype(o_ref.dtype)


def _round_up(n, m):
    return ((n + m - 1) // m) * m


def _pack_params(w1, b1, w2, b2):
    return jnp.concatenate([
        w1.reshape(-1), b1.reshape(-1), w2.reshape(-1), b2.reshape(-1)
    ]).astype(jnp.float32)


def reference_forward(x, w1, b1, w2, b2):
    h = jnp.tanh(x @ w1.T + b1)
    return h @ w2.T + b2


def net_forward(x, w1, b1, w2, b2):
    """x: (B, 2). Weights in PyTorch nn.Linear convention:
    w1 (8,2), b1 (8,), w2 (1,8), b2 (1,).  Returns (B, 1) f32."""
    B = x.shape[0]
    if B < LANE:
        # Tiny batch: a single fused XLA op beats kernel launch + relayout.
        return reference_forward(x.astype(jnp.float32), w1, b1, w2, b2)

    # Batch tiling: rows of C lanes, tile_r sublane-rows per grid step.
    r = pl.cdiv(B, C)
    r = _round_up(r, SUB)                  # full (8,128) vreg granules
    tile_r = min(MAX_TILE_R, r)
    R = _round_up(r, tile_r)
    Bp = R * C

    # (B,2) -> zero-padded (2, R, C); batch element n lives at (n // C, n % C).
    xT = jnp.zeros((IN_FEATURES, Bp), jnp.float32).at[:, :B].set(
        x.T.astype(jnp.float32))
    x3 = xT.reshape(IN_FEATURES, R, C)

    params = _pack_params(w1, b1, w2, b2)  # (33,) f32 -> SMEM

    out = pl.pallas_call(
        _net_kernel,
        out_shape=jax.ShapeDtypeStruct((R, C), jnp.float32),
        grid=(R // tile_r,),
        in_specs=[
            pl.BlockSpec(memory_space=pltpu.MemorySpace.SMEM),            # params
            pl.BlockSpec((IN_FEATURES, tile_r, C), lambda i: (0, i, 0)),  # x slab
        ],
        out_specs=pl.BlockSpec((tile_r, C), lambda i: (i, 0)),
        compiler_params=pltpu.CompilerParams(
            dimension_semantics=("parallel",)),
    )(params, x3)

    # Drop batch padding (padded lanes hold finite tanh(b1) garbage) -> (B, 1).
    return out.reshape(Bp)[:B].reshape(B, OUT_FEATURES)


def init_params(key):
    # Deterministic init mimicking nn.Linear's uniform(-1/sqrt(fan_in), +).
    k1, k2, k3, k4 = jax.random.split(key, 4)
    bound1 = 1.0 / jnp.sqrt(jnp.float32(IN_FEATURES))
    bound2 = 1.0 / jnp.sqrt(jnp.float32(HIDDEN))
    w1 = jax.random.uniform(k1, (HIDDEN, IN_FEATURES), jnp.float32, -bound1, bound1)
    b1 = jax.random.uniform(k2, (HIDDEN,), jnp.float32, -bound1, bound1)
    w2 = jax.random.uniform(k3, (OUT_FEATURES, HIDDEN), jnp.float32, -bound2, bound2)
    b2 = jax.random.uniform(k4, (OUT_FEATURES,), jnp.float32, -bound2, bound2)
    return w1, b1, w2, b2


if __name__ == "__main__":
    key = jax.random.PRNGKey(0)
    k_params, k_small, k_big = jax.random.split(key, 3)
    w1, b1, w2, b2 = init_params(k_params)

    # Pallas path: batch large enough to exercise the (8,128)-slab layout,
    # a 2-step grid (tile_r=512, C=128) and the batch-padding tail.
    B_big = 100_000
    x_big = jax.random.normal(k_big, (B_big, IN_FEATURES), jnp.float32)
    out_big = jax.block_until_ready(net_forward(x_big, w1, b1, w2, b2))
    ref_big = reference_forward(x_big, w1, b1, w2, b2)
    assert out_big.shape == (B_big, OUT_FEATURES)
    assert jnp.allclose(out_big, ref_big, atol=1e-4, rtol=1e-4)

    # Tiny-batch path (B=8, the demo.py size) uses the fused XLA fallback.
    B_small = 8
    x_small = jax.random.normal(k_small, (B_small, IN_FEATURES), jnp.float32)
    out_small = jax.block_until_ready(net_forward(x_small, w1, b1, w2, b2))
    ref_small = reference_forward(x_small, w1, b1, w2, b2)
    assert out_small.shape == (B_small, OUT_FEATURES)
    assert jnp.allclose(out_small, ref_small, atol=1e-5, rtol=1e-5)

    print("KERNEL_OK")
</pallas_src>

<mosaic_0001>
module attributes {stable_mosaic.version = 11 : i64} {
  func.func @_net_kernel(%arg0: i32, %arg1: memref<33xf32, #tpu.memory_space<smem>>, %arg2: memref<2x512x128xf32, #tpu.memory_space<vmem>>, %arg3: memref<512x128xf32, #tpu.memory_space<vmem>>) attributes {dimension_semantics = [#tpu.dimension_semantics<parallel>], iteration_bounds = array<i64: 2>, scalar_prefetch = 0 : i64, scratch_operands = 0 : i64, tpu.core_type = #tpu.core_type<tc>, window_params = [{transform_indices = @transform_0, window_bounds = array<i64: 33>}, {transform_indices = @transform_1, window_bounds = array<i64: 2, 512, 128>}, {transform_indices = @transform_2, window_bounds = array<i64: 512, 128>}]} {
    %c0 = arith.constant 0 : index
    %c0_0 = arith.constant 0 : index
    %c0_1 = arith.constant 0 : index
    %0 = vector.load %arg2[%c0, %c0_0, %c0_1] : memref<2x512x128xf32, #tpu.memory_space<vmem>>, vector<1x512x128xf32>
    %1 = vector.shape_cast %0 : vector<1x512x128xf32> to vector<512x128xf32>
    %c1 = arith.constant 1 : index
    %c0_2 = arith.constant 0 : index
    %c0_3 = arith.constant 0 : index
    %2 = vector.load %arg2[%c1, %c0_2, %c0_3] : memref<2x512x128xf32, #tpu.memory_space<vmem>>, vector<1x512x128xf32>
    %3 = vector.shape_cast %2 : vector<1x512x128xf32> to vector<512x128xf32>
    %c32 = arith.constant 32 : index
    %4 = memref.load %arg1[%c32] : memref<33xf32, #tpu.memory_space<smem>>
    %5 = vector.broadcast %4 : f32 to vector<512x128xf32>
    %c0_4 = arith.constant 0 : index
    %6 = memref.load %arg1[%c0_4] : memref<33xf32, #tpu.memory_space<smem>>
    %7 = vector.broadcast %6 : f32 to vector<512x128xf32>
    %8 = arith.mulf %7, %1 : vector<512x128xf32>
    %c1_5 = arith.constant 1 : index
    %9 = memref.load %arg1[%c1_5] : memref<33xf32, #tpu.memory_space<smem>>
    %10 = vector.broadcast %9 : f32 to vector<512x128xf32>
    %11 = arith.mulf %10, %3 : vector<512x128xf32>
    %12 = arith.addf %8, %11 : vector<512x128xf32>
    %c16 = arith.constant 16 : index
    %13 = memref.load %arg1[%c16] : memref<33xf32, #tpu.memory_space<smem>>
    %14 = vector.broadcast %13 : f32 to vector<512x128xf32>
    %15 = arith.addf %12, %14 : vector<512x128xf32>
    %16 = math.tanh %15 : vector<512x128xf32>
    %c24 = arith.constant 24 : index
    %17 = memref.load %arg1[%c24] : memref<33xf32, #tpu.memory_space<smem>>
    %18 = vector.broadcast %17 : f32 to vector<512x128xf32>
    %19 = arith.mulf %18, %16 : vector<512x128xf32>
    %20 = arith.addf %5, %19 : vector<512x128xf32>
    %c2 = arith.constant 2 : index
    %21 = memref.load %arg1[%c2] : memref<33xf32, #tpu.memory_space<smem>>
    %22 = vector.broadcast %21 : f32 to vector<512x128xf32>
    %23 = arith.mulf %22, %1 : vector<512x128xf32>
    %c3 = arith.constant 3 : index
    %24 = memref.load %arg1[%c3] : memref<33xf32, #tpu.memory_space<smem>>
    %25 = vector.broadcast %24 : f32 to vector<512x128xf32>
    %26 = arith.mulf %25, %3 : vector<512x128xf32>
    %27 = arith.addf %23, %26 : vector<512x128xf32>
    %c17 = arith.constant 17 : index
    %28 = memref.load %arg1[%c17] : memref<33xf32, #tpu.memory_space<smem>>
    %29 = vector.broadcast %28 : f32 to vector<512x128xf32>
    %30 = arith.addf %27, %29 : vector<512x128xf32>
    %31 = math.tanh %30 : vector<512x128xf32>
    %c25 = arith.constant 25 : index
    %32 = memref.load %arg1[%c25] : memref<33xf32, #tpu.memory_space<smem>>
    %33 = vector.broadcast %32 : f32 to vector<512x128xf32>
    %34 = arith.mulf %33, %31 : vector<512x128xf32>
    %35 = arith.addf %20, %34 : vector<512x128xf32>
    %c4 = arith.constant 4 : index
    %36 = memref.load %arg1[%c4] : memref<33xf32, #tpu.memory_space<smem>>
    %37 = vector.broadcast %36 : f32 to vector<512x128xf32>
    %38 = arith.mulf %37, %1 : vector<512x128xf32>
    %c5 = arith.constant 5 : index
    %39 = memref.load %arg1[%c5] : memref<33xf32, #tpu.memory_space<smem>>
    %40 = vector.broadcast %39 : f32 to vector<512x128xf32>
    %41 = arith.mulf %40, %3 : vector<512x128xf32>
    %42 = arith.addf %38, %41 : vector<512x128xf32>
    %c18 = arith.constant 18 : index
    %43 = memref.load %arg1[%c18] : memref<33xf32, #tpu.memory_space<smem>>
    %44 = vector.broadcast %43 : f32 to vector<512x128xf32>
    %45 = arith.addf %42, %44 : vector<512x128xf32>
    %46 = math.tanh %45 : vector<512x128xf32>
    %c26 = arith.constant 26 : index
    %47 = memref.load %arg1[%c26] : memref<33xf32, #tpu.memory_space<smem>>
    %48 = vector.broadcast %47 : f32 to vector<512x128xf32>
    %49 = arith.mulf %48, %46 : vector<512x128xf32>
    %50 = arith.addf %35, %49 : vector<512x128xf32>
    %c6 = arith.constant 6 : index
    %51 = memref.load %arg1[%c6] : memref<33xf32, #tpu.memory_space<smem>>
    %52 = vector.broadcast %51 : f32 to vector<512x128xf32>
    %53 = arith.mulf %52, %1 : vector<512x128xf32>
    %c7 = arith.constant 7 : index
    %54 = memref.load %arg1[%c7] : memref<33xf32, #tpu.memory_space<smem>>
    %55 = vector.broadcast %54 : f32 to vector<512x128xf32>
    %56 = arith.mulf %55, %3 : vector<512x128xf32>
    %57 = arith.addf %53, %56 : vector<512x128xf32>
    %c19 = arith.constant 19 : index
    %58 = memref.load %arg1[%c19] : memref<33xf32, #tpu.memory_space<smem>>
    %59 = vector.broadcast %58 : f32 to vector<512x128xf32>
    %60 = arith.addf %57, %59 : vector<512x128xf32>
    %61 = math.tanh %60 : vector<512x128xf32>
    %c27 = arith.constant 27 : index
    %62 = memref.load %arg1[%c27] : memref<33xf32, #tpu.memory_space<smem>>
    %63 = vector.broadcast %62 : f32 to vector<512x128xf32>
    %64 = arith.mulf %63, %61 : vector<512x128xf32>
    %65 = arith.addf %50, %64 : vector<512x128xf32>
    %c8 = arith.constant 8 : index
    %66 = memref.load %arg1[%c8] : memref<33xf32, #tpu.memory_space<smem>>
    %67 = vector.broadcast %66 : f32 to vector<512x128xf32>
    %68 = arith.mulf %67, %1 : vector<512x128xf32>
    %c9 = arith.constant 9 : index
    %69 = memref.load %arg1[%c9] : memref<33xf32, #tpu.memory_space<smem>>
    %70 = vector.broadcast %69 : f32 to vector<512x128xf32>
    %71 = arith.mulf %70, %3 : vector<512x128xf32>
    %72 = arith.addf %68, %71 : vector<512x128xf32>
    %c20 = arith.constant 20 : index
    %73 = memref.load %arg1[%c20] : memref<33xf32, #tpu.memory_space<smem>>
    %74 = vector.broadcast %73 : f32 to vector<512x128xf32>
    %75 = arith.addf %72, %74 : vector<512x128xf32>
    %76 = math.tanh %75 : vector<512x128xf32>
    %c28 = arith.constant 28 : index
    %77 = memref.load %arg1[%c28] : memref<33xf32, #tpu.memory_space<smem>>
    %78 = vector.broadcast %77 : f32 to vector<512x128xf32>
    %79 = arith.mulf %78, %76 : vector<512x128xf32>
    %80 = arith.addf %65, %79 : vector<512x128xf32>
    %c10 = arith.constant 10 : index
    %81 = memref.load %arg1[%c10] : memref<33xf32, #tpu.memory_space<smem>>
    %82 = vector.broadcast %81 : f32 to vector<512x128xf32>
    %83 = arith.mulf %82, %1 : vector<512x128xf32>
    %c11 = arith.constant 11 : index
    %84 = memref.load %arg1[%c11] : memref<33xf32, #tpu.memory_space<smem>>
    %85 = vector.broadcast %84 : f32 to vector<512x128xf32>
    %86 = arith.mulf %85, %3 : vector<512x128xf32>
    %87 = arith.addf %83, %86 : vector<512x128xf32>
    %c21 = arith.constant 21 : index
    %88 = memref.load %arg1[%c21] : memref<33xf32, #tpu.memory_space<smem>>
    %89 = vector.broadcast %88 : f32 to vector<512x128xf32>
    %90 = arith.addf %87, %89 : vector<512x128xf32>
    %91 = math.tanh %90 : vector<512x128xf32>
    %c29 = arith.constant 29 : index
    %92 = memref.load %arg1[%c29] : memref<33xf32, #tpu.memory_space<smem>>
    %93 = vector.broadcast %92 : f32 to vector<512x128xf32>
    %94 = arith.mulf %93, %91 : vector<512x128xf32>
    %95 = arith.addf %80, %94 : vector<512x128xf32>
    %c12 = arith.constant 12 : index
    %96 = memref.load %arg1[%c12] : memref<33xf32, #tpu.memory_space<smem>>
    %97 = vector.broadcast %96 : f32 to vector<512x128xf32>
    %98 = arith.mulf %97, %1 : vector<512x128xf32>
    %c13 = arith.constant 13 : index
    %99 = memref.load %arg1[%c13] : memref<33xf32, #tpu.memory_space<smem>>
    %100 = vector.broadcast %99 : f32 to vector<512x128xf32>
    %101 = arith.mulf %100, %3 : vector<512x128xf32>
    %102 = arith.addf %98, %101 : vector<512x128xf32>
    %c22 = arith.constant 22 : index
    %103 = memref.load %arg1[%c22] : memref<33xf32, #tpu.memory_space<smem>>
    %104 = vector.broadcast %103 : f32 to vector<512x128xf32>
    %105 = arith.addf %102, %104 : vector<512x128xf32>
    %106 = math.tanh %105 : vector<512x128xf32>
    %c30 = arith.constant 30 : index
    %107 = memref.load %arg1[%c30] : memref<33xf32, #tpu.memory_space<smem>>
    %108 = vector.broadcast %107 : f32 to vector<512x128xf32>
    %109 = arith.mulf %108, %106 : vector<512x128xf32>
    %110 = arith.addf %95, %109 : vector<512x128xf32>
    %c14 = arith.constant 14 : index
    %111 = memref.load %arg1[%c14] : memref<33xf32, #tpu.memory_space<smem>>
    %112 = vector.broadcast %111 : f32 to vector<512x128xf32>
    %113 = arith.mulf %112, %1 : vector<512x128xf32>
    %c15 = arith.constant 15 : index
    %114 = memref.load %arg1[%c15] : memref<33xf32, #tpu.memory_space<smem>>
    %115 = vector.broadcast %114 : f32 to vector<512x128xf32>
    %116 = arith.mulf %115, %3 : vector<512x128xf32>
    %117 = arith.addf %113, %116 : vector<512x128xf32>
    %c23 = arith.constant 23 : index
    %118 = memref.load %arg1[%c23] : memref<33xf32, #tpu.memory_space<smem>>
    %119 = vector.broadcast %118 : f32 to vector<512x128xf32>
    %120 = arith.addf %117, %119 : vector<512x128xf32>
    %121 = math.tanh %120 : vector<512x128xf32>
    %c31 = arith.constant 31 : index
    %122 = memref.load %arg1[%c31] : memref<33xf32, #tpu.memory_space<smem>>
    %123 = vector.broadcast %122 : f32 to vector<512x128xf32>
    %124 = arith.mulf %123, %121 : vector<512x128xf32>
    %125 = arith.addf %110, %124 : vector<512x128xf32>
    %c0_6 = arith.constant 0 : index
    %c0_7 = arith.constant 0 : index
    %126 = vector.load %arg3[%c0_6, %c0_7] : memref<512x128xf32, #tpu.memory_space<vmem>>, vector<512x128xf32>
    tpu.vector_store %arg3[%c0_6, %c0_7], %125 {strides = array<i32>} : memref<512x128xf32, #tpu.memory_space<vmem>>, vector<512x128xf32>,
    return
  }
  func.func @transform_0(%arg0: i32) -> i32 {
    %c0_i32 = arith.constant 0 : i32
    %c0_i32_0 = arith.constant 0 : i32
    return %c0_i32 : i32
  }
  func.func @transform_1(%arg0: i32) -> (i32, i32, i32) {
    %c0_i32 = arith.constant 0 : i32
    %c0_i32_0 = arith.constant 0 : i32
    %c0_i32_1 = arith.constant 0 : i32
    return %c0_i32, %arg0, %c0_i32_0 : i32, i32, i32
  }
  func.func @transform_2(%arg0: i32) -> (i32, i32) {
    %c0_i32 = arith.constant 0 : i32
    %c0_i32_0 = arith.constant 0 : i32
    return %arg0, %c0_i32 : i32, i32
  }
}

</mosaic_0001>

<llo_original>
// kernel: tpu_custom_call.1
$region0: #{tpu_custom_call.1}
  #allocation0 [shape = 'u32[]', space=smem, size = 0x4, offset = 0x4, fixed_abs, tag = 'smem constant byte address 0x4 - core index']
  #allocation1 [shape = 'u32[144,128]{1,0:T(1,128)}', space=vmem, size = 0x12000, scoped, tag = 'internal scratch']
  #allocation8 [shape = 's32[]', space=sflag, size = 0x4, offset = 0, fixed_abs, tag = 'sflag constant byte address 0x0 - dummy sync flag']
  %s0 = inlined_call_operand.hbm [shape: f32[33], index: 0, kind: input, shape index: {}]
  %s1 = inlined_call_operand.hbm [shape: f32[2,1024,128], index: 1, kind: input, shape index: {}]
  %s2 = inlined_call_operand.hbm [shape: f32[1024,128], index: 2, kind: output, shape index: {}]
  %s3 = sld [smem:[#allocation0]]
  $region49: #{tpu_custom_call.1} parent=0
    _
  %s5 = ssub.s32 1, %s3
  %s6 = scalar_select 0, %s5, %s3
  $region1: #{tpu_custom_call.1} parent=0
    #allocation2 [shape = 'u8[512]{0}', space=smem, size = 0x200, scoped, tag = 'input window, operand 0, single buffered']
    #allocation3 [shape = 's32[2]{0}', space=sflag, size = 0x8, scoped, tag = 'scoped memory for tpu_custom_call.1']
    #allocation4 [shape = 's32[2]{0}', space=sflag, size = 0x8, scoped, tag = 'scoped memory for tpu_custom_call.1']
    #allocation5 [shape = 's32[2]{0}', space=sflag, size = 0x8, scoped, tag = 'scoped memory for tpu_custom_call.1']
    #allocation6 [shape = 'u8[1048576]{0}', space=vmem, size = 0x100000, scoped, tag = 'input window, operand 1']
    #allocation7 [shape = 'u8[524288]{0}', space=vmem, size = 0x80000, scoped, tag = 'output window, operand 0']
    %7 = vsyncpa [#allocation5], 0
    %8 = vsyncpa [#allocation3], 0
    %s9 = scalar_lea.sflag [#allocation3], 1
    %10 = vsyncpa %s9, 0
    %11 = vsyncpa [#allocation4], 0
    %s12 = scalar_lea.sflag [#allocation4], 1
    %13 = vsyncpa %s12, 0
    loop: start=0, step=1, limit=4
    $region2: #{tpu_custom_call.1} parent=1 // loop_pre_header
      _
    $region3: #{tpu_custom_call.1} parent=1 // loop_header
      %s15 = sphi 0, %s19
      %p16 = scmp.ge.s32.totalorder %s15, 4
      %s23 = sphi 0, %s23
      %s25 = sphi 0, %s23
      %s26 = sphi 0, %s25
      %s40 = sphi 0, %s26
      %s46 = sphi 0, %s48
      %s49 = sphi 0, %s46
      %s50 = sphi 0, %s49
      %s66 = sphi 0, %s50
      %s72 = sphi 0, %s74
      %s75 = sphi 0, %s72
      %s76 = sphi 0, %s75
      %s92 = sphi 0, %s76
    $region4: #{tpu_custom_call.1} parent=1 // loop_header_branch
      %18 = sbr.rel (%p16) target = $region8
    $region5: #{tpu_custom_call.1} parent=1 // loop_body
      %s20 = ssub.s32 %s15, 1
      %s21 = ssub.s32 %s15, 2
      %s22 = sadd.s32 %s15, 1
      %s24 = sadd.s32 %s23, 1
      %p27 = scmp.eq.s32.totalorder %s15, 1
      %p28 = scmp.ne.s32.totalorder %s23, %s25
      %p29 = scmp.eq.s32.totalorder %s15, 0
      %p30 = por %p28, %p29
      %p31 = scmp.ne.s32.totalorder %s23, %s25
      %p32 = scmp.eq.s32.totalorder %s20, 1
      %p33 = por %p31, %p32
      %p34 = scmp.ne.s32.totalorder %s25, %s26
      %p35 = scmp.eq.s32.totalorder %s20, 0
      %p36 = por %p34, %p35
      %p37 = scmp.ne.s32.totalorder %s25, %s26
      %p38 = scmp.eq.s32.totalorder %s21, 1
      %p39 = por %p37, %p38
      %p41 = scmp.ne.s32.totalorder %s26, %s40
      %p42 = scmp.eq.s32.totalorder %s21, 0
      %p43 = por %p41, %p42
      %s44 = ssub.s32 %s15, %s22
      %p45 = scmp.eq.s32.totalorder %s44, 0
      %s47 = sadd.s32 %s46, 1
      %s48 = scalar_select %p45, %s46, %s47
      %p51 = pneg %p45
      %p52 = scmp.eq.s32.totalorder %s15, 1
      %p53 = por %p51, %p52
      %p54 = scmp.ne.s32.totalorder %s46, %s49
      %p55 = scmp.eq.s32.totalorder %s15, 0
      %p56 = por %p54, %p55
      %p57 = scmp.ne.s32.totalorder %s46, %s49
      %p58 = scmp.eq.s32.totalorder %s20, 1
      %p59 = por %p57, %p58
      %p60 = scmp.ne.s32.totalorder %s49, %s50
      %p61 = scmp.eq.s32.totalorder %s20, 0
      %p62 = por %p60, %p61
      %p63 = scmp.ne.s32.totalorder %s49, %s50
      %p64 = scmp.eq.s32.totalorder %s21, 1
      %p65 = por %p63, %p64
      %p67 = scmp.ne.s32.totalorder %s50, %s66
      %p68 = scmp.eq.s32.totalorder %s21, 0
      %p69 = por %p67, %p68
      %s70 = ssub.s32 %s15, %s22
      %p71 = scmp.eq.s32.totalorder %s70, 0
      %s73 = sadd.s32 %s72, 1
      %s74 = scalar_select %p71, %s72, %s73
      %p77 = pneg %p71
      %p78 = scmp.eq.s32.totalorder %s15, 1
      %p79 = por %p77, %p78
      %p80 = scmp.ne.s32.totalorder %s72, %s75
      %p81 = scmp.eq.s32.totalorder %s15, 0
      %p82 = por %p80, %p81
      %p83 = scmp.ne.s32.totalorder %s72, %s75
      %p84 = scmp.eq.s32.totalorder %s20, 1
      %p85 = por %p83, %p84
      %p86 = scmp.ne.s32.totalorder %s75, %s76
      %p87 = scmp.eq.s32.totalorder %s20, 0
      %p88 = por %p86, %p87
      %p89 = scmp.ne.s32.totalorder %s75, %s76
      %p90 = scmp.eq.s32.totalorder %s21, 1
      %p91 = por %p89, %p90
      %p93 = scmp.ne.s32.totalorder %s76, %s92
      %p94 = scmp.eq.s32.totalorder %s21, 0
      %p95 = por %p93, %p94
      %p96 = scmp.le.s32.totalorder 1, %s15
      %p97 = scmp.lt.s32.totalorder %s15, 3
      %p98 = pnand %p96, %p97
      %p99 = pneg %p98
      // Predicated region
      $region9: #{tpu_custom_call.1} parent=5 // pred_check
        _
      $region10: #{tpu_custom_call.1} parent=5 // pred_check_branch
        %101 = sbr.rel (%p98) target = $region12
      $region11: #{tpu_custom_call.1} parent=5 // pred_region
        %s102 = ssub.s32 %s15, 1
        // Predicated region
        $region13: #{tpu_custom_call.1} parent=11 // pred_check
          %p103 = pneg %p36
        $region14: #{tpu_custom_call.1} parent=11 // pred_check_branch
          %105 = sbr.rel (%p103) target = $region16
        $region15: #{tpu_custom_call.1} parent=11 // pred_region
          %s107 = ssub.s32 16, 16
          %108 = vsyncadd [#allocation5], %s107
          %111 = dma.hbm_to_smem %s0, 16, [#allocation2], [#allocation5]
        $region16: #{tpu_custom_call.1} parent=11 // pred_fallthru
          _
      $region12: #{tpu_custom_call.1} parent=5 // pred_fallthru
        _
      %p112 = scmp.lt.s32.totalorder %s15, 2
      // Predicated region
      $region17: #{tpu_custom_call.1} parent=5 // pred_check
        %p113 = pneg %p112
      $region18: #{tpu_custom_call.1} parent=5 // pred_check_branch
        %115 = sbr.rel (%p113) target = $region20
      $region19: #{tpu_custom_call.1} parent=5 // pred_region
        // Predicated region
        $region21: #{tpu_custom_call.1} parent=19 // pred_check
          %p116 = pneg %p56
        $region22: #{tpu_custom_call.1} parent=19 // pred_check_branch
          %118 = sbr.rel (%p116) target = $region24
        $region23: #{tpu_custom_call.1} parent=19 // pred_region
          #allocation9 [shape = 'u32[6]{0}', space=smem, size = 0x18, scoped, tag = 'DMA stride descriptor']
          %s119 = sand.u32 %s46, 1
          %s120 = scalar_lea.sflag [#allocation3], %s119
          %s121 = sand.u32 %s46, 1
          %s122 = smul.addr %s121, 1024
          %s123 = scalar_lea.vmem [#allocation6], %s122
          %s124 = smul.u32 64, %s15
          %s126 = ssub.s32 16384, 16384
          %127 = vsyncadd %s120, %s126
          %s128 = smul.addr %s124, 128
          %s129 = scalar_lea.hbm %s1, %s128
          %s131 = sshll.u32 1, 14
          %s132 = sxor.u32 4294967295, %s131
          %s134 = sld [smem:[#allocation0]]
          %s135 = sadd.s32 2, %s134
          %s137 = sshll.u32 7, 26
          %s138 = sxor.u32 4294967295, %s137
          %s139 = sand.u32 0, %s138
          %s140 = sshll.u32 %s135, 26
          %s141 = sor.u32 %s139, %s140
          %s142 = sshll.u32 %s123, 4
          %s143 = int_to_ptr.vmem [resolvable:$true] %s142
          %149 = sst [smem:[#allocation9]] 16384
          %s150 = scalar_lea.smem [#allocation9], 1
          %151 = sst [smem:[%s150]] 8192
          %s152 = scalar_lea.smem [#allocation9], 2
          %153 = sst [smem:[%s152]] 64
          %s154 = scalar_lea.smem [#allocation9], 3
          %155 = sst [smem:[%s154]] 128
          %s156 = scalar_lea.smem [#allocation9], 4
          %157 = sst [smem:[%s156]] 128
          %s158 = scalar_lea.smem [#allocation9], 5
          %159 = sst [smem:[%s158]] 8
          %161 = dma.general %s129, 16384, %s143, %s120, [#allocation8], [#allocation9], %s141, 0
        $region24: #{tpu_custom_call.1} parent=19 // pred_fallthru
          _
      $region20: #{tpu_custom_call.1} parent=5 // pred_fallthru
        _
      %p162 = scmp.le.s32.totalorder 1, %s15
      %p163 = scmp.lt.s32.totalorder %s15, 3
      %p164 = pnand %p162, %p163
      %p165 = pneg %p164
      // Predicated region
      $region25: #{tpu_custom_call.1} parent=5 // pred_check
        _
      $region26: #{tpu_custom_call.1} parent=5 // pred_check_branch
        %167 = sbr.rel (%p164) target = $region28
      $region27: #{tpu_custom_call.1} parent=5 // pred_region
        %s168 = ssub.s32 %s15, 1
        // Predicated region
        $region29: #{tpu_custom_call.1} parent=27 // pred_check
          %p169 = pneg %p36
        $region30: #{tpu_custom_call.1} parent=27 // pred_check_branch
          %171 = sbr.rel (%p169) target = $region32
        $region31: #{tpu_custom_call.1} parent=27 // pred_region
          %172 = dma.done [#allocation5], 16
        $region32: #{tpu_custom_call.1} parent=27 // pred_fallthru
          _
        %s173 = sand.u32 %s49, 1
        %s174 = scalar_lea.sflag [#allocation3], %s173
        %s175 = sand.u32 %s49, 1
        %s176 = smul.addr %s175, 1024
        %s177 = scalar_lea.vmem [#allocation6], %s176
        // Predicated region
        $region33: #{tpu_custom_call.1} parent=27 // pred_check
          %p178 = pneg %p62
        $region34: #{tpu_custom_call.1} parent=27 // pred_check_branch
          %180 = sbr.rel (%p178) target = $region36
        $region35: #{tpu_custom_call.1} parent=27 // pred_region
          %181 = dma.done %s174, 16384
        $region36: #{tpu_custom_call.1} parent=27 // pred_fallthru
          _
        %182 = sfence
        %p183 = pneg %p36
        %p184 = pneg %p33
        %s185 = sand.u32 %s49, 1
        %s186 = scalar_lea.sflag [#allocation3], %s185
        %s187 = sand.u32 %s49, 1
        %s188 = smul.addr %s187, 1024
        %s189 = scalar_lea.vmem [#allocation6], %s188
        %p190 = pneg %p62
        %p191 = pneg %p59
        %p192 = pneg %p88
        %p193 = pneg %p85
        %s194 = sand.u32 %s75, 1
        %s195 = scalar_lea.sflag [#allocation4], %s194
        %s196 = sand.u32 %s75, 1
        %s197 = smul.addr %s196, 512
        %s198 = scalar_lea.vmem [#allocation7], %s197
        %s199 = smul.u32 64, %s20
        %s200 = smul.u32 64, %s20
        %v201 = vld [vmem:[%s177] sm:$0xff]
        %v202 = vld [vmem:[%s177 + $0x8] sm:$0xff]
        %v203 = vld [vmem:[%s177 + $0x10] sm:$0xff]
        %v204 = vld [vmem:[%s177 + $0x18] sm:$0xff]
        %v205 = vld [vmem:[%s177 + $0x20] sm:$0xff]
        %v206 = vld [vmem:[%s177 + $0x28] sm:$0xff]
        %v207 = vld [vmem:[%s177 + $0x30] sm:$0xff]
        %v208 = vld [vmem:[%s177 + $0x38] sm:$0xff]
        %v209 = vld [vmem:[%s177 + $0x40] sm:$0xff]
        %v210 = vld [vmem:[%s177 + $0x48] sm:$0xff]
        %v211 = vld [vmem:[%s177 + $0x50] sm:$0xff]
        %v212 = vld [vmem:[%s177 + $0x58] sm:$0xff]
        %v213 = vld [vmem:[%s177 + $0x60] sm:$0xff]
        %v214 = vld [vmem:[%s177 + $0x68] sm:$0xff]
        %v215 = vld [vmem:[%s177 + $0x70] sm:$0xff]
        %v216 = vld [vmem:[%s177 + $0x78] sm:$0xff]
        %v217 = vld [vmem:[%s177 + $0x80] sm:$0xff]
        %v218 = vld [vmem:[%s177 + $0x88] sm:$0xff]
        %v219 = vld [vmem:[%s177 + $0x90] sm:$0xff]
        %v220 = vld [vmem:[%s177 + $0x98] sm:$0xff]
        %v221 = vld [vmem:[%s177 + $0xa0] sm:$0xff]
        %v222 = vld [vmem:[%s177 + $0xa8] sm:$0xff]
        %v223 = vld [vmem:[%s177 + $0xb0] sm:$0xff]
        %v224 = vld [vmem:[%s177 + $0xb8] sm:$0xff]
        %v225 = vld [vmem:[%s177 + $0xc0] sm:$0xff]
        %v226 = vld [vmem:[%s177 + $0xc8] sm:$0xff]
        %v227 = vld [vmem:[%s177 + $0xd0] sm:$0xff]
        %v228 = vld [vmem:[%s177 + $0xd8] sm:$0xff]
        %v229 = vld [vmem:[%s177 + $0xe0] sm:$0xff]
        %v230 = vld [vmem:[%s177 + $0xe8] sm:$0xff]
        %v231 = vld [vmem:[%s177 + $0xf0] sm:$0xff]
        %v232 = vld [vmem:[%s177 + $0xf8] sm:$0xff]
        %v233 = vld [vmem:[%s177 + $0x100] sm:$0xff]
        %v234 = vld [vmem:[%s177 + $0x108] sm:$0xff]
        %v235 = vld [vmem:[%s177 + $0x110] sm:$0xff]
        %v236 = vld [vmem:[%s177 + $0x118] sm:$0xff]
        %v237 = vld [vmem:[%s177 + $0x120] sm:$0xff]
        %v238 = vld [vmem:[%s177 + $0x128] sm:$0xff]
        %v239 = vld [vmem:[%s177 + $0x130] sm:$0xff]
        %v240 = vld [vmem:[%s177 + $0x138] sm:$0xff]
        %v241 = vld [vmem:[%s177 + $0x140] sm:$0xff]
        %v242 = vld [vmem:[%s177 + $0x148] sm:$0xff]
        %v243 = vld [vmem:[%s177 + $0x150] sm:$0xff]
        %v244 = vld [vmem:[%s177 + $0x158] sm:$0xff]
        %v245 = vld [vmem:[%s177 + $0x160] sm:$0xff]
        %v246 = vld [vmem:[%s177 + $0x168] sm:$0xff]
        %v247 = vld [vmem:[%s177 + $0x170] sm:$0xff]
        %v248 = vld [vmem:[%s177 + $0x178] sm:$0xff]
        %v249 = vld [vmem:[%s177 + $0x180] sm:$0xff]
        %v250 = vld [vmem:[%s177 + $0x188] sm:$0xff]
        %v251 = vld [vmem:[%s177 + $0x190] sm:$0xff]
        %v252 = vld [vmem:[%s177 + $0x198] sm:$0xff]
        %v253 = vld [vmem:[%s177 + $0x1a0] sm:$0xff]
        %v254 = vld [vmem:[%s177 + $0x1a8] sm:$0xff]
        %v255 = vld [vmem:[%s177 + $0x1b0] sm:$0xff]
        %v256 = vld [vmem:[%s177 + $0x1b8] sm:$0xff]
        %v257 = vld [vmem:[%s177 + $0x1c0] sm:$0xff]
        %v258 = vld [vmem:[%s177 + $0x1c8] sm:$0xff]
        %v259 = vld [vmem:[%s177 + $0x1d0] sm:$0xff]
        %v260 = vld [vmem:[%s177 + $0x1d8] sm:$0xff]
        %v261 = vld [vmem:[%s177 + $0x1e0] sm:$0xff]
        %v262 = vld [vmem:[%s177 + $0x1e8] sm:$0xff]
        %v263 = vld [vmem:[%s177 + $0x1f0] sm:$0xff]
        %v264 = vld [vmem:[%s177 + $0x1f8] sm:$0xff]
        %s265 = scalar_lea.vmem %s177, 512 [#allocation6]
        %v266 = vld [vmem:[%s265] sm:$0xff]
        %v267 = vld [vmem:[%s265 + $0x8] sm:$0xff]
        %v268 = vld [vmem:[%s265 + $0x10] sm:$0xff]
        %v269 = vld [vmem:[%s265 + $0x18] sm:$0xff]
        %v270 = vld [vmem:[%s265 + $0x20] sm:$0xff]
        %v271 = vld [vmem:[%s265 + $0x28] sm:$0xff]
        %v272 = vld [vmem:[%s265 + $0x30] sm:$0xff]
        %v273 = vld [vmem:[%s265 + $0x38] sm:$0xff]
        %v274 = vld [vmem:[%s265 + $0x40] sm:$0xff]
        %v275 = vld [vmem:[%s265 + $0x48] sm:$0xff]
        %v276 = vld [vmem:[%s265 + $0x50] sm:$0xff]
        %v277 = vld [vmem:[%s265 + $0x58] sm:$0xff]
        %v278 = vld [vmem:[%s265 + $0x60] sm:$0xff]
        %v279 = vld [vmem:[%s265 + $0x68] sm:$0xff]
        %v280 = vld [vmem:[%s265 + $0x70] sm:$0xff]
        %v281 = vld [vmem:[%s265 + $0x78] sm:$0xff]
        %v282 = vld [vmem:[%s265 + $0x80] sm:$0xff]
        %v283 = vld [vmem:[%s265 + $0x88] sm:$0xff]
        %v284 = vld [vmem:[%s265 + $0x90] sm:$0xff]
        %v285 = vld [vmem:[%s265 + $0x98] sm:$0xff]
        %v286 = vld [vmem:[%s265 + $0xa0] sm:$0xff]
        %v287 = vld [vmem:[%s265 + $0xa8] sm:$0xff]
        %v288 = vld [vmem:[%s265 + $0xb0] sm:$0xff]
        %v289 = vld [vmem:[%s265 + $0xb8] sm:$0xff]
        %v290 = vld [vmem:[%s265 + $0xc0] sm:$0xff]
        %v291 = vld [vmem:[%s265 + $0xc8] sm:$0xff]
        %v292 = vld [vmem:[%s265 + $0xd0] sm:$0xff]
        %v293 = vld [vmem:[%s265 + $0xd8] sm:$0xff]
        %v294 = vld [vmem:[%s265 + $0xe0] sm:$0xff]
        %v295 = vld [vmem:[%s265 + $0xe8] sm:$0xff]
        %v296 = vld [vmem:[%s265 + $0xf0] sm:$0xff]
        %v297 = vld [vmem:[%s265 + $0xf8] sm:$0xff]
        %v298 = vld [vmem:[%s265 + $0x100] sm:$0xff]
        %v299 = vld [vmem:[%s265 + $0x108] sm:$0xff]
        %v300 = vld [vmem:[%s265 + $0x110] sm:$0xff]
        %v301 = vld [vmem:[%s265 + $0x118] sm:$0xff]
        %v302 = vld [vmem:[%s265 + $0x120] sm:$0xff]
        %v303 = vld [vmem:[%s265 + $0x128] sm:$0xff]
        %v304 = vld [vmem:[%s265 + $0x130] sm:$0xff]
        %v305 = vld [vmem:[%s265 + $0x138] sm:$0xff]
        %v306 = vld [vmem:[%s265 + $0x140] sm:$0xff]
        %v307 = vld [vmem:[%s265 + $0x148] sm:$0xff]
        %v308 = vld [vmem:[%s265 + $0x150] sm:$0xff]
        %v309 = vld [vmem:[%s265 + $0x158] sm:$0xff]
        %v310 = vld [vmem:[%s265 + $0x160] sm:$0xff]
        %v311 = vld [vmem:[%s265 + $0x168] sm:$0xff]
        %v312 = vld [vmem:[%s265 + $0x170] sm:$0xff]
        %v313 = vld [vmem:[%s265 + $0x178] sm:$0xff]
        %v314 = vld [vmem:[%s265 + $0x180] sm:$0xff]
        %v315 = vld [vmem:[%s265 + $0x188] sm:$0xff]
        %v316 = vld [vmem:[%s265 + $0x190] sm:$0xff]
        %v317 = vld [vmem:[%s265 + $0x198] sm:$0xff]
        %v318 = vld [vmem:[%s265 + $0x1a0] sm:$0xff]
        %v319 = vld [vmem:[%s265 + $0x1a8] sm:$0xff]
        %v320 = vld [vmem:[%s265 + $0x1b0] sm:$0xff]
        %v321 = vld [vmem:[%s265 + $0x1b8] sm:$0xff]
        %v322 = vld [vmem:[%s265 + $0x1c0] sm:$0xff]
        %v323 = vld [vmem:[%s265 + $0x1c8] sm:$0xff]
        %v324 = vld [vmem:[%s265 + $0x1d0] sm:$0xff]
        %v325 = vld [vmem:[%s265 + $0x1d8] sm:$0xff]
        %v326 = vld [vmem:[%s265 + $0x1e0] sm:$0xff]
        %v327 = vld [vmem:[%s265 + $0x1e8] sm:$0xff]
        %v328 = vld [vmem:[%s265 + $0x1f0] sm:$0xff]
        %v329 = vld [vmem:[%s265 + $0x1f8] sm:$0xff]
        %s330 = sld [smem:[#allocation2 + $0x20]]
        %v331 = vstv %s330
        %s332 = sld [smem:[#allocation2]]
        %v333 = vstv %s332
        %v334 = vmul.f32 %v333, %v201
        %v335 = vmul.f32 %v333, %v202
        %v336 = vmul.f32 %v333, %v203
        %v337 = vmul.f32 %v333, %v204
        %v338 = vmul.f32 %v333, %v205
        %v339 = vmul.f32 %v333, %v206
        %v340 = vmul.f32 %v333, %v207
        %v341 = vmul.f32 %v333, %v208
        %v342 = vmul.f32 %v333, %v209
        %v343 = vmul.f32 %v333, %v210
        %v344 = vmul.f32 %v333, %v211
        %v345 = vmul.f32 %v333, %v212
        %v346 = vmul.f32 %v333, %v213
        %v347 = vmul.f32 %v333, %v214
        %v348 = vmul.f32 %v333, %v215
        %v349 = vmul.f32 %v333, %v216
        %v350 = vmul.f32 %v333, %v217
        %v351 = vmul.f32 %v333, %v218
        %v352 = vmul.f32 %v333, %v219
        %v353 = vmul.f32 %v333, %v220
        %v354 = vmul.f32 %v333, %v221
        %v355 = vmul.f32 %v333, %v222
        %v356 = vmul.f32 %v333, %v223
        %v357 = vmul.f32 %v333, %v224
        %v358 = vmul.f32 %v333, %v225
        %v359 = vmul.f32 %v333, %v226
        %v360 = vmul.f32 %v333, %v227
        %v361 = vmul.f32 %v333, %v228
        %v362 = vmul.f32 %v333, %v229
        %v363 = vmul.f32 %v333, %v230
        %v364 = vmul.f32 %v333, %v231
        %v365 = vmul.f32 %v333, %v232
        %v366 = vmul.f32 %v333, %v233
        %v367 = vmul.f32 %v333, %v234
        %v368 = vmul.f32 %v333, %v235
        %v369 = vmul.f32 %v333, %v236
        %v370 = vmul.f32 %v333, %v237
        %v371 = vmul.f32 %v333, %v238
        %v372 = vmul.f32 %v333, %v239
        %v373 = vmul.f32 %v333, %v240
        %v374 = vmul.f32 %v333, %v241
        %v375 = vmul.f32 %v333, %v242
        %v376 = vmul.f32 %v333, %v243
        %v377 = vmul.f32 %v333, %v244
        %v378 = vmul.f32 %v333, %v245
        %v379 = vmul.f32 %v333, %v246
        %v380 = vmul.f32 %v333, %v247
        %v381 = vmul.f32 %v333, %v248
        %v382 = vmul.f32 %v333, %v249
        %v383 = vmul.f32 %v333, %v250
        %v384 = vmul.f32 %v333, %v251
        %v385 = vmul.f32 %v333, %v252
        %v386 = vmul.f32 %v333, %v253
        %v387 = vmul.f32 %v333, %v254
        %v388 = vmul.f32 %v333, %v255
        %v389 = vmul.f32 %v333, %v256
        %v390 = vmul.f32 %v333, %v257
        %v391 = vmul.f32 %v333, %v258
        %v392 = vmul.f32 %v333, %v259
        %v393 = vmul.f32 %v333, %v260
        %v394 = vmul.f32 %v333, %v261
        %v395 = vmul.f32 %v333, %v262
        %v396 = vmul.f32 %v333, %v263
        %v397 = vmul.f32 %v333, %v264
        %s398 = sld [smem:[#allocation2 + $0x1]]
        %v399 = vstv %s398
        %v400 = vmul.f32 %v399, %v266
        %v401 = vmul.f32 %v399, %v267
        %v402 = vmul.f32 %v399, %v268
        %v403 = vmul.f32 %v399, %v269
        %v404 = vmul.f32 %v399, %v270
        %v405 = vmul.f32 %v399, %v271
        %v406 = vmul.f32 %v399, %v272
        %v407 = vmul.f32 %v399, %v273
        %v408 = vmul.f32 %v399, %v274
        %v409 = vmul.f32 %v399, %v275
        %v410 = vmul.f32 %v399, %v276
        %v411 = vmul.f32 %v399, %v277
        %v412 = vmul.f32 %v399, %v278
        %v413 = vmul.f32 %v399, %v279
        %v414 = vmul.f32 %v399, %v280
        %v415 = vmul.f32 %v399, %v281
        %v416 = vmul.f32 %v399, %v282
        %v417 = vmul.f32 %v399, %v283
        %v418 = vmul.f32 %v399, %v284
        %v419 = vmul.f32 %v399, %v285
        %v420 = vmul.f32 %v399, %v286
        %v421 = vmul.f32 %v399, %v287
        %v422 = vmul.f32 %v399, %v288
        %v423 = vmul.f32 %v399, %v289
        %v424 = vmul.f32 %v399, %v290
        %v425 = vmul.f32 %v399, %v291
        %v426 = vmul.f32 %v399, %v292
        %v427 = vmul.f32 %v399, %v293
        %v428 = vmul.f32 %v399, %v294
        %v429 = vmul.f32 %v399, %v295
        %v430 = vmul.f32 %v399, %v296
        %v431 = vmul.f32 %v399, %v297
        %v432 = vmul.f32 %v399, %v298
        %v433 = vmul.f32 %v399, %v299
        %v434 = vmul.f32 %v399, %v300
        %v435 = vmul.f32 %v399, %v301
        %v436 = vmul.f32 %v399, %v302
        %v437 = vmul.f32 %v399, %v303
        %v438 = vmul.f32 %v399, %v304
        %v439 = vmul.f32 %v399, %v305
        %v440 = vmul.f32 %v399, %v306
        %v441 = vmul.f32 %v399, %v307
        %v442 = vmul.f32 %v399, %v308
        %v443 = vmul.f32 %v399, %v309
        %v444 = vmul.f32 %v399, %v310
        %v445 = vmul.f32 %v399, %v311
        %v446 = vmul.f32 %v399, %v312
        %v447 = vmul.f32 %v399, %v313
        %v448 = vmul.f32 %v399, %v314
        %v449 = vmul.f32 %v399, %v315
        %v450 = vmul.f32 %v399, %v316
        %v451 = vmul.f32 %v399, %v317
        %v452 = vmul.f32 %v399, %v318
        %v453 = vmul.f32 %v399, %v319
        %v454 = vmul.f32 %v399, %v320
        %v455 = vmul.f32 %v399, %v321
        %v456 = vmul.f32 %v399, %v322
        %v457 = vmul.f32 %v399, %v323
        %v458 = vmul.f32 %v399, %v324
        %v459 = vmul.f32 %v399, %v325
        %v460 = vmul.f32 %v399, %v326
        %v461 = vmul.f32 %v399, %v327
        %v462 = vmul.f32 %v399, %v328
        %v463 = vmul.f32 %v399, %v329
        %v464 = vadd.f32 %v334, %v400
        %v465 = vadd.f32 %v335, %v401
        %v466 = vadd.f32 %v336, %v402
        %v467 = vadd.f32 %v337, %v403
        %v468 = vadd.f32 %v338, %v404
        %v469 = vadd.f32 %v339, %v405
        %v470 = vadd.f32 %v340, %v406
        %v471 = vadd.f32 %v341, %v407
        %v472 = vadd.f32 %v342, %v408
        %v473 = vadd.f32 %v343, %v409
        %v474 = vadd.f32 %v344, %v410
        %v475 = vadd.f32 %v345, %v411
        %v476 = vadd.f32 %v346, %v412
        %v477 = vadd.f32 %v347, %v413
        %v478 = vadd.f32 %v348, %v414
        %v479 = vadd.f32 %v349, %v415
        %v480 = vadd.f32 %v350, %v416
        %v481 = vadd.f32 %v351, %v417
        %v482 = vadd.f32 %v352, %v418
        %v483 = vadd.f32 %v353, %v419
        %v484 = vadd.f32 %v354, %v420
        %v485 = vadd.f32 %v355, %v421
        %v486 = vadd.f32 %v356, %v422
        %v487 = vadd.f32 %v357, %v423
        %v488 = vadd.f32 %v358, %v424
        %v489 = vadd.f32 %v359, %v425
        %v490 = vadd.f32 %v360, %v426
        %v491 = vadd.f32 %v361, %v427
        %v492 = vadd.f32 %v362, %v428
        %v493 = vadd.f32 %v363, %v429
        %v494 = vadd.f32 %v364, %v430
        %v495 = vadd.f32 %v365, %v431
        %v496 = vadd.f32 %v366, %v432
        %v497 = vadd.f32 %v367, %v433
        %v498 = vadd.f32 %v368, %v434
        %v499 = vadd.f32 %v369, %v435
        %v500 = vadd.f32 %v370, %v436
        %v501 = vadd.f32 %v371, %v437
        %v502 = vadd.f32 %v372, %v438
        %v503 = vadd.f32 %v373, %v439
        %v504 = vadd.f32 %v374, %v440
        %v505 = vadd.f32 %v375, %v441
        %v506 = vadd.f32 %v376, %v442
        %v507 = vadd.f32 %v377, %v443
        %v508 = vadd.f32 %v378, %v444
        %v509 = vadd.f32 %v379, %v445
        %v510 = vadd.f32 %v380, %v446
        %v511 = vadd.f32 %v381, %v447
        %v512 = vadd.f32 %v382, %v448
        %v513 = vadd.f32 %v383, %v449
        %v514 = vadd.f32 %v384, %v450
        %v515 = vadd.f32 %v385, %v451
        %v516 = vadd.f32 %v386, %v452
        %v517 = vadd.f32 %v387, %v453
        %v518 = vadd.f32 %v388, %v454
        %v519 = vadd.f32 %v389, %v455
        %v520 = vadd.f32 %v390, %v456
        %v521 = vadd.f32 %v391, %v457
        %v522 = vadd.f32 %v392, %v458
        %v523 = vadd.f32 %v393, %v459
        %v524 = vadd.f32 %v394, %v460
        %v525 = vadd.f32 %v395, %v461
        %v526 = vadd.f32 %v396, %v462
        %v527 = vadd.f32 %v397, %v463
        %s528 = sld [smem:[#allocation2 + $0x10]]
        %v529 = vstv %s528
        %v530 = vadd.f32 %v464, %v529
        %v531 = vadd.f32 %v465, %v529
        %v532 = vadd.f32 %v466, %v529
        %v533 = vadd.f32 %v467, %v529
        %v534 = vadd.f32 %v468, %v529
        %v535 = vadd.f32 %v469, %v529
        %v536 = vadd.f32 %v470, %v529
        %v537 = vadd.f32 %v471, %v529
        %v538 = vadd.f32 %v472, %v529
        %v539 = vadd.f32 %v473, %v529
        %v540 = vadd.f32 %v474, %v529
        %v541 = vadd.f32 %v475, %v529
        %v542 = vadd.f32 %v476, %v529
        %v543 = vadd.f32 %v477, %v529
        %v544 = vadd.f32 %v478, %v529
        %v545 = vadd.f32 %v479, %v529
        %v546 = vadd.f32 %v480, %v529
        %v547 = vadd.f32 %v481, %v529
        %v548 = vadd.f32 %v482, %v529
        %v549 = vadd.f32 %v483, %v529
        %v550 = vadd.f32 %v484, %v529
        %v551 = vadd.f32 %v485, %v529
        %v552 = vadd.f32 %v486, %v529
        %v553 = vadd.f32 %v487, %v529
        %v554 = vadd.f32 %v488, %v529
        %v555 = vadd.f32 %v489, %v529
        %v556 = vadd.f32 %v490, %v529
        %v557 = vadd.f32 %v491, %v529
        %v558 = vadd.f32 %v492, %v529
        %v559 = vadd.f32 %v493, %v529
        %v560 = vadd.f32 %v494, %v529
        %v561 = vadd.f32 %v495, %v529
        %v562 = vadd.f32 %v496, %v529
        %v563 = vadd.f32 %v497, %v529
        %v564 = vadd.f32 %v498, %v529
        %v565 = vadd.f32 %v499, %v529
        %v566 = vadd.f32 %v500, %v529
        %v567 = vadd.f32 %v501, %v529
        %v568 = vadd.f32 %v502, %v529
        %v569 = vadd.f32 %v503, %v529
        %v570 = vadd.f32 %v504, %v529
        %v571 = vadd.f32 %v505, %v529
        %v572 = vadd.f32 %v506, %v529
        %v573 = vadd.f32 %v507, %v529
        %v574 = vadd.f32 %v508, %v529
        %v575 = vadd.f32 %v509, %v529
        %v576 = vadd.f32 %v510, %v529
        %v577 = vadd.f32 %v511, %v529
        %v578 = vadd.f32 %v512, %v529
        %v579 = vadd.f32 %v513, %v529
        %v580 = vadd.f32 %v514, %v529
        %v581 = vadd.f32 %v515, %v529
        %v582 = vadd.f32 %v516, %v529
        %v583 = vadd.f32 %v517, %v529
        %v584 = vadd.f32 %v518, %v529
        %v585 = vadd.f32 %v519, %v529
        %v586 = vadd.f32 %v520, %v529
        %v587 = vadd.f32 %v521, %v529
        %v588 = vadd.f32 %v522, %v529
        %v589 = vadd.f32 %v523, %v529
        %v590 = vadd.f32 %v524, %v529
        %v591 = vadd.f32 %v525, %v529
        %v592 = vadd.f32 %v526, %v529
        %v593 = vadd.f32 %v527, %v529
        %v594 = vtanh.pop %v530
        %v595 = vtanh.pop %v531
        %v596 = vtanh.pop %v532
        %v597 = vtanh.pop %v533
        %v598 = vtanh.pop %v534
        %v599 = vtanh.pop %v535
        %v600 = vtanh.pop %v536
        %v601 = vtanh.pop %v537
        %v602 = vtanh.pop %v538
        %v603 = vtanh.pop %v539
        %v604 = vtanh.pop %v540
        %v605 = vtanh.pop %v541
        %v606 = vtanh.pop %v542
        %v607 = vtanh.pop %v543
        %v608 = vtanh.pop %v544
        %v609 = vtanh.pop %v545
        %v610 = vtanh.pop %v546
        %v611 = vtanh.pop %v547
        %v612 = vtanh.pop %v548
        %v613 = vtanh.pop %v549
        %v614 = vtanh.pop %v550
        %v615 = vtanh.pop %v551
        %v616 = vtanh.pop %v552
        %v617 = vtanh.pop %v553
        %v618 = vtanh.pop %v554
        %v619 = vtanh.pop %v555
        %v620 = vtanh.pop %v556
        %v621 = vtanh.pop %v557
        %v622 = vtanh.pop %v558
        %v623 = vtanh.pop %v559
        %v624 = vtanh.pop %v560
        %v625 = vtanh.pop %v561
        %v626 = vtanh.pop %v562
        %v627 = vtanh.pop %v563
        %v628 = vtanh.pop %v564
        %v629 = vtanh.pop %v565
        %v630 = vtanh.pop %v566
        %v631 = vtanh.pop %v567
        %v632 = vtanh.pop %v568
        %v633 = vtanh.pop %v569
        %v634 = vtanh.pop %v570
        %v635 = vtanh.pop %v571
        %v636 = vtanh.pop %v572
        %v637 = vtanh.pop %v573
        %v638 = vtanh.pop %v574
        %v639 = vtanh.pop %v575
        %v640 = vtanh.pop %v576
        %v641 = vtanh.pop %v577
        %v642 = vtanh.pop %v578
        %v643 = vtanh.pop %v579
        %v644 = vtanh.pop %v580
        %v645 = vtanh.pop %v581
        %v646 = vtanh.pop %v582
        %v647 = vtanh.pop %v583
        %v648 = vtanh.pop %v584
        %v649 = vtanh.pop %v585
        %v650 = vtanh.pop %v586
        %v651 = vtanh.pop %v587
        %v652 = vtanh.pop %v588
        %v653 = vtanh.pop %v589
        %v654 = vtanh.pop %v590
        %v655 = vtanh.pop %v591
        %v656 = vtanh.pop %v592
        %v657 = vtanh.pop %v593
        %s658 = sld [smem:[#allocation2 + $0x18]]
        %v659 = vstv %s658
        %v660 = vmul.f32 %v659, %v594
        %v661 = vmul.f32 %v659, %v595
        %v662 = vmul.f32 %v659, %v596
        %v663 = vmul.f32 %v659, %v597
        %v664 = vmul.f32 %v659, %v598
        %v665 = vmul.f32 %v659, %v599
        %v666 = vmul.f32 %v659, %v600
        %v667 = vmul.f32 %v659, %v601
        %v668 = vmul.f32 %v659, %v602
        %v669 = vmul.f32 %v659, %v603
        %v670 = vmul.f32 %v659, %v604
        %v671 = vmul.f32 %v659, %v605
        %v672 = vmul.f32 %v659, %v606
        %v673 = vmul.f32 %v659, %v607
        %v674 = vmul.f32 %v659, %v608
        %v675 = vmul.f32 %v659, %v609
        %v676 = vmul.f32 %v659, %v610
        %v677 = vmul.f32 %v659, %v611
        %v678 = vmul.f32 %v659, %v612
        %v679 = vmul.f32 %v659, %v613
        %v680 = vmul.f32 %v659, %v614
        %v681 = vmul.f32 %v659, %v615
        %v682 = vmul.f32 %v659, %v616
        %v683 = vmul.f32 %v659, %v617
        %v684 = vmul.f32 %v659, %v618
        %v685 = vmul.f32 %v659, %v619
        %v686 = vmul.f32 %v659, %v620
        %v687 = vmul.f32 %v659, %v621
        %v688 = vmul.f32 %v659, %v622
        %v689 = vmul.f32 %v659, %v623
        %v690 = vmul.f32 %v659, %v624
        %v691 = vmul.f32 %v659, %v625
        %v692 = vmul.f32 %v659, %v626
        %v693 = vmul.f32 %v659, %v627
        %v694 = vmul.f32 %v659, %v628
        %v695 = vmul.f32 %v659, %v629
        %v696 = vmul.f32 %v659, %v630
        %v697 = vmul.f32 %v659, %v631
        %v698 = vmul.f32 %v659, %v632
        %v699 = vmul.f32 %v659, %v633
        %v700 = vmul.f32 %v659, %v634
        %v701 = vmul.f32 %v659, %v635
        %v702 = vmul.f32 %v659, %v636
        %v703 = vmul.f32 %v659, %v637
        %v704 = vmul.f32 %v659, %v638
        %v705 = vmul.f32 %v659, %v639
        %v706 = vmul.f32 %v659, %v640
        %v707 = vmul.f32 %v659, %v641
        %v708 = vmul.f32 %v659, %v642
        %v709 = vmul.f32 %v659, %v643
        %v710 = vmul.f32 %v659, %v644
        %v711 = vmul.f32 %v659, %v645
        %v712 = vmul.f32 %v659, %v646
        %v713 = vmul.f32 %v659, %v647
        %v714 = vmul.f32 %v659, %v648
        %v715 = vmul.f32 %v659, %v649
        %v716 = vmul.f32 %v659, %v650
        %v717 = vmul.f32 %v659, %v651
        %v718 = vmul.f32 %v659, %v652
        %v719 = vmul.f32 %v659, %v653
        %v720 = vmul.f32 %v659, %v654
        %v721 = vmul.f32 %v659, %v655
        %v722 = vmul.f32 %v659, %v656
        %v723 = vmul.f32 %v659, %v657
        %v724 = vadd.f32 %v331, %v660
        %v725 = vadd.f32 %v331, %v661
        %v726 = vadd.f32 %v331, %v662
        %v727 = vadd.f32 %v331, %v663
        %v728 = vadd.f32 %v331, %v664
        %v729 = vadd.f32 %v331, %v665
        %v730 = vadd.f32 %v331, %v666
        %v731 = vadd.f32 %v331, %v667
        %v732 = vadd.f32 %v331, %v668
        %v733 = vadd.f32 %v331, %v669
        %v734 = vadd.f32 %v331, %v670
        %v735 = vadd.f32 %v331, %v671
        %v736 = vadd.f32 %v331, %v672
        %v737 = vadd.f32 %v331, %v673
        %v738 = vadd.f32 %v331, %v674
        %v739 = vadd.f32 %v331, %v675
        %v740 = vadd.f32 %v331, %v676
        %v741 = vadd.f32 %v331, %v677
        %v742 = vadd.f32 %v331, %v678
        %v743 = vadd.f32 %v331, %v679
        %v744 = vadd.f32 %v331, %v680
        %v745 = vadd.f32 %v331, %v681
        %v746 = vadd.f32 %v331, %v682
        %v747 = vadd.f32 %v331, %v683
        %v748 = vadd.f32 %v331, %v684
        %v749 = vadd.f32 %v331, %v685
        %v750 = vadd.f32 %v331, %v686
        %v751 = vadd.f32 %v331, %v687
        %v752 = vadd.f32 %v331, %v688
        %v753 = vadd.f32 %v331, %v689
        %v754 = vadd.f32 %v331, %v690
        %v755 = vadd.f32 %v331, %v691
        %v756 = vadd.f32 %v331, %v692
        %v757 = vadd.f32 %v331, %v693
        %v758 = vadd.f32 %v331, %v694
        %v759 = vadd.f32 %v331, %v695
        %v760 = vadd.f32 %v331, %v696
        %v761 = vadd.f32 %v331, %v697
        %v762 = vadd.f32 %v331, %v698
        %v763 = vadd.f32 %v331, %v699
        %v764 = vadd.f32 %v331, %v700
        %v765 = vadd.f32 %v331, %v701
        %v766 = vadd.f32 %v331, %v702
        %v767 = vadd.f32 %v331, %v703
        %v768 = vadd.f32 %v331, %v704
        %v769 = vadd.f32 %v331, %v705
        %v770 = vadd.f32 %v331, %v706
        %v771 = vadd.f32 %v331, %v707
        %v772 = vadd.f32 %v331, %v708
        %v773 = vadd.f32 %v331, %v709
        %v774 = vadd.f32 %v331, %v710
        %v775 = vadd.f32 %v331, %v711
        %v776 = vadd.f32 %v331, %v712
        %v777 = vadd.f32 %v331, %v713
        %v778 = vadd.f32 %v331, %v714
        %v779 = vadd.f32 %v331, %v715
        %v780 = vadd.f32 %v331, %v716
        %v781 = vadd.f32 %v331, %v717
        %v782 = vadd.f32 %v331, %v718
        %v783 = vadd.f32 %v331, %v719
        %v784 = vadd.f32 %v331, %v720
        %v785 = vadd.f32 %v331, %v721
        %v786 = vadd.f32 %v331, %v722
        %v787 = vadd.f32 %v331, %v723
        %s788 = sld [smem:[#allocation2 + $0x2]]
        %v789 = vstv %s788
        %v790 = vmul.f32 %v789, %v201
        %v791 = vmul.f32 %v789, %v202
        %v792 = vmul.f32 %v789, %v203
        %v793 = vmul.f32 %v789, %v204
        %v794 = vmul.f32 %v789, %v205
        %v795 = vmul.f32 %v789, %v206
        %v796 = vmul.f32 %v789, %v207
        %v797 = vmul.f32 %v789, %v208
        %v798 = vmul.f32 %v789, %v209
        %v799 = vmul.f32 %v789, %v210
        %v800 = vmul.f32 %v789, %v211
        %v801 = vmul.f32 %v789, %v212
        %v802 = vmul.f32 %v789, %v213
        %v803 = vmul.f32 %v789, %v214
        %v804 = vmul.f32 %v789, %v215
        %v805 = vmul.f32 %v789, %v216
        %v806 = vmul.f32 %v789, %v217
        %v807 = vmul.f32 %v789, %v218
        %v808 = vmul.f32 %v789, %v219
        %v809 = vmul.f32 %v789, %v220
        %v810 = vmul.f32 %v789, %v221
        %v811 = vmul.f32 %v789, %v222
        %v812 = vmul.f32 %v789, %v223
        %v813 = vmul.f32 %v789, %v224
        %v814 = vmul.f32 %v789, %v225
        %v815 = vmul.f32 %v789, %v226
        %v816 = vmul.f32 %v789, %v227
        %v817 = vmul.f32 %v789, %v228
        %v818 = vmul.f32 %v789, %v229
        %v819 = vmul.f32 %v789, %v230
        %v820 = vmul.f32 %v789, %v231
        %v821 = vmul.f32 %v789, %v232
        %v822 = vmul.f32 %v789, %v233
        %v823 = vmul.f32 %v789, %v234
        %v824 = vmul.f32 %v789, %v235
        %v825 = vmul.f32 %v789, %v236
        %v826 = vmul.f32 %v789, %v237
        %v827 = vmul.f32 %v789, %v238
        %v828 = vmul.f32 %v789, %v239
        %v829 = vmul.f32 %v789, %v240
        %v830 = vmul.f32 %v789, %v241
        %v831 = vmul.f32 %v789, %v242
        %v832 = vmul.f32 %v789, %v243
        %v833 = vmul.f32 %v789, %v244
        %v834 = vmul.f32 %v789, %v245
        %v835 = vmul.f32 %v789, %v246
        %v836 = vmul.f32 %v789, %v247
        %v837 = vmul.f32 %v789, %v248
        %v838 = vmul.f32 %v789, %v249
        %v839 = vmul.f32 %v789, %v250
        %v840 = vmul.f32 %v789, %v251
        %v841 = vmul.f32 %v789, %v252
        %v842 = vmul.f32 %v789, %v253
        %v843 = vmul.f32 %v789, %v254
        %v844 = vmul.f32 %v789, %v255
        %v845 = vmul.f32 %v789, %v256
        %v846 = vmul.f32 %v789, %v257
        %v847 = vmul.f32 %v789, %v258
        %v848 = vmul.f32 %v789, %v259
        %v849 = vmul.f32 %v789, %v260
        %v850 = vmul.f32 %v789, %v261
        %v851 = vmul.f32 %v789, %v262
        %v852 = vmul.f32 %v789, %v263
        %v853 = vmul.f32 %v789, %v264
        %s854 = sld [smem:[#allocation2 + $0x3]]
        %v855 = vstv %s854
        %v856 = vmul.f32 %v855, %v266
        %v857 = vmul.f32 %v855, %v267
        %v858 = vmul.f32 %v855, %v268
        %v859 = vmul.f32 %v855, %v269
        %v860 = vmul.f32 %v855, %v270
        %v861 = vmul.f32 %v855, %v271
        %v862 = vmul.f32 %v855, %v272
        %v863 = vmul.f32 %v855, %v273
        %v864 = vmul.f32 %v855, %v274
        %v865 = vmul.f32 %v855, %v275
        %v866 = vmul.f32 %v855, %v276
        %v867 = vmul.f32 %v855, %v277
        %v868 = vmul.f32 %v855, %v278
        %v869 = vmul.f32 %v855, %v279
        %v870 = vmul.f32 %v855, %v280
        %v871 = vmul.f32 %v855, %v281
        %v872 = vmul.f32 %v855, %v282
        %v873 = vmul.f32 %v855, %v283
        %v874 = vmul.f32 %v855, %v284
        %v875 = vmul.f32 %v855, %v285
        %v876 = vmul.f32 %v855, %v286
        %v877 = vmul.f32 %v855, %v287
        %v878 = vmul.f32 %v855, %v288
        %v879 = vmul.f32 %v855, %v289
        %v880 = vmul.f32 %v855, %v290
        %v881 = vmul.f32 %v855, %v291
        %v882 = vmul.f32 %v855, %v292
        %v883 = vmul.f32 %v855, %v293
        %v884 = vmul.f32 %v855, %v294
        %v885 = vmul.f32 %v855, %v295
        %v886 = vmul.f32 %v855, %v296
        %v887 = vmul.f32 %v855, %v297
        %v888 = vmul.f32 %v855, %v298
        %v889 = vmul.f32 %v855, %v299
        %v890 = vmul.f32 %v855, %v300
        %v891 = vmul.f32 %v855, %v301
        %v892 = vmul.f32 %v855, %v302
        %v893 = vmul.f32 %v855, %v303
        %v894 = vmul.f32 %v855, %v304
        %v895 = vmul.f32 %v855, %v305
        %v896 = vmul.f32 %v855, %v306
        %v897 = vmul.f32 %v855, %v307
        %v898 = vmul.f32 %v855, %v308
        %v899 = vmul.f32 %v855, %v309
        %v900 = vmul.f32 %v855, %v310
        %v901 = vmul.f32 %v855, %v311
        %v902 = vmul.f32 %v855, %v312
        %v903 = vmul.f32 %v855, %v313
        %v904 = vmul.f32 %v855, %v314
        %v905 = vmul.f32 %v855, %v315
        %v906 = vmul.f32 %v855, %v316
        %v907 = vmul.f32 %v855, %v317
        %v908 = vmul.f32 %v855, %v318
        %v909 = vmul.f32 %v855, %v319
        %v910 = vmul.f32 %v855, %v320
        %v911 = vmul.f32 %v855, %v321
        %v912 = vmul.f32 %v855, %v322
        %v913 = vmul.f32 %v855, %v323
        %v914 = vmul.f32 %v855, %v324
        %v915 = vmul.f32 %v855, %v325
        %v916 = vmul.f32 %v855, %v326
        %v917 = vmul.f32 %v855, %v327
        %v918 = vmul.f32 %v855, %v328
        %v919 = vmul.f32 %v855, %v329
        %v920 = vadd.f32 %v790, %v856
        %v921 = vadd.f32 %v791, %v857
        %v922 = vadd.f32 %v792, %v858
        %v923 = vadd.f32 %v793, %v859
        %v924 = vadd.f32 %v794, %v860
        %v925 = vadd.f32 %v795, %v861
        %v926 = vadd.f32 %v796, %v862
        %v927 = vadd.f32 %v797, %v863
        %v928 = vadd.f32 %v798, %v864
        %v929 = vadd.f32 %v799, %v865
        %v930 = vadd.f32 %v800, %v866
        %v931 = vadd.f32 %v801, %v867
        %v932 = vadd.f32 %v802, %v868
        %v933 = vadd.f32 %v803, %v869
        %v934 = vadd.f32 %v804, %v870
        %v935 = vadd.f32 %v805, %v871
        %v936 = vadd.f32 %v806, %v872
        %v937 = vadd.f32 %v807, %v873
        %v938 = vadd.f32 %v808, %v874
        %v939 = vadd.f32 %v809, %v875
        %v940 = vadd.f32 %v810, %v876
        %v941 = vadd.f32 %v811, %v877
        %v942 = vadd.f32 %v812, %v878
        %v943 = vadd.f32 %v813, %v879
        %v944 = vadd.f32 %v814, %v880
        %v945 = vadd.f32 %v815, %v881
        %v946 = vadd.f32 %v816, %v882
        %v947 = vadd.f32 %v817, %v883
        %v948 = vadd.f32 %v818, %v884
        %v949 = vadd.f32 %v819, %v885
        %v950 = vadd.f32 %v820, %v886
        %v951 = vadd.f32 %v821, %v887
        %v952 = vadd.f32 %v822, %v888
        %v953 = vadd.f32 %v823, %v889
        %v954 = vadd.f32 %v824, %v890
        %v955 = vadd.f32 %v825, %v891
        %v956 = vadd.f32 %v826, %v892
        %v957 = vadd.f32 %v827, %v893
        %v958 = vadd.f32 %v828, %v894
        %v959 = vadd.f32 %v829, %v895
        %v960 = vadd.f32 %v830, %v896
        %v961 = vadd.f32 %v831, %v897
        %v962 = vadd.f32 %v832, %v898
        %v963 = vadd.f32 %v833, %v899
        %v964 = vadd.f32 %v834, %v900
        %v965 = vadd.f32 %v835, %v901
        %v966 = vadd.f32 %v836, %v902
        %v967 = vadd.f32 %v837, %v903
        %v968 = vadd.f32 %v838, %v904
        %v969 = vadd.f32 %v839, %v905
        %v970 = vadd.f32 %v840, %v906
        %v971 = vadd.f32 %v841, %v907
        %v972 = vadd.f32 %v842, %v908
        %v973 = vadd.f32 %v843, %v909
        %v974 = vadd.f32 %v844, %v910
        %v975 = vadd.f32 %v845, %v911
        %v976 = vadd.f32 %v846, %v912
        %v977 = vadd.f32 %v847, %v913
        %v978 = vadd.f32 %v848, %v914
        %v979 = vadd.f32 %v849, %v915
        %v980 = vadd.f32 %v850, %v916
        %v981 = vadd.f32 %v851, %v917
        %v982 = vadd.f32 %v852, %v918
        %v983 = vadd.f32 %v853, %v919
        %s984 = sld [smem:[#allocation2 + $0x11]]
        %v985 = vstv %s984
        %v986 = vadd.f32 %v920, %v985
        %v987 = vadd.f32 %v921, %v985
        %v988 = vadd.f32 %v922, %v985
        %v989 = vadd.f32 %v923, %v985
        %v990 = vadd.f32 %v924, %v985
        %v991 = vadd.f32 %v925, %v985
        %v992 = vadd.f32 %v926, %v985
        %v993 = vadd.f32 %v927, %v985
        %v994 = vadd.f32 %v928, %v985
        %v995 = vadd.f32 %v929, %v985
        %v996 = vadd.f32 %v930, %v985
        %v997 = vadd.f32 %v931, %v985
        %v998 = vadd.f32 %v932, %v985
        %v999 = vadd.f32 %v933, %v985
        %v1000 = vadd.f32 %v934, %v985
        %v1001 = vadd.f32 %v935, %v985
        %v1002 = vadd.f32 %v936, %v985
        %v1003 = vadd.f32 %v937, %v985
        %v1004 = vadd.f32 %v938, %v985
        %v1005 = vadd.f32 %v939, %v985
        %v1006 = vadd.f32 %v940, %v985
        %v1007 = vadd.f32 %v941, %v985
        %v1008 = vadd.f32 %v942, %v985
        %v1009 = vadd.f32 %v943, %v985
        %v1010 = vadd.f32 %v944, %v985
        %v1011 = vadd.f32 %v945, %v985
        %v1012 = vadd.f32 %v946, %v985
        %v1013 = vadd.f32 %v947, %v985
        %v1014 = vadd.f32 %v948, %v985
        %v1015 = vadd.f32 %v949, %v985
        %v1016 = vadd.f32 %v950, %v985
        %v1017 = vadd.f32 %v951, %v985
        %v1018 = vadd.f32 %v952, %v985
        %v1019 = vadd.f32 %v953, %v985
        %v1020 = vadd.f32 %v954, %v985
        %v1021 = vadd.f32 %v955, %v985
        %v1022 = vadd.f32 %v956, %v985
        %v1023 = vadd.f32 %v957, %v985
        %v1024 = vadd.f32 %v958, %v985
        %v1025 = vadd.f32 %v959, %v985
        %v1026 = vadd.f32 %v960, %v985
        %v1027 = vadd.f32 %v961, %v985
        %v1028 = vadd.f32 %v962, %v985
        %v1029 = vadd.f32 %v963, %v985
        %v1030 = vadd.f32 %v964, %v985
        %v1031 = vadd.f32 %v965, %v985
        %v1032 = vadd.f32 %v966, %v985
        %v1033 = vadd.f32 %v967, %v985
        %v1034 = vadd.f32 %v968, %v985
        %v1035 = vadd.f32 %v969, %v985
        %v1036 = vadd.f32 %v970, %v985
        %v1037 = vadd.f32 %v971, %v985
        %v1038 = vadd.f32 %v972, %v985
        %v1039 = vadd.f32 %v973, %v985
        %v1040 = vadd.f32 %v974, %v985
        %v1041 = vadd.f32 %v975, %v985
        %v1042 = vadd.f32 %v976, %v985
        %v1043 = vadd.f32 %v977, %v985
        %v1044 = vadd.f32 %v978, %v985
        %v1045 = vadd.f32 %v979, %v985
        %v1046 = vadd.f32 %v980, %v985
        %v1047 = vadd.f32 %v981, %v985
        %v1048 = vadd.f32 %v982, %v985
        %v1049 = vadd.f32 %v983, %v985
        %v1050 = vtanh.pop %v986
        %v1051 = vtanh.pop %v987
        %v1052 = vtanh.pop %v988
        %v1053 = vtanh.pop %v989
        %v1054 = vtanh.pop %v990
        %v1055 = vtanh.pop %v991
        %v1056 = vtanh.pop %v992
        %v1057 = vtanh.pop %v993
        %v1058 = vtanh.pop %v994
        %v1059 = vtanh.pop %v995
        %v1060 = vtanh.pop %v996
        %v1061 = vtanh.pop %v997
        %v1062 = vtanh.pop %v998
        %v1063 = vtanh.pop %v999
        %v1064 = vtanh.pop %v1000
        %v1065 = vtanh.pop %v1001
        %v1066 = vtanh.pop %v1002
        %v1067 = vtanh.pop %v1003
        %v1068 = vtanh.pop %v1004
        %v1069 = vtanh.pop %v1005
        %v1070 = vtanh.pop %v1006
        %v1071 = vtanh.pop %v1007
        %v1072 = vtanh.pop %v1008
        %v1073 = vtanh.pop %v1009
        %v1074 = vtanh.pop %v1010
        %v1075 = vtanh.pop %v1011
        %v1076 = vtanh.pop %v1012
        %v1077 = vtanh.pop %v1013
        %v1078 = vtanh.pop %v1014
        %v1079 = vtanh.pop %v1015
        %v1080 = vtanh.pop %v1016
        %v1081 = vtanh.pop %v1017
        %v1082 = vtanh.pop %v1018
        %v1083 = vtanh.pop %v1019
        %v1084 = vtanh.pop %v1020
        %v1085 = vtanh.pop %v1021
        %v1086 = vtanh.pop %v1022
        %v1087 = vtanh.pop %v1023
        %v1088 = vtanh.pop %v1024
        %v1089 = vtanh.pop %v1025
        %v1090 = vtanh.pop %v1026
        %v1091 = vtanh.pop %v1027
        %v1092 = vtanh.pop %v1028
        %v1093 = vtanh.pop %v1029
        %v1094 = vtanh.pop %v1030
        %v1095 = vtanh.pop %v1031
        %v1096 = vtanh.pop %v1032
        %v1097 = vtanh.pop %v1033
        %v1098 = vtanh.pop %v1034
        %v1099 = vtanh.pop %v1035
        %v1100 = vtanh.pop %v1036
        %v1101 = vtanh.pop %v1037
        %v1102 = vtanh.pop %v1038
        %v1103 = vtanh.pop %v1039
        %v1104 = vtanh.pop %v1040
        %v1105 = vtanh.pop %v1041
        %v1106 = vtanh.pop %v1042
        %v1107 = vtanh.pop %v1043
        %v1108 = vtanh.pop %v1044
        %v1109 = vtanh.pop %v1045
        %v1110 = vtanh.pop %v1046
        %v1111 = vtanh.pop %v1047
        %v1112 = vtanh.pop %v1048
        %v1113 = vtanh.pop %v1049
        %s1114 = sld [smem:[#allocation2 + $0x19]]
        %v1115 = vstv %s1114
        %v1116 = vmul.f32 %v1115, %v1050
        %v1117 = vmul.f32 %v1115, %v1051
        %v1118 = vmul.f32 %v1115, %v1052
        %v1119 = vmul.f32 %v1115, %v1053
        %v1120 = vmul.f32 %v1115, %v1054
        %v1121 = vmul.f32 %v1115, %v1055
        %v1122 = vmul.f32 %v1115, %v1056
        %v1123 = vmul.f32 %v1115, %v1057
        %v1124 = vmul.f32 %v1115, %v1058
        %v1125 = vmul.f32 %v1115, %v1059
        %v1126 = vmul.f32 %v1115, %v1060
        %v1127 = vmul.f32 %v1115, %v1061
        %v1128 = vmul.f32 %v1115, %v1062
        %v1129 = vmul.f32 %v1115, %v1063
        %v1130 = vmul.f32 %v1115, %v1064
        %v1131 = vmul.f32 %v1115, %v1065
        %v1132 = vmul.f32 %v1115, %v1066
        %v1133 = vmul.f32 %v1115, %v1067
        %v1134 = vmul.f32 %v1115, %v1068
        %v1135 = vmul.f32 %v1115, %v1069
        %v1136 = vmul.f32 %v1115, %v1070
        %v1137 = vmul.f32 %v1115, %v1071
        %v1138 = vmul.f32 %v1115, %v1072
        %v1139 = vmul.f32 %v1115, %v1073
        %v1140 = vmul.f32 %v1115, %v1074
        %v1141 = vmul.f32 %v1115, %v1075
        %v1142 = vmul.f32 %v1115, %v1076
        %v1143 = vmul.f32 %v1115, %v1077
        %v1144 = vmul.f32 %v1115, %v1078
        %v1145 = vmul.f32 %v1115, %v1079
        %v1146 = vmul.f32 %v1115, %v1080
        %v1147 = vmul.f32 %v1115, %v1081
        %v1148 = vmul.f32 %v1115, %v1082
        %v1149 = vmul.f32 %v1115, %v1083
        %v1150 = vmul.f32 %v1115, %v1084
        %v1151 = vmul.f32 %v1115, %v1085
        %v1152 = vmul.f32 %v1115, %v1086
        %v1153 = vmul.f32 %v1115, %v1087
        %v1154 = vmul.f32 %v1115, %v1088
        %v1155 = vmul.f32 %v1115, %v1089
        %v1156 = vmul.f32 %v1115, %v1090
        %v1157 = vmul.f32 %v1115, %v1091
        %v1158 = vmul.f32 %v1115, %v1092
        %v1159 = vmul.f32 %v1115, %v1093
        %v1160 = vmul.f32 %v1115, %v1094
        %v1161 = vmul.f32 %v1115, %v1095
        %v1162 = vmul.f32 %v1115, %v1096
        %v1163 = vmul.f32 %v1115, %v1097
        %v1164 = vmul.f32 %v1115, %v1098
        %v1165 = vmul.f32 %v1115, %v1099
        %v1166 = vmul.f32 %v1115, %v1100
        %v1167 = vmul.f32 %v1115, %v1101
        %v1168 = vmul.f32 %v1115, %v1102
        %v1169 = vmul.f32 %v1115, %v1103
        %v1170 = vmul.f32 %v1115, %v1104
        %v1171 = vmul.f32 %v1115, %v1105
        %v1172 = vmul.f32 %v1115, %v1106
        %v1173 = vmul.f32 %v1115, %v1107
        %v1174 = vmul.f32 %v1115, %v1108
        %v1175 = vmul.f32 %v1115, %v1109
        %v1176 = vmul.f32 %v1115, %v1110
        %v1177 = vmul.f32 %v1115, %v1111
        %v1178 = vmul.f32 %v1115, %v1112
        %v1179 = vmul.f32 %v1115, %v1113
        %v1180 = vadd.f32 %v724, %v1116
        %v1181 = vadd.f32 %v725, %v1117
        %v1182 = vadd.f32 %v726, %v1118
        %v1183 = vadd.f32 %v727, %v1119
        %v1184 = vadd.f32 %v728, %v1120
        %v1185 = vadd.f32 %v729, %v1121
        %v1186 = vadd.f32 %v730, %v1122
        %v1187 = vadd.f32 %v731, %v1123
        %v1188 = vadd.f32 %v732, %v1124
        %v1189 = vadd.f32 %v733, %v1125
        %v1190 = vadd.f32 %v734, %v1126
        %v1191 = vadd.f32 %v735, %v1127
        %v1192 = vadd.f32 %v736, %v1128
        %v1193 = vadd.f32 %v737, %v1129
        %v1194 = vadd.f32 %v738, %v1130
        %v1195 = vadd.f32 %v739, %v1131
        %v1196 = vadd.f32 %v740, %v1132
        %v1197 = vadd.f32 %v741, %v1133
        %v1198 = vadd.f32 %v742, %v1134
        %v1199 = vadd.f32 %v743, %v1135
        %v1200 = vadd.f32 %v744, %v1136
        %v1201 = vadd.f32 %v745, %v1137
        %v1202 = vadd.f32 %v746, %v1138
        %v1203 = vadd.f32 %v747, %v1139
        %v1204 = vadd.f32 %v748, %v1140
        %v1205 = vadd.f32 %v749, %v1141
        %v1206 = vadd.f32 %v750, %v1142
        %v1207 = vadd.f32 %v751, %v1143
        %v1208 = vadd.f32 %v752, %v1144
        %v1209 = vadd.f32 %v753, %v1145
        %v1210 = vadd.f32 %v754, %v1146
        %v1211 = vadd.f32 %v755, %v1147
        %v1212 = vadd.f32 %v756, %v1148
        %v1213 = vadd.f32 %v757, %v1149
        %v1214 = vadd.f32 %v758, %v1150
        %v1215 = vadd.f32 %v759, %v1151
        %v1216 = vadd.f32 %v760, %v1152
        %v1217 = vadd.f32 %v761, %v1153
        %v1218 = vadd.f32 %v762, %v1154
        %v1219 = vadd.f32 %v763, %v1155
        %v1220 = vadd.f32 %v764, %v1156
        %v1221 = vadd.f32 %v765, %v1157
        %v1222 = vadd.f32 %v766, %v1158
        %v1223 = vadd.f32 %v767, %v1159
        %v1224 = vadd.f32 %v768, %v1160
        %v1225 = vadd.f32 %v769, %v1161
        %v1226 = vadd.f32 %v770, %v1162
        %v1227 = vadd.f32 %v771, %v1163
        %v1228 = vadd.f32 %v772, %v1164
        %v1229 = vadd.f32 %v773, %v1165
        %v1230 = vadd.f32 %v774, %v1166
        %v1231 = vadd.f32 %v775, %v1167
        %v1232 = vadd.f32 %v776, %v1168
        %v1233 = vadd.f32 %v777, %v1169
        %v1234 = vadd.f32 %v778, %v1170
        %v1235 = vadd.f32 %v779, %v1171
        %v1236 = vadd.f32 %v780, %v1172
        %v1237 = vadd.f32 %v781, %v1173
        %v1238 = vadd.f32 %v782, %v1174
        %v1239 = vadd.f32 %v783, %v1175
        %v1240 = vadd.f32 %v784, %v1176
        %v1241 = vadd.f32 %v785, %v1177
        %v1242 = vadd.f32 %v786, %v1178
        %v1243 = vadd.f32 %v787, %v1179
        %s1244 = sld [smem:[#allocation2 + $0x4]]
        %v1245 = vstv %s1244
        %v1246 = vmul.f32 %v1245, %v201
        %v1247 = vmul.f32 %v1245, %v202
        %v1248 = vmul.f32 %v1245, %v203
        %v1249 = vmul.f32 %v1245, %v204
        %v1250 = vmul.f32 %v1245, %v205
        %v1251 = vmul.f32 %v1245, %v206
        %v1252 = vmul.f32 %v1245, %v207
        %v1253 = vmul.f32 %v1245, %v208
        %v1254 = vmul.f32 %v1245, %v209
        %v1255 = vmul.f32 %v1245, %v210
        %v1256 = vmul.f32 %v1245, %v211
        %v1257 = vmul.f32 %v1245, %v212
        %v1258 = vmul.f32 %v1245, %v213
        %v1259 = vmul.f32 %v1245, %v214
        %v1260 = vmul.f32 %v1245, %v215
        %v1261 = vmul.f32 %v1245, %v216
        %v1262 = vmul.f32 %v1245, %v217
        %v1263 = vmul.f32 %v1245, %v218
        %v1264 = vmul.f32 %v1245, %v219
        %v1265 = vmul.f32 %v1245, %v220
        %v1266 = vmul.f32 %v1245, %v221
        %v1267 = vmul.f32 %v1245, %v222
        %v1268 = vmul.f32 %v1245, %v223
        %v1269 = vmul.f32 %v1245, %v224
        %v1270 = vmul.f32 %v1245, %v225
        %v1271 = vmul.f32 %v1245, %v226
        %v1272 = vmul.f32 %v1245, %v227
        %v1273 = vmul.f32 %v1245, %v228
        %v1274 = vmul.f32 %v1245, %v229
        %v1275 = vmul.f32 %v1245, %v230
        %v1276 = vmul.f32 %v1245, %v231
        %v1277 = vmul.f32 %v1245, %v232
        %v1278 = vmul.f32 %v1245, %v233
        %v1279 = vmul.f32 %v1245, %v234
        %v1280 = vmul.f32 %v1245, %v235
        %v1281 = vmul.f32 %v1245, %v236
        %v1282 = vmul.f32 %v1245, %v237
        %v1283 = vmul.f32 %v1245, %v238
        %v1284 = vmul.f32 %v1245, %v239
        %v1285 = vmul.f32 %v1245, %v240
        %v1286 = vmul.f32 %v1245, %v241
        %v1287 = vmul.f32 %v1245, %v242
        %v1288 = vmul.f32 %v1245, %v243
        %v1289 = vmul.f32 %v1245, %v244
        %v1290 = vmul.f32 %v1245, %v245
        %v1291 = vmul.f32 %v1245, %v246
        %v1292 = vmul.f32 %v1245, %v247
        %v1293 = vmul.f32 %v1245, %v248
        %v1294 = vmul.f32 %v1245, %v249
        %v1295 = vmul.f32 %v1245, %v250
        %v1296 = vmul.f32 %v1245, %v251
        %v1297 = vmul.f32 %v1245, %v252
        %v1298 = vmul.f32 %v1245, %v253
        %v1299 = vmul.f32 %v1245, %v254
        %v1300 = vmul.f32 %v1245, %v255
        %v1301 = vmul.f32 %v1245, %v256
        %v1302 = vmul.f32 %v1245, %v257
        %v1303 = vmul.f32 %v1245, %v258
        %v1304 = vmul.f32 %v1245, %v259
        %v1305 = vmul.f32 %v1245, %v260
        %v1306 = vmul.f32 %v1245, %v261
        %v1307 = vmul.f32 %v1245, %v262
        %v1308 = vmul.f32 %v1245, %v263
        %v1309 = vmul.f32 %v1245, %v264
        %s1310 = sld [smem:[#allocation2 + $0x5]]
        %v1311 = vstv %s1310
        %v1312 = vmul.f32 %v1311, %v266
        %v1313 = vmul.f32 %v1311, %v267
        %v1314 = vmul.f32 %v1311, %v268
        %v1315 = vmul.f32 %v1311, %v269
        %v1316 = vmul.f32 %v1311, %v270
        %v1317 = vmul.f32 %v1311, %v271
        %v1318 = vmul.f32 %v1311, %v272
        %v1319 = vmul.f32 %v1311, %v273
        %v1320 = vmul.f32 %v1311, %v274
        %v1321 = vmul.f32 %v1311, %v275
        %v1322 = vmul.f32 %v1311, %v276
        %v1323 = vmul.f32 %v1311, %v277
        %v1324 = vmul.f32 %v1311, %v278
        %v1325 = vmul.f32 %v1311, %v279
        %v1326 = vmul.f32 %v1311, %v280
        %v1327 = vmul.f32 %v1311, %v281
        %v1328 = vmul.f32 %v1311, %v282
        %v1329 = vmul.f32 %v1311, %v283
        %v1330 = vmul.f32 %v1311, %v284
        %v1331 = vmul.f32 %v1311, %v285
        %v1332 = vmul.f32 %v1311, %v286
        %v1333 = vmul.f32 %v1311, %v287
        %v1334 = vmul.f32 %v1311, %v288
        %v1335 = vmul.f32 %v1311, %v289
        %v1336 = vmul.f32 %v1311, %v290
        %v1337 = vmul.f32 %v1311, %v291
        %v1338 = vmul.f32 %v1311, %v292
        %v1339 = vmul.f32 %v1311, %v293
        %v1340 = vmul.f32 %v1311, %v294
        %v1341 = vmul.f32 %v1311, %v295
        %v1342 = vmul.f32 %v1311, %v296
        %v1343 = vmul.f32 %v1311, %v297
        %v1344 = vmul.f32 %v1311, %v298
        %v1345 = vmul.f32 %v1311, %v299
        %v1346 = vmul.f32 %v1311, %v300
        %v1347 = vmul.f32 %v1311, %v301
        %v1348 = vmul.f32 %v1311, %v302
        %v1349 = vmul.f32 %v1311, %v303
        %v1350 = vmul.f32 %v1311, %v304
        %v1351 = vmul.f32 %v1311, %v305
        %v1352 = vmul.f32 %v1311, %v306
        %v1353 = vmul.f32 %v1311, %v307
        %v1354 = vmul.f32 %v1311, %v308
        %v1355 = vmul.f32 %v1311, %v309
        %v1356 = vmul.f32 %v1311, %v310
        %v1357 = vmul.f32 %v1311, %v311
        %v1358 = vmul.f32 %v1311, %v312
        %v1359 = vmul.f32 %v1311, %v313
        %v1360 = vmul.f32 %v1311, %v314
        %v1361 = vmul.f32 %v1311, %v315
        %v1362 = vmul.f32 %v1311, %v316
        %v1363 = vmul.f32 %v1311, %v317
        %v1364 = vmul.f32 %v1311, %v318
        %v1365 = vmul.f32 %v1311, %v319
        %v1366 = vmul.f32 %v1311, %v320
        %v1367 = vmul.f32 %v1311, %v321
        %v1368 = vmul.f32 %v1311, %v322
        %v1369 = vmul.f32 %v1311, %v323
        %v1370 = vmul.f32 %v1311, %v324
        %v1371 = vmul.f32 %v1311, %v325
        %v1372 = vmul.f32 %v1311, %v326
        %v1373 = vmul.f32 %v1311, %v327
        %v1374 = vmul.f32 %v1311, %v328
        %v1375 = vmul.f32 %v1311, %v329
        %v1376 = vadd.f32 %v1246, %v1312
        %v1377 = vadd.f32 %v1247, %v1313
        %v1378 = vadd.f32 %v1248, %v1314
        %v1379 = vadd.f32 %v1249, %v1315
        %v1380 = vadd.f32 %v1250, %v1316
        %v1381 = vadd.f32 %v1251, %v1317
        %v1382 = vadd.f32 %v1252, %v1318
        %v1383 = vadd.f32 %v1253, %v1319
        %v1384 = vadd.f32 %v1254, %v1320
        %v1385 = vadd.f32 %v1255, %v1321
        %v1386 = vadd.f32 %v1256, %v1322
        %v1387 = vadd.f32 %v1257, %v1323
        %v1388 = vadd.f32 %v1258, %v1324
        %v1389 = vadd.f32 %v1259, %v1325
        %v1390 = vadd.f32 %v1260, %v1326
        %v1391 = vadd.f32 %v1261, %v1327
        %v1392 = vadd.f32 %v1262, %v1328
        %v1393 = vadd.f32 %v1263, %v1329
        %v1394 = vadd.f32 %v1264, %v1330
        %v1395 = vadd.f32 %v1265, %v1331
        %v1396 = vadd.f32 %v1266, %v1332
        %v1397 = vadd.f32 %v1267, %v1333
        %v1398 = vadd.f32 %v1268, %v1334
        %v1399 = vadd.f32 %v1269, %v1335
        %v1400 = vadd.f32 %v1270, %v1336
        %v1401 = vadd.f32 %v1271, %v1337
        %v1402 = vadd.f32 %v1272, %v1338
        %v1403 = vadd.f32 %v1273, %v1339
        %v1404 = vadd.f32 %v1274, %v1340
        %v1405 = vadd.f32 %v1275, %v1341
        %v1406 = vadd.f32 %v1276, %v1342
        %v1407 = vadd.f32 %v1277, %v1343
        %v1408 = vadd.f32 %v1278, %v1344
        %v1409 = vadd.f32 %v1279, %v1345
        %v1410 = vadd.f32 %v1280, %v1346
        %v1411 = vadd.f32 %v1281, %v1347
        %v1412 = vadd.f32 %v1282, %v1348
        %v1413 = vadd.f32 %v1283, %v1349
        %v1414 = vadd.f32 %v1284, %v1350
        %v1415 = vadd.f32 %v1285, %v1351
        %v1416 = vadd.f32 %v1286, %v1352
        %v1417 = vadd.f32 %v1287, %v1353
        %v1418 = vadd.f32 %v1288, %v1354
        %v1419 = vadd.f32 %v1289, %v1355
        %v1420 = vadd.f32 %v1290, %v1356
        %v1421 = vadd.f32 %v1291, %v1357
        %v1422 = vadd.f32 %v1292, %v1358
        %v1423 = vadd.f32 %v1293, %v1359
        %v1424 = vadd.f32 %v1294, %v1360
        %v1425 = vadd.f32 %v1295, %v1361
        %v1426 = vadd.f32 %v1296, %v1362
        %v1427 = vadd.f32 %v1297, %v1363
        %v1428 = vadd.f32 %v1298, %v1364
        %v1429 = vadd.f32 %v1299, %v1365
        %v1430 = vadd.f32 %v1300, %v1366
        %v1431 = vadd.f32 %v1301, %v1367
        %v1432 = vadd.f32 %v1302, %v1368
        %v1433 = vadd.f32 %v1303, %v1369
        %v1434 = vadd.f32 %v1304, %v1370
        %v1435 = vadd.f32 %v1305, %v1371
        %v1436 = vadd.f32 %v1306, %v1372
        %v1437 = vadd.f32 %v1307, %v1373
        %v1438 = vadd.f32 %v1308, %v1374
        %v1439 = vadd.f32 %v1309, %v1375
        %s1440 = sld [smem:[#allocation2 + $0x12]]
        %v1441 = vstv %s1440
        %v1442 = vadd.f32 %v1376, %v1441
        %v1443 = vadd.f32 %v1377, %v1441
        %v1444 = vadd.f32 %v1378, %v1441
        %v1445 = vadd.f32 %v1379, %v1441
        %v1446 = vadd.f32 %v1380, %v1441
        %v1447 = vadd.f32 %v1381, %v1441
        %v1448 = vadd.f32 %v1382, %v1441
        %v1449 = vadd.f32 %v1383, %v1441
        %v1450 = vadd.f32 %v1384, %v1441
        %v1451 = vadd.f32 %v1385, %v1441
        %v1452 = vadd.f32 %v1386, %v1441
        %v1453 = vadd.f32 %v1387, %v1441
        %v1454 = vadd.f32 %v1388, %v1441
        %v1455 = vadd.f32 %v1389, %v1441
        %v1456 = vadd.f32 %v1390, %v1441
        %v1457 = vadd.f32 %v1391, %v1441
        %v1458 = vadd.f32 %v1392, %v1441
        %v1459 = vadd.f32 %v1393, %v1441
        %v1460 = vadd.f32 %v1394, %v1441
        %v1461 = vadd.f32 %v1395, %v1441
        %v1462 = vadd.f32 %v1396, %v1441
        %v1463 = vadd.f32 %v1397, %v1441
        %v1464 = vadd.f32 %v1398, %v1441
        %v1465 = vadd.f32 %v1399, %v1441
        %v1466 = vadd.f32 %v1400, %v1441
        %v1467 = vadd.f32 %v1401, %v1441
        %v1468 = vadd.f32 %v1402, %v1441
        %v1469 = vadd.f32 %v1403, %v1441
        %v1470 = vadd.f32 %v1404, %v1441
        %v1471 = vadd.f32 %v1405, %v1441
        %v1472 = vadd.f32 %v1406, %v1441
        %v1473 = vadd.f32 %v1407, %v1441
        %v1474 = vadd.f32 %v1408, %v1441
        %v1475 = vadd.f32 %v1409, %v1441
        %v1476 = vadd.f32 %v1410, %v1441
        %v1477 = vadd.f32 %v1411, %v1441
        %v1478 = vadd.f32 %v1412, %v1441
        %v1479 = vadd.f32 %v1413, %v1441
        %v1480 = vadd.f32 %v1414, %v1441
        %v1481 = vadd.f32 %v1415, %v1441
        %v1482 = vadd.f32 %v1416, %v1441
        %v1483 = vadd.f32 %v1417, %v1441
        %v1484 = vadd.f32 %v1418, %v1441
        %v1485 = vadd.f32 %v1419, %v1441
        %v1486 = vadd.f32 %v1420, %v1441
        %v1487 = vadd.f32 %v1421, %v1441
        %v1488 = vadd.f32 %v1422, %v1441
        %v1489 = vadd.f32 %v1423, %v1441
        %v1490 = vadd.f32 %v1424, %v1441
        %v1491 = vadd.f32 %v1425, %v1441
        %v1492 = vadd.f32 %v1426, %v1441
        %v1493 = vadd.f32 %v1427, %v1441
        %v1494 = vadd.f32 %v1428, %v1441
        %v1495 = vadd.f32 %v1429, %v1441
        %v1496 = vadd.f32 %v1430, %v1441
        %v1497 = vadd.f32 %v1431, %v1441
        %v1498 = vadd.f32 %v1432, %v1441
        %v1499 = vadd.f32 %v1433, %v1441
        %v1500 = vadd.f32 %v1434, %v1441
        %v1501 = vadd.f32 %v1435, %v1441
        %v1502 = vadd.f32 %v1436, %v1441
        %v1503 = vadd.f32 %v1437, %v1441
        %v1504 = vadd.f32 %v1438, %v1441
        %v1505 = vadd.f32 %v1439, %v1441
        %v1506 = vtanh.pop %v1442
        %v1507 = vtanh.pop %v1443
        %v1508 = vtanh.pop %v1444
        %v1509 = vtanh.pop %v1445
        %v1510 = vtanh.pop %v1446
        %v1511 = vtanh.pop %v1447
        %v1512 = vtanh.pop %v1448
        %v1513 = vtanh.pop %v1449
        %v1514 = vtanh.pop %v1450
        %v1515 = vtanh.pop %v1451
        %v1516 = vtanh.pop %v1452
        %v1517 = vtanh.pop %v1453
        %v1518 = vtanh.pop %v1454
        %v1519 = vtanh.pop %v1455
        %v1520 = vtanh.pop %v1456
        %v1521 = vtanh.pop %v1457
        %v1522 = vtanh.pop %v1458
        %v1523 = vtanh.pop %v1459
        %v1524 = vtanh.pop %v1460
        %v1525 = vtanh.pop %v1461
        %v1526 = vtanh.pop %v1462
        %v1527 = vtanh.pop %v1463
        %v1528 = vtanh.pop %v1464
        %v1529 = vtanh.pop %v1465
        %v1530 = vtanh.pop %v1466
        %v1531 = vtanh.pop %v1467
        %v1532 = vtanh.pop %v1468
        %v1533 = vtanh.pop %v1469
        %v1534 = vtanh.pop %v1470
        %v1535 = vtanh.pop %v1471
        %v1536 = vtanh.pop %v1472
        %v1537 = vtanh.pop %v1473
        %v1538 = vtanh.pop %v1474
        %v1539 = vtanh.pop %v1475
        %v1540 = vtanh.pop %v1476
        %v1541 = vtanh.pop %v1477
        %v1542 = vtanh.pop %v1478
        %v1543 = vtanh.pop %v1479
        %v1544 = vtanh.pop %v1480
        %v1545 = vtanh.pop %v1481
        %v1546 = vtanh.pop %v1482
        %v1547 = vtanh.pop %v1483
        %v1548 = vtanh.pop %v1484
        %v1549 = vtanh.pop %v1485
        %v1550 = vtanh.pop %v1486
        %v1551 = vtanh.pop %v1487
        %v1552 = vtanh.pop %v1488
        %v1553 = vtanh.pop %v1489
        %v1554 = vtanh.pop %v1490
        %v1555 = vtanh.pop %v1491
        %v1556 = vtanh.pop %v1492
        %v1557 = vtanh.pop %v1493
        %v1558 = vtanh.pop %v1494
        %v1559 = vtanh.pop %v1495
        %v1560 = vtanh.pop %v1496
        %v1561 = vtanh.pop %v1497
        %v1562 = vtanh.pop %v1498
        %v1563 = vtanh.pop %v1499
        %v1564 = vtanh.pop %v1500
        %v1565 = vtanh.pop %v1501
        %v1566 = vtanh.pop %v1502
        %v1567 = vtanh.pop %v1503
        %v1568 = vtanh.pop %v1504
        %v1569 = vtanh.pop %v1505
        %s1570 = sld [smem:[#allocation2 + $0x1a]]
        %v1571 = vstv %s1570
        %v1572 = vmul.f32 %v1571, %v1506
        %v1573 = vmul.f32 %v1571, %v1507
        %v1574 = vmul.f32 %v1571, %v1508
        %v1575 = vmul.f32 %v1571, %v1509
        %v1576 = vmul.f32 %v1571, %v1510
        %v1577 = vmul.f32 %v1571, %v1511
        %v1578 = vmul.f32 %v1571, %v1512
        %v1579 = vmul.f32 %v1571, %v1513
        %v1580 = vmul.f32 %v1571, %v1514
        %v1581 = vmul.f32 %v1571, %v1515
        %v1582 = vmul.f32 %v1571, %v1516
        %v1583 = vmul.f32 %v1571, %v1517
        %v1584 = vmul.f32 %v1571, %v1518
        %v1585 = vmul.f32 %v1571, %v1519
        %v1586 = vmul.f32 %v1571, %v1520
        %v1587 = vmul.f32 %v1571, %v1521
        %v1588 = vmul.f32 %v1571, %v1522
        %v1589 = vmul.f32 %v1571, %v1523
        %v1590 = vmul.f32 %v1571, %v1524
        %v1591 = vmul.f32 %v1571, %v1525
        %v1592 = vmul.f32 %v1571, %v1526
        %v1593 = vmul.f32 %v1571, %v1527
        %v1594 = vmul.f32 %v1571, %v1528
        %v1595 = vmul.f32 %v1571, %v1529
        %v1596 = vmul.f32 %v1571, %v1530
        %v1597 = vmul.f32 %v1571, %v1531
        %v1598 = vmul.f32 %v1571, %v1532
        %v1599 = vmul.f32 %v1571, %v1533
        %v1600 = vmul.f32 %v1571, %v1534
        %v1601 = vmul.f32 %v1571, %v1535
        %v1602 = vmul.f32 %v1571, %v1536
        %v1603 = vmul.f32 %v1571, %v1537
        %v1604 = vmul.f32 %v1571, %v1538
        %v1605 = vmul.f32 %v1571, %v1539
        %v1606 = vmul.f32 %v1571, %v1540
        %v1607 = vmul.f32 %v1571, %v1541
        %v1608 = vmul.f32 %v1571, %v1542
        %v1609 = vmul.f32 %v1571, %v1543
        %v1610 = vmul.f32 %v1571, %v1544
        %v1611 = vmul.f32 %v1571, %v1545
        %v1612 = vmul.f32 %v1571, %v1546
        %v1613 = vmul.f32 %v1571, %v1547
        %v1614 = vmul.f32 %v1571, %v1548
        %v1615 = vmul.f32 %v1571, %v1549
        %v1616 = vmul.f32 %v1571, %v1550
        %v1617 = vmul.f32 %v1571, %v1551
        %v1618 = vmul.f32 %v1571, %v1552
        %v1619 = vmul.f32 %v1571, %v1553
        %v1620 = vmul.f32 %v1571, %v1554
        %v1621 = vmul.f32 %v1571, %v1555
        %v1622 = vmul.f32 %v1571, %v1556
        %v1623 = vmul.f32 %v1571, %v1557
        %v1624 = vmul.f32 %v1571, %v1558
        %v1625 = vmul.f32 %v1571, %v1559
        %v1626 = vmul.f32 %v1571, %v1560
        %v1627 = vmul.f32 %v1571, %v1561
        %v1628 = vmul.f32 %v1571, %v1562
        %v1629 = vmul.f32 %v1571, %v1563
        %v1630 = vmul.f32 %v1571, %v1564
        %v1631 = vmul.f32 %v1571, %v1565
        %v1632 = vmul.f32 %v1571, %v1566
        %v1633 = vmul.f32 %v1571, %v1567
        %v1634 = vmul.f32 %v1571, %v1568
        %v1635 = vmul.f32 %v1571, %v1569
        %v1636 = vadd.f32 %v1180, %v1572
        %v1637 = vadd.f32 %v1181, %v1573
        %v1638 = vadd.f32 %v1182, %v1574
        %v1639 = vadd.f32 %v1183, %v1575
        %v1640 = vadd.f32 %v1184, %v1576
        %v1641 = vadd.f32 %v1185, %v1577
        %v1642 = vadd.f32 %v1186, %v1578
        %v1643 = vadd.f32 %v1187, %v1579
        %v1644 = vadd.f32 %v1188, %v1580
        %v1645 = vadd.f32 %v1189, %v1581
        %v1646 = vadd.f32 %v1190, %v1582
        %v1647 = vadd.f32 %v1191, %v1583
        %v1648 = vadd.f32 %v1192, %v1584
        %v1649 = vadd.f32 %v1193, %v1585
        %v1650 = vadd.f32 %v1194, %v1586
        %v1651 = vadd.f32 %v1195, %v1587
        %v1652 = vadd.f32 %v1196, %v1588
        %v1653 = vadd.f32 %v1197, %v1589
        %v1654 = vadd.f32 %v1198, %v1590
        %v1655 = vadd.f32 %v1199, %v1591
        %v1656 = vadd.f32 %v1200, %v1592
        %v1657 = vadd.f32 %v1201, %v1593
        %v1658 = vadd.f32 %v1202, %v1594
        %v1659 = vadd.f32 %v1203, %v1595
        %v1660 = vadd.f32 %v1204, %v1596
        %v1661 = vadd.f32 %v1205, %v1597
        %v1662 = vadd.f32 %v1206, %v1598
        %v1663 = vadd.f32 %v1207, %v1599
        %v1664 = vadd.f32 %v1208, %v1600
        %v1665 = vadd.f32 %v1209, %v1601
        %v1666 = vadd.f32 %v1210, %v1602
        %v1667 = vadd.f32 %v1211, %v1603
        %v1668 = vadd.f32 %v1212, %v1604
        %v1669 = vadd.f32 %v1213, %v1605
        %v1670 = vadd.f32 %v1214, %v1606
        %v1671 = vadd.f32 %v1215, %v1607
        %v1672 = vadd.f32 %v1216, %v1608
        %v1673 = vadd.f32 %v1217, %v1609
        %v1674 = vadd.f32 %v1218, %v1610
        %v1675 = vadd.f32 %v1219, %v1611
        %v1676 = vadd.f32 %v1220, %v1612
        %v1677 = vadd.f32 %v1221, %v1613
        %v1678 = vadd.f32 %v1222, %v1614
        %v1679 = vadd.f32 %v1223, %v1615
        %v1680 = vadd.f32 %v1224, %v1616
        %v1681 = vadd.f32 %v1225, %v1617
        %v1682 = vadd.f32 %v1226, %v1618
        %v1683 = vadd.f32 %v1227, %v1619
        %v1684 = vadd.f32 %v1228, %v1620
        %v1685 = vadd.f32 %v1229, %v1621
        %v1686 = vadd.f32 %v1230, %v1622
        %v1687 = vadd.f32 %v1231, %v1623
        %v1688 = vadd.f32 %v1232, %v1624
        %v1689 = vadd.f32 %v1233, %v1625
        %v1690 = vadd.f32 %v1234, %v1626
        %v1691 = vadd.f32 %v1235, %v1627
        %v1692 = vadd.f32 %v1236, %v1628
        %v1693 = vadd.f32 %v1237, %v1629
        %v1694 = vadd.f32 %v1238, %v1630
        %v1695 = vadd.f32 %v1239, %v1631
        %v1696 = vadd.f32 %v1240, %v1632
        %v1697 = vadd.f32 %v1241, %v1633
        %v1698 = vadd.f32 %v1242, %v1634
        %v1699 = vadd.f32 %v1243, %v1635
        %s1700 = sld [smem:[#allocation2 + $0x6]]
        %v1701 = vstv %s1700
        %v1702 = vmul.f32 %v1701, %v201
        %v1703 = vmul.f32 %v1701, %v202
        %v1704 = vmul.f32 %v1701, %v203
        %v1705 = vmul.f32 %v1701, %v204
        %v1706 = vmul.f32 %v1701, %v205
        %v1707 = vmul.f32 %v1701, %v206
        %v1708 = vmul.f32 %v1701, %v207
        %v1709 = vmul.f32 %v1701, %v208
        %v1710 = vmul.f32 %v1701, %v209
        %v1711 = vmul.f32 %v1701, %v210
        %v1712 = vmul.f32 %v1701, %v211
        %v1713 = vmul.f32 %v1701, %v212
        %v1714 = vmul.f32 %v1701, %v213
        %v1715 = vmul.f32 %v1701, %v214
        %v1716 = vmul.f32 %v1701, %v215
        %v1717 = vmul.f32 %v1701, %v216
        %v1718 = vmul.f32 %v1701, %v217
        %v1719 = vmul.f32 %v1701, %v218
        %v1720 = vmul.f32 %v1701, %v219
        %v1721 = vmul.f32 %v1701, %v220
        %v1722 = vmul.f32 %v1701, %v221
        %v1723 = vmul.f32 %v1701, %v222
        %v1724 = vmul.f32 %v1701, %v223
        %v1725 = vmul.f32 %v1701, %v224
        %v1726 = vmul.f32 %v1701, %v225
        %v1727 = vmul.f32 %v1701, %v226
        %v1728 = vmul.f32 %v1701, %v227
        %v1729 = vmul.f32 %v1701, %v228
        %v1730 = vmul.f32 %v1701, %v229
        %v1731 = vmul.f32 %v1701, %v230
        %v1732 = vmul.f32 %v1701, %v231
        %v1733 = vmul.f32 %v1701, %v232
        %v1734 = vmul.f32 %v1701, %v233
        %v1735 = vmul.f32 %v1701, %v234
        %v1736 = vmul.f32 %v1701, %v235
        %v1737 = vmul.f32 %v1701, %v236
        %v1738 = vmul.f32 %v1701, %v237
        %v1739 = vmul.f32 %v1701, %v238
        %v1740 = vmul.f32 %v1701, %v239
        %v1741 = vmul.f32 %v1701, %v240
        %v1742 = vmul.f32 %v1701, %v241
        %v1743 = vmul.f32 %v1701, %v242
        %v1744 = vmul.f32 %v1701, %v243
        %v1745 = vmul.f32 %v1701, %v244
        %v1746 = vmul.f32 %v1701, %v245
        %v1747 = vmul.f32 %v1701, %v246
        %v1748 = vmul.f32 %v1701, %v247
        %v1749 = vmul.f32 %v1701, %v248
        %v1750 = vmul.f32 %v1701, %v249
        %v1751 = vmul.f32 %v1701, %v250
        %v1752 = vmul.f32 %v1701, %v251
        %v1753 = vmul.f32 %v1701, %v252
        %v1754 = vmul.f32 %v1701, %v253
        %v1755 = vmul.f32 %v1701, %v254
        %v1756 = vmul.f32 %v1701, %v255
        %v1757 = vmul.f32 %v1701, %v256
        %v1758 = vmul.f32 %v1701, %v257
        %v1759 = vmul.f32 %v1701, %v258
        %v1760 = vmul.f32 %v1701, %v259
        %v1761 = vmul.f32 %v1701, %v260
        %v1762 = vmul.f32 %v1701, %v261
        %v1763 = vmul.f32 %v1701, %v262
        %v1764 = vmul.f32 %v1701, %v263
        %v1765 = vmul.f32 %v1701, %v264
        %s1766 = sld [smem:[#allocation2 + $0x7]]
        %v1767 = vstv %s1766
        %v1768 = vmul.f32 %v1767, %v266
        %v1769 = vmul.f32 %v1767, %v267
        %v1770 = vmul.f32 %v1767, %v268
        %v1771 = vmul.f32 %v1767, %v269
        %v1772 = vmul.f32 %v1767, %v270
        %v1773 = vmul.f32 %v1767, %v271
        %v1774 = vmul.f32 %v1767, %v272
        %v1775 = vmul.f32 %v1767, %v273
        %v1776 = vmul.f32 %v1767, %v274
        %v1777 = vmul.f32 %v1767, %v275
        %v1778 = vmul.f32 %v1767, %v276
        %v1779 = vmul.f32 %v1767, %v277
        %v1780 = vmul.f32 %v1767, %v278
        %v1781 = vmul.f32 %v1767, %v279
        %v1782 = vmul.f32 %v1767, %v280
        %v1783 = vmul.f32 %v1767, %v281
        %v1784 = vmul.f32 %v1767, %v282
        %v1785 = vmul.f32 %v1767, %v283
        %v1786 = vmul.f32 %v1767, %v284
        %v1787 = vmul.f32 %v1767, %v285
        %v1788 = vmul.f32 %v1767, %v286
        %v1789 = vmul.f32 %v1767, %v287
        %v1790 = vmul.f32 %v1767, %v288
        %v1791 = vmul.f32 %v1767, %v289
        %v1792 = vmul.f32 %v1767, %v290
        %v1793 = vmul.f32 %v1767, %v291
        %v1794 = vmul.f32 %v1767, %v292
        %v1795 = vmul.f32 %v1767, %v293
        %v1796 = vmul.f32 %v1767, %v294
        %v1797 = vmul.f32 %v1767, %v295
        %v1798 = vmul.f32 %v1767, %v296
        %v1799 = vmul.f32 %v1767, %v297
        %v1800 = vmul.f32 %v1767, %v298
        %v1801 = vmul.f32 %v1767, %v299
        %v1802 = vmul.f32 %v1767, %v300
        %v1803 = vmul.f32 %v1767, %v301
        %v1804 = vmul.f32 %v1767, %v302
        %v1805 = vmul.f32 %v1767, %v303
        %v1806 = vmul.f32 %v1767, %v304
        %v1807 = vmul.f32 %v1767, %v305
        %v1808 = vmul.f32 %v1767, %v306
        %v1809 = vmul.f32 %v1767, %v307
        %v1810 = vmul.f32 %v1767, %v308
        %v1811 = vmul.f32 %v1767, %v309
        %v1812 = vmul.f32 %v1767, %v310
        %v1813 = vmul.f32 %v1767, %v311
        %v1814 = vmul.f32 %v1767, %v312
        %v1815 = vmul.f32 %v1767, %v313
        %v1816 = vmul.f32 %v1767, %v314
        %v1817 = vmul.f32 %v1767, %v315
        %v1818 = vmul.f32 %v1767, %v316
        %v1819 = vmul.f32 %v1767, %v317
        %v1820 = vmul.f32 %v1767, %v318
        %v1821 = vmul.f32 %v1767, %v319
        %v1822 = vmul.f32 %v1767, %v320
        %v1823 = vmul.f32 %v1767, %v321
        %v1824 = vmul.f32 %v1767, %v322
        %v1825 = vmul.f32 %v1767, %v323
        %v1826 = vmul.f32 %v1767, %v324
        %v1827 = vmul.f32 %v1767, %v325
        %v1828 = vmul.f32 %v1767, %v326
        %v1829 = vmul.f32 %v1767, %v327
        %v1830 = vmul.f32 %v1767, %v328
        %v1831 = vmul.f32 %v1767, %v329
        %v1832 = vadd.f32 %v1702, %v1768
        %v1833 = vadd.f32 %v1703, %v1769
        %v1834 = vadd.f32 %v1704, %v1770
        %v1835 = vadd.f32 %v1705, %v1771
        %v1836 = vadd.f32 %v1706, %v1772
        %v1837 = vadd.f32 %v1707, %v1773
        %v1838 = vadd.f32 %v1708, %v1774
        %v1839 = vadd.f32 %v1709, %v1775
        %v1840 = vadd.f32 %v1710, %v1776
        %v1841 = vadd.f32 %v1711, %v1777
        %v1842 = vadd.f32 %v1712, %v1778
        %v1843 = vadd.f32 %v1713, %v1779
        %v1844 = vadd.f32 %v1714, %v1780
        %v1845 = vadd.f32 %v1715, %v1781
        %v1846 = vadd.f32 %v1716, %v1782
        %v1847 = vadd.f32 %v1717, %v1783
        %v1848 = vadd.f32 %v1718, %v1784
        %v1849 = vadd.f32 %v1719, %v1785
        %v1850 = vadd.f32 %v1720, %v1786
        %v1851 = vadd.f32 %v1721, %v1787
        %v1852 = vadd.f32 %v1722, %v1788
        %v1853 = vadd.f32 %v1723, %v1789
        %v1854 = vadd.f32 %v1724, %v1790
        %v1855 = vadd.f32 %v1725, %v1791
        %v1856 = vadd.f32 %v1726, %v1792
        %v1857 = vadd.f32 %v1727, %v1793
        %v1858 = vadd.f32 %v1728, %v1794
        %v1859 = vadd.f32 %v1729, %v1795
        %v1860 = vadd.f32 %v1730, %v1796
        %v1861 = vadd.f32 %v1731, %v1797
        %v1862 = vadd.f32 %v1732, %v1798
        %v1863 = vadd.f32 %v1733, %v1799
        %v1864 = vadd.f32 %v1734, %v1800
        %v1865 = vadd.f32 %v1735, %v1801
        %v1866 = vadd.f32 %v1736, %v1802
        %v1867 = vadd.f32 %v1737, %v1803
        %v1868 = vadd.f32 %v1738, %v1804
        %v1869 = vadd.f32 %v1739, %v1805
        %v1870 = vadd.f32 %v1740, %v1806
        %v1871 = vadd.f32 %v1741, %v1807
        %v1872 = vadd.f32 %v1742, %v1808
        %v1873 = vadd.f32 %v1743, %v1809
        %v1874 = vadd.f32 %v1744, %v1810
        %v1875 = vadd.f32 %v1745, %v1811
        %v1876 = vadd.f32 %v1746, %v1812
        %v1877 = vadd.f32 %v1747, %v1813
        %v1878 = vadd.f32 %v1748, %v1814
        %v1879 = vadd.f32 %v1749, %v1815
        %v1880 = vadd.f32 %v1750, %v1816
        %v1881 = vadd.f32 %v1751, %v1817
        %v1882 = vadd.f32 %v1752, %v1818
        %v1883 = vadd.f32 %v1753, %v1819
        %v1884 = vadd.f32 %v1754, %v1820
        %v1885 = vadd.f32 %v1755, %v1821
        %v1886 = vadd.f32 %v1756, %v1822
        %v1887 = vadd.f32 %v1757, %v1823
        %v1888 = vadd.f32 %v1758, %v1824
        %v1889 = vadd.f32 %v1759, %v1825
        %v1890 = vadd.f32 %v1760, %v1826
        %v1891 = vadd.f32 %v1761, %v1827
        %v1892 = vadd.f32 %v1762, %v1828
        %v1893 = vadd.f32 %v1763, %v1829
        %v1894 = vadd.f32 %v1764, %v1830
        %v1895 = vadd.f32 %v1765, %v1831
        %s1896 = sld [smem:[#allocation2 + $0x13]]
        %v1897 = vstv %s1896
        %v1898 = vadd.f32 %v1832, %v1897
        %v1899 = vadd.f32 %v1833, %v1897
        %v1900 = vadd.f32 %v1834, %v1897
        %v1901 = vadd.f32 %v1835, %v1897
        %v1902 = vadd.f32 %v1836, %v1897
        %v1903 = vadd.f32 %v1837, %v1897
        %v1904 = vadd.f32 %v1838, %v1897
        %v1905 = vadd.f32 %v1839, %v1897
        %v1906 = vadd.f32 %v1840, %v1897
        %v1907 = vadd.f32 %v1841, %v1897
        %v1908 = vadd.f32 %v1842, %v1897
        %v1909 = vadd.f32 %v1843, %v1897
        %v1910 = vadd.f32 %v1844, %v1897
        %v1911 = vadd.f32 %v1845, %v1897
        %v1912 = vadd.f32 %v1846, %v1897
        %v1913 = vadd.f32 %v1847, %v1897
        %v1914 = vadd.f32 %v1848, %v1897
        %v1915 = vadd.f32 %v1849, %v1897
        %v1916 = vadd.f32 %v1850, %v1897
        %v1917 = vadd.f32 %v1851, %v1897
        %v1918 = vadd.f32 %v1852, %v1897
        %v1919 = vadd.f32 %v1853, %v1897
        %v1920 = vadd.f32 %v1854, %v1897
        %v1921 = vadd.f32 %v1855, %v1897
        %v1922 = vadd.f32 %v1856, %v1897
        %v1923 = vadd.f32 %v1857, %v1897
        %v1924 = vadd.f32 %v1858, %v1897
        %v1925 = vadd.f32 %v1859, %v1897
        %v1926 = vadd.f32 %v1860, %v1897
        %v1927 = vadd.f32 %v1861, %v1897
        %v1928 = vadd.f32 %v1862, %v1897
        %v1929 = vadd.f32 %v1863, %v1897
        %v1930 = vadd.f32 %v1864, %v1897
        %v1931 = vadd.f32 %v1865, %v1897
        %v1932 = vadd.f32 %v1866, %v1897
        %v1933 = vadd.f32 %v1867, %v1897
        %v1934 = vadd.f32 %v1868, %v1897
        %v1935 = vadd.f32 %v1869, %v1897
        %v1936 = vadd.f32 %v1870, %v1897
        %v1937 = vadd.f32 %v1871, %v1897
        %v1938 = vadd.f32 %v1872, %v1897
        %v1939 = vadd.f32 %v1873, %v1897
        %v1940 = vadd.f32 %v1874, %v1897
        %v1941 = vadd.f32 %v1875, %v1897
        %v1942 = vadd.f32 %v1876, %v1897
        %v1943 = vadd.f32 %v1877, %v1897
        %v1944 = vadd.f32 %v1878, %v1897
        %v1945 = vadd.f32 %v1879, %v1897
        %v1946 = vadd.f32 %v1880, %v1897
        %v1947 = vadd.f32 %v1881, %v1897
        %v1948 = vadd.f32 %v1882, %v1897
        %v1949 = vadd.f32 %v1883, %v1897
        %v1950 = vadd.f32 %v1884, %v1897
        %v1951 = vadd.f32 %v1885, %v1897
        %v1952 = vadd.f32 %v1886, %v1897
        %v1953 = vadd.f32 %v1887, %v1897
        %v1954 = vadd.f32 %v1888, %v1897
        %v1955 = vadd.f32 %v1889, %v1897
        %v1956 = vadd.f32 %v1890, %v1897
        %v1957 = vadd.f32 %v1891, %v1897
        %v1958 = vadd.f32 %v1892, %v1897
        %v1959 = vadd.f32 %v1893, %v1897
        %v1960 = vadd.f32 %v1894, %v1897
        %v1961 = vadd.f32 %v1895, %v1897
        %v1962 = vtanh.pop %v1898
        %v1963 = vtanh.pop %v1899
        %v1964 = vtanh.pop %v1900
        %v1965 = vtanh.pop %v1901
        %v1966 = vtanh.pop %v1902
        %v1967 = vtanh.pop %v1903
        %v1968 = vtanh.pop %v1904
        %v1969 = vtanh.pop %v1905
        %v1970 = vtanh.pop %v1906
        %v1971 = vtanh.pop %v1907
        %v1972 = vtanh.pop %v1908
        %v1973 = vtanh.pop %v1909
        %v1974 = vtanh.pop %v1910
        %v1975 = vtanh.pop %v1911
        %v1976 = vtanh.pop %v1912
        %v1977 = vtanh.pop %v1913
        %v1978 = vtanh.pop %v1914
        %v1979 = vtanh.pop %v1915
        %v1980 = vtanh.pop %v1916
        %v1981 = vtanh.pop %v1917
        %v1982 = vtanh.pop %v1918
        %v1983 = vtanh.pop %v1919
        %v1984 = vtanh.pop %v1920
        %v1985 = vtanh.pop %v1921
        %v1986 = vtanh.pop %v1922
        %v1987 = vtanh.pop %v1923
        %v1988 = vtanh.pop %v1924
        %v1989 = vtanh.pop %v1925
        %v1990 = vtanh.pop %v1926
        %v1991 = vtanh.pop %v1927
        %v1992 = vtanh.pop %v1928
        %v1993 = vtanh.pop %v1929
        %v1994 = vtanh.pop %v1930
        %v1995 = vtanh.pop %v1931
        %v1996 = vtanh.pop %v1932
        %v1997 = vtanh.pop %v1933
        %v1998 = vtanh.pop %v1934
        %v1999 = vtanh.pop %v1935
        %v2000 = vtanh.pop %v1936
        %v2001 = vtanh.pop %v1937
        %v2002 = vtanh.pop %v1938
        %v2003 = vtanh.pop %v1939
        %v2004 = vtanh.pop %v1940
        %v2005 = vtanh.pop %v1941
        %v2006 = vtanh.pop %v1942
        %v2007 = vtanh.pop %v1943
        %v2008 = vtanh.pop %v1944
        %v2009 = vtanh.pop %v1945
        %v2010 = vtanh.pop %v1946
        %v2011 = vtanh.pop %v1947
        %v2012 = vtanh.pop %v1948
        %v2013 = vtanh.pop %v1949
        %v2014 = vtanh.pop %v1950
        %v2015 = vtanh.pop %v1951
        %v2016 = vtanh.pop %v1952
        %v2017 = vtanh.pop %v1953
        %v2018 = vtanh.pop %v1954
        %v2019 = vtanh.pop %v1955
        %v2020 = vtanh.pop %v1956
        %v2021 = vtanh.pop %v1957
        %v2022 = vtanh.pop %v1958
        %v2023 = vtanh.pop %v1959
        %v2024 = vtanh.pop %v1960
        %v2025 = vtanh.pop %v1961
        %s2026 = sld [smem:[#allocation2 + $0x1b]]
        %v2027 = vstv %s2026
        %v2028 = vmul.f32 %v2027, %v1962
        %v2029 = vmul.f32 %v2027, %v1963
        %v2030 = vmul.f32 %v2027, %v1964
        %v2031 = vmul.f32 %v2027, %v1965
        %v2032 = vmul.f32 %v2027, %v1966
        %v2033 = vmul.f32 %v2027, %v1967
        %v2034 = vmul.f32 %v2027, %v1968
        %v2035 = vmul.f32 %v2027, %v1969
        %v2036 = vmul.f32 %v2027, %v1970
        %v2037 = vmul.f32 %v2027, %v1971
        %v2038 = vmul.f32 %v2027, %v1972
        %v2039 = vmul.f32 %v2027, %v1973
        %v2040 = vmul.f32 %v2027, %v1974
        %v2041 = vmul.f32 %v2027, %v1975
        %v2042 = vmul.f32 %v2027, %v1976
        %v2043 = vmul.f32 %v2027, %v1977
        %v2044 = vmul.f32 %v2027, %v1978
        %v2045 = vmul.f32 %v2027, %v1979
        %v2046 = vmul.f32 %v2027, %v1980
        %v2047 = vmul.f32 %v2027, %v1981
        %v2048 = vmul.f32 %v2027, %v1982
        %v2049 = vmul.f32 %v2027, %v1983
        %v2050 = vmul.f32 %v2027, %v1984
        %v2051 = vmul.f32 %v2027, %v1985
        %v2052 = vmul.f32 %v2027, %v1986
        %v2053 = vmul.f32 %v2027, %v1987
        %v2054 = vmul.f32 %v2027, %v1988
        %v2055 = vmul.f32 %v2027, %v1989
        %v2056 = vmul.f32 %v2027, %v1990
        %v2057 = vmul.f32 %v2027, %v1991
        %v2058 = vmul.f32 %v2027, %v1992
        %v2059 = vmul.f32 %v2027, %v1993
        %v2060 = vmul.f32 %v2027, %v1994
        %v2061 = vmul.f32 %v2027, %v1995
        %v2062 = vmul.f32 %v2027, %v1996
        %v2063 = vmul.f32 %v2027, %v1997
        %v2064 = vmul.f32 %v2027, %v1998
        %v2065 = vmul.f32 %v2027, %v1999
        %v2066 = vmul.f32 %v2027, %v2000
        %v2067 = vmul.f32 %v2027, %v2001
        %v2068 = vmul.f32 %v2027, %v2002
        %v2069 = vmul.f32 %v2027, %v2003
        %v2070 = vmul.f32 %v2027, %v2004
        %v2071 = vmul.f32 %v2027, %v2005
        %v2072 = vmul.f32 %v2027, %v2006
        %v2073 = vmul.f32 %v2027, %v2007
        %v2074 = vmul.f32 %v2027, %v2008
        %v2075 = vmul.f32 %v2027, %v2009
        %v2076 = vmul.f32 %v2027, %v2010
        %v2077 = vmul.f32 %v2027, %v2011
        %v2078 = vmul.f32 %v2027, %v2012
        %v2079 = vmul.f32 %v2027, %v2013
        %v2080 = vmul.f32 %v2027, %v2014
        %v2081 = vmul.f32 %v2027, %v2015
        %v2082 = vmul.f32 %v2027, %v2016
        %v2083 = vmul.f32 %v2027, %v2017
        %v2084 = vmul.f32 %v2027, %v2018
        %v2085 = vmul.f32 %v2027, %v2019
        %v2086 = vmul.f32 %v2027, %v2020
        %v2087 = vmul.f32 %v2027, %v2021
        %v2088 = vmul.f32 %v2027, %v2022
        %v2089 = vmul.f32 %v2027, %v2023
        %v2090 = vmul.f32 %v2027, %v2024
        %v2091 = vmul.f32 %v2027, %v2025
        %v2092 = vadd.f32 %v1636, %v2028
        %v2093 = vadd.f32 %v1637, %v2029
        %v2094 = vadd.f32 %v1638, %v2030
        %v2095 = vadd.f32 %v1639, %v2031
        %v2096 = vadd.f32 %v1640, %v2032
        %v2097 = vadd.f32 %v1641, %v2033
        %v2098 = vadd.f32 %v1642, %v2034
        %v2099 = vadd.f32 %v1643, %v2035
        %v2100 = vadd.f32 %v1644, %v2036
        %v2101 = vadd.f32 %v1645, %v2037
        %v2102 = vadd.f32 %v1646, %v2038
        %v2103 = vadd.f32 %v1647, %v2039
        %v2104 = vadd.f32 %v1648, %v2040
        %v2105 = vadd.f32 %v1649, %v2041
        %v2106 = vadd.f32 %v1650, %v2042
        %v2107 = vadd.f32 %v1651, %v2043
        %v2108 = vadd.f32 %v1652, %v2044
        %v2109 = vadd.f32 %v1653, %v2045
        %v2110 = vadd.f32 %v1654, %v2046
        %v2111 = vadd.f32 %v1655, %v2047
        %v2112 = vadd.f32 %v1656, %v2048
        %v2113 = vadd.f32 %v1657, %v2049
        %v2114 = vadd.f32 %v1658, %v2050
        %v2115 = vadd.f32 %v1659, %v2051
        %v2116 = vadd.f32 %v1660, %v2052
        %v2117 = vadd.f32 %v1661, %v2053
        %v2118 = vadd.f32 %v1662, %v2054
        %v2119 = vadd.f32 %v1663, %v2055
        %v2120 = vadd.f32 %v1664, %v2056
        %v2121 = vadd.f32 %v1665, %v2057
        %v2122 = vadd.f32 %v1666, %v2058
        %v2123 = vadd.f32 %v1667, %v2059
        %v2124 = vadd.f32 %v1668, %v2060
        %v2125 = vadd.f32 %v1669, %v2061
        %v2126 = vadd.f32 %v1670, %v2062
        %v2127 = vadd.f32 %v1671, %v2063
        %v2128 = vadd.f32 %v1672, %v2064
        %v2129 = vadd.f32 %v1673, %v2065
        %v2130 = vadd.f32 %v1674, %v2066
        %v2131 = vadd.f32 %v1675, %v2067
        %v2132 = vadd.f32 %v1676, %v2068
        %v2133 = vadd.f32 %v1677, %v2069
        %v2134 = vadd.f32 %v1678, %v2070
        %v2135 = vadd.f32 %v1679, %v2071
        %v2136 = vadd.f32 %v1680, %v2072
        %v2137 = vadd.f32 %v1681, %v2073
        %v2138 = vadd.f32 %v1682, %v2074
        %v2139 = vadd.f32 %v1683, %v2075
        %v2140 = vadd.f32 %v1684, %v2076
        %v2141 = vadd.f32 %v1685, %v2077
        %v2142 = vadd.f32 %v1686, %v2078
        %v2143 = vadd.f32 %v1687, %v2079
        %v2144 = vadd.f32 %v1688, %v2080
        %v2145 = vadd.f32 %v1689, %v2081
        %v2146 = vadd.f32 %v1690, %v2082
        %v2147 = vadd.f32 %v1691, %v2083
        %v2148 = vadd.f32 %v1692, %v2084
        %v2149 = vadd.f32 %v1693, %v2085
        %v2150 = vadd.f32 %v1694, %v2086
        %v2151 = vadd.f32 %v1695, %v2087
        %v2152 = vadd.f32 %v1696, %v2088
        %v2153 = vadd.f32 %v1697, %v2089
        %v2154 = vadd.f32 %v1698, %v2090
        %v2155 = vadd.f32 %v1699, %v2091
        %s2156 = sld [smem:[#allocation2 + $0x8]]
        %v2157 = vstv %s2156
        %v2158 = vmul.f32 %v2157, %v201
        %v2159 = vmul.f32 %v2157, %v202
        %v2160 = vmul.f32 %v2157, %v203
        %v2161 = vmul.f32 %v2157, %v204
        %v2162 = vmul.f32 %v2157, %v205
        %v2163 = vmul.f32 %v2157, %v206
        %v2164 = vmul.f32 %v2157, %v207
        %v2165 = vmul.f32 %v2157, %v208
        %v2166 = vmul.f32 %v2157, %v209
        %v2167 = vmul.f32 %v2157, %v210
        %v2168 = vmul.f32 %v2157, %v211
        %v2169 = vmul.f32 %v2157, %v212
        %v2170 = vmul.f32 %v2157, %v213
        %v2171 = vmul.f32 %v2157, %v214
        %v2172 = vmul.f32 %v2157, %v215
        %v2173 = vmul.f32 %v2157, %v216
        %v2174 = vmul.f32 %v2157, %v217
        %v2175 = vmul.f32 %v2157, %v218
        %v2176 = vmul.f32 %v2157, %v219
        %v2177 = vmul.f32 %v2157, %v220
        %v2178 = vmul.f32 %v2157, %v221
        %v2179 = vmul.f32 %v2157, %v222
        %v2180 = vmul.f32 %v2157, %v223
        %v2181 = vmul.f32 %v2157, %v224
        %v2182 = vmul.f32 %v2157, %v225
        %v2183 = vmul.f32 %v2157, %v226
        %v2184 = vmul.f32 %v2157, %v227
        %v2185 = vmul.f32 %v2157, %v228
        %v2186 = vmul.f32 %v2157, %v229
        %v2187 = vmul.f32 %v2157, %v230
        %v2188 = vmul.f32 %v2157, %v231
        %v2189 = vmul.f32 %v2157, %v232
        %v2190 = vmul.f32 %v2157, %v233
        %v2191 = vmul.f32 %v2157, %v234
        %v2192 = vmul.f32 %v2157, %v235
        %v2193 = vmul.f32 %v2157, %v236
        %v2194 = vmul.f32 %v2157, %v237
        %v2195 = vmul.f32 %v2157, %v238
        %v2196 = vmul.f32 %v2157, %v239
        %v2197 = vmul.f32 %v2157, %v240
        %v2198 = vmul.f32 %v2157, %v241
        %v2199 = vmul.f32 %v2157, %v242
        %v2200 = vmul.f32 %v2157, %v243
        %v2201 = vmul.f32 %v2157, %v244
        %v2202 = vmul.f32 %v2157, %v245
        %v2203 = vmul.f32 %v2157, %v246
        %v2204 = vmul.f32 %v2157, %v247
        %v2205 = vmul.f32 %v2157, %v248
        %v2206 = vmul.f32 %v2157, %v249
        %v2207 = vmul.f32 %v2157, %v250
        %v2208 = vmul.f32 %v2157, %v251
        %v2209 = vmul.f32 %v2157, %v252
        %v2210 = vmul.f32 %v2157, %v253
        %v2211 = vmul.f32 %v2157, %v254
        %v2212 = vmul.f32 %v2157, %v255
        %v2213 = vmul.f32 %v2157, %v256
        %v2214 = vmul.f32 %v2157, %v257
        %v2215 = vmul.f32 %v2157, %v258
        %v2216 = vmul.f32 %v2157, %v259
        %v2217 = vmul.f32 %v2157, %v260
        %v2218 = vmul.f32 %v2157, %v261
        %v2219 = vmul.f32 %v2157, %v262
        %v2220 = vmul.f32 %v2157, %v263
        %v2221 = vmul.f32 %v2157, %v264
        %s2222 = sld [smem:[#allocation2 + $0x9]]
        %v2223 = vstv %s2222
        %v2224 = vmul.f32 %v2223, %v266
        %v2225 = vmul.f32 %v2223, %v267
        %v2226 = vmul.f32 %v2223, %v268
        %v2227 = vmul.f32 %v2223, %v269
        %v2228 = vmul.f32 %v2223, %v270
        %v2229 = vmul.f32 %v2223, %v271
        %v2230 = vmul.f32 %v2223, %v272
        %v2231 = vmul.f32 %v2223, %v273
        %v2232 = vmul.f32 %v2223, %v274
        %v2233 = vmul.f32 %v2223, %v275
        %v2234 = vmul.f32 %v2223, %v276
        %v2235 = vmul.f32 %v2223, %v277
        %v2236 = vmul.f32 %v2223, %v278
        %v2237 = vmul.f32 %v2223, %v279
        %v2238 = vmul.f32 %v2223, %v280
        %v2239 = vmul.f32 %v2223, %v281
        %v2240 = vmul.f32 %v2223, %v282
        %v2241 = vmul.f32 %v2223, %v283
        %v2242 = vmul.f32 %v2223, %v284
        %v2243 = vmul.f32 %v2223, %v285
        %v2244 = vmul.f32 %v2223, %v286
        %v2245 = vmul.f32 %v2223, %v287
        %v2246 = vmul.f32 %v2223, %v288
        %v2247 = vmul.f32 %v2223, %v289
        %v2248 = vmul.f32 %v2223, %v290
        %v2249 = vmul.f32 %v2223, %v291
        %v2250 = vmul.f32 %v2223, %v292
        %v2251 = vmul.f32 %v2223, %v293
        %v2252 = vmul.f32 %v2223, %v294
        %v2253 = vmul.f32 %v2223, %v295
        %v2254 = vmul.f32 %v2223, %v296
        %v2255 = vmul.f32 %v2223, %v297
        %v2256 = vmul.f32 %v2223, %v298
        %v2257 = vmul.f32 %v2223, %v299
        %v2258 = vmul.f32 %v2223, %v300
        %v2259 = vmul.f32 %v2223, %v301
        %v2260 = vmul.f32 %v2223, %v302
        %v2261 = vmul.f32 %v2223, %v303
        %v2262 = vmul.f32 %v2223, %v304
        %v2263 = vmul.f32 %v2223, %v305
        %v2264 = vmul.f32 %v2223, %v306
        %v2265 = vmul.f32 %v2223, %v307
        %v2266 = vmul.f32 %v2223, %v308
        %v2267 = vmul.f32 %v2223, %v309
        %v2268 = vmul.f32 %v2223, %v310
        %v2269 = vmul.f32 %v2223, %v311
        %v2270 = vmul.f32 %v2223, %v312
        %v2271 = vmul.f32 %v2223, %v313
        %v2272 = vmul.f32 %v2223, %v314
        %v2273 = vmul.f32 %v2223, %v315
        %v2274 = vmul.f32 %v2223, %v316
        %v2275 = vmul.f32 %v2223, %v317
        %v2276 = vmul.f32 %v2223, %v318
        %v2277 = vmul.f32 %v2223, %v319
        %v2278 = vmul.f32 %v2223, %v320
        %v2279 = vmul.f32 %v2223, %v321
        %v2280 = vmul.f32 %v2223, %v322
        %v2281 = vmul.f32 %v2223, %v323
        %v2282 = vmul.f32 %v2223, %v324
        %v2283 = vmul.f32 %v2223, %v325
        %v2284 = vmul.f32 %v2223, %v326
        %v2285 = vmul.f32 %v2223, %v327
        %v2286 = vmul.f32 %v2223, %v328
        %v2287 = vmul.f32 %v2223, %v329
        %v2288 = vadd.f32 %v2158, %v2224
        %v2289 = vadd.f32 %v2159, %v2225
        %v2290 = vadd.f32 %v2160, %v2226
        %v2291 = vadd.f32 %v2161, %v2227
        %v2292 = vadd.f32 %v2162, %v2228
        %v2293 = vadd.f32 %v2163, %v2229
        %v2294 = vadd.f32 %v2164, %v2230
        %v2295 = vadd.f32 %v2165, %v2231
        %v2296 = vadd.f32 %v2166, %v2232
        %v2297 = vadd.f32 %v2167, %v2233
        %v2298 = vadd.f32 %v2168, %v2234
        %v2299 = vadd.f32 %v2169, %v2235
        %v2300 = vadd.f32 %v2170, %v2236
        %v2301 = vadd.f32 %v2171, %v2237
        %v2302 = vadd.f32 %v2172, %v2238
        %v2303 = vadd.f32 %v2173, %v2239
        %v2304 = vadd.f32 %v2174, %v2240
        %v2305 = vadd.f32 %v2175, %v2241
        %v2306 = vadd.f32 %v2176, %v2242
        %v2307 = vadd.f32 %v2177, %v2243
        %v2308 = vadd.f32 %v2178, %v2244
        %v2309 = vadd.f32 %v2179, %v2245
        %v2310 = vadd.f32 %v2180, %v2246
        %v2311 = vadd.f32 %v2181, %v2247
        %v2312 = vadd.f32 %v2182, %v2248
        %v2313 = vadd.f32 %v2183, %v2249
        %v2314 = vadd.f32 %v2184, %v2250
        %v2315 = vadd.f32 %v2185, %v2251
        %v2316 = vadd.f32 %v2186, %v2252
        %v2317 = vadd.f32 %v2187, %v2253
        %v2318 = vadd.f32 %v2188, %v2254
        %v2319 = vadd.f32 %v2189, %v2255
        %v2320 = vadd.f32 %v2190, %v2256
        %v2321 = vadd.f32 %v2191, %v2257
        %v2322 = vadd.f32 %v2192, %v2258
        %v2323 = vadd.f32 %v2193, %v2259
        %v2324 = vadd.f32 %v2194, %v2260
        %v2325 = vadd.f32 %v2195, %v2261
        %v2326 = vadd.f32 %v2196, %v2262
        %v2327 = vadd.f32 %v2197, %v2263
        %v2328 = vadd.f32 %v2198, %v2264
        %v2329 = vadd.f32 %v2199, %v2265
        %v2330 = vadd.f32 %v2200, %v2266
        %v2331 = vadd.f32 %v2201, %v2267
        %v2332 = vadd.f32 %v2202, %v2268
        %v2333 = vadd.f32 %v2203, %v2269
        %v2334 = vadd.f32 %v2204, %v2270
        %v2335 = vadd.f32 %v2205, %v2271
        %v2336 = vadd.f32 %v2206, %v2272
        %v2337 = vadd.f32 %v2207, %v2273
        %v2338 = vadd.f32 %v2208, %v2274
        %v2339 = vadd.f32 %v2209, %v2275
        %v2340 = vadd.f32 %v2210, %v2276
        %v2341 = vadd.f32 %v2211, %v2277
        %v2342 = vadd.f32 %v2212, %v2278
        %v2343 = vadd.f32 %v2213, %v2279
        %v2344 = vadd.f32 %v2214, %v2280
        %v2345 = vadd.f32 %v2215, %v2281
        %v2346 = vadd.f32 %v2216, %v2282
        %v2347 = vadd.f32 %v2217, %v2283
        %v2348 = vadd.f32 %v2218, %v2284
        %v2349 = vadd.f32 %v2219, %v2285
        %v2350 = vadd.f32 %v2220, %v2286
        %v2351 = vadd.f32 %v2221, %v2287
        %s2352 = sld [smem:[#allocation2 + $0x14]]
        %v2353 = vstv %s2352
        %v2354 = vadd.f32 %v2288, %v2353
        %v2355 = vadd.f32 %v2289, %v2353
        %v2356 = vadd.f32 %v2290, %v2353
        %v2357 = vadd.f32 %v2291, %v2353
        %v2358 = vadd.f32 %v2292, %v2353
        %v2359 = vadd.f32 %v2293, %v2353
        %v2360 = vadd.f32 %v2294, %v2353
        %v2361 = vadd.f32 %v2295, %v2353
        %v2362 = vadd.f32 %v2296, %v2353
        %v2363 = vadd.f32 %v2297, %v2353
        %v2364 = vadd.f32 %v2298, %v2353
        %v2365 = vadd.f32 %v2299, %v2353
        %v2366 = vadd.f32 %v2300, %v2353
        %v2367 = vadd.f32 %v2301, %v2353
        %v2368 = vadd.f32 %v2302, %v2353
        %v2369 = vadd.f32 %v2303, %v2353
        %v2370 = vadd.f32 %v2304, %v2353
        %v2371 = vadd.f32 %v2305, %v2353
        %v2372 = vadd.f32 %v2306, %v2353
        %v2373 = vadd.f32 %v2307, %v2353
        %v2374 = vadd.f32 %v2308, %v2353
        %v2375 = vadd.f32 %v2309, %v2353
        %v2376 = vadd.f32 %v2310, %v2353
        %v2377 = vadd.f32 %v2311, %v2353
        %v2378 = vadd.f32 %v2312, %v2353
        %v2379 = vadd.f32 %v2313, %v2353
        %v2380 = vadd.f32 %v2314, %v2353
        %v2381 = vadd.f32 %v2315, %v2353
        %v2382 = vadd.f32 %v2316, %v2353
        %v2383 = vadd.f32 %v2317, %v2353
        %v2384 = vadd.f32 %v2318, %v2353
        %v2385 = vadd.f32 %v2319, %v2353
        %v2386 = vadd.f32 %v2320, %v2353
        %v2387 = vadd.f32 %v2321, %v2353
        %v2388 = vadd.f32 %v2322, %v2353
        %v2389 = vadd.f32 %v2323, %v2353
        %v2390 = vadd.f32 %v2324, %v2353
        %v2391 = vadd.f32 %v2325, %v2353
        %v2392 = vadd.f32 %v2326, %v2353
        %v2393 = vadd.f32 %v2327, %v2353
        %v2394 = vadd.f32 %v2328, %v2353
        %v2395 = vadd.f32 %v2329, %v2353
        %v2396 = vadd.f32 %v2330, %v2353
        %v2397 = vadd.f32 %v2331, %v2353
        %v2398 = vadd.f32 %v2332, %v2353
        %v2399 = vadd.f32 %v2333, %v2353
        %v2400 = vadd.f32 %v2334, %v2353
        %v2401 = vadd.f32 %v2335, %v2353
        %v2402 = vadd.f32 %v2336, %v2353
        %v2403 = vadd.f32 %v2337, %v2353
        %v2404 = vadd.f32 %v2338, %v2353
        %v2405 = vadd.f32 %v2339, %v2353
        %v2406 = vadd.f32 %v2340, %v2353
        %v2407 = vadd.f32 %v2341, %v2353
        %v2408 = vadd.f32 %v2342, %v2353
        %v2409 = vadd.f32 %v2343, %v2353
        %v2410 = vadd.f32 %v2344, %v2353
        %v2411 = vadd.f32 %v2345, %v2353
        %v2412 = vadd.f32 %v2346, %v2353
        %v2413 = vadd.f32 %v2347, %v2353
        %v2414 = vadd.f32 %v2348, %v2353
        %v2415 = vadd.f32 %v2349, %v2353
        %v2416 = vadd.f32 %v2350, %v2353
        %v2417 = vadd.f32 %v2351, %v2353
        %v2418 = vtanh.pop %v2354
        %v2419 = vtanh.pop %v2355
        %v2420 = vtanh.pop %v2356
        %v2421 = vtanh.pop %v2357
        %v2422 = vtanh.pop %v2358
        %v2423 = vtanh.pop %v2359
        %v2424 = vtanh.pop %v2360
        %v2425 = vtanh.pop %v2361
        %v2426 = vtanh.pop %v2362
        %v2427 = vtanh.pop %v2363
        %v2428 = vtanh.pop %v2364
        %v2429 = vtanh.pop %v2365
        %v2430 = vtanh.pop %v2366
        %v2431 = vtanh.pop %v2367
        %v2432 = vtanh.pop %v2368
        %v2433 = vtanh.pop %v2369
        %v2434 = vtanh.pop %v2370
        %v2435 = vtanh.pop %v2371
        %v2436 = vtanh.pop %v2372
        %v2437 = vtanh.pop %v2373
        %v2438 = vtanh.pop %v2374
        %v2439 = vtanh.pop %v2375
        %v2440 = vtanh.pop %v2376
        %v2441 = vtanh.pop %v2377
        %v2442 = vtanh.pop %v2378
        %v2443 = vtanh.pop %v2379
        %v2444 = vtanh.pop %v2380
        %v2445 = vtanh.pop %v2381
        %v2446 = vtanh.pop %v2382
        %v2447 = vtanh.pop %v2383
        %v2448 = vtanh.pop %v2384
        %v2449 = vtanh.pop %v2385
        %v2450 = vtanh.pop %v2386
        %v2451 = vtanh.pop %v2387
        %v2452 = vtanh.pop %v2388
        %v2453 = vtanh.pop %v2389
        %v2454 = vtanh.pop %v2390
        %v2455 = vtanh.pop %v2391
        %v2456 = vtanh.pop %v2392
        %v2457 = vtanh.pop %v2393
        %v2458 = vtanh.pop %v2394
        %v2459 = vtanh.pop %v2395
        %v2460 = vtanh.pop %v2396
        %v2461 = vtanh.pop %v2397
        %v2462 = vtanh.pop %v2398
        %v2463 = vtanh.pop %v2399
        %v2464 = vtanh.pop %v2400
        %v2465 = vtanh.pop %v2401
        %v2466 = vtanh.pop %v2402
        %v2467 = vtanh.pop %v2403
        %v2468 = vtanh.pop %v2404
        %v2469 = vtanh.pop %v2405
        %v2470 = vtanh.pop %v2406
        %v2471 = vtanh.pop %v2407
        %v2472 = vtanh.pop %v2408
        %v2473 = vtanh.pop %v2409
        %v2474 = vtanh.pop %v2410
        %v2475 = vtanh.pop %v2411
        %v2476 = vtanh.pop %v2412
        %v2477 = vtanh.pop %v2413
        %v2478 = vtanh.pop %v2414
        %v2479 = vtanh.pop %v2415
        %v2480 = vtanh.pop %v2416
        %v2481 = vtanh.pop %v2417
        %s2482 = sld [smem:[#allocation2 + $0x1c]]
        %v2483 = vstv %s2482
        %v2484 = vmul.f32 %v2483, %v2418
        %v2485 = vmul.f32 %v2483, %v2419
        %v2486 = vmul.f32 %v2483, %v2420
        %v2487 = vmul.f32 %v2483, %v2421
        %v2488 = vmul.f32 %v2483, %v2422
        %v2489 = vmul.f32 %v2483, %v2423
        %v2490 = vmul.f32 %v2483, %v2424
        %v2491 = vmul.f32 %v2483, %v2425
        %v2492 = vmul.f32 %v2483, %v2426
        %v2493 = vmul.f32 %v2483, %v2427
        %v2494 = vmul.f32 %v2483, %v2428
        %v2495 = vmul.f32 %v2483, %v2429
        %v2496 = vmul.f32 %v2483, %v2430
        %v2497 = vmul.f32 %v2483, %v2431
        %v2498 = vmul.f32 %v2483, %v2432
        %v2499 = vmul.f32 %v2483, %v2433
        %v2500 = vmul.f32 %v2483, %v2434
        %v2501 = vmul.f32 %v2483, %v2435
        %v2502 = vmul.f32 %v2483, %v2436
        %v2503 = vmul.f32 %v2483, %v2437
        %v2504 = vmul.f32 %v2483, %v2438
        %v2505 = vmul.f32 %v2483, %v2439
        %v2506 = vmul.f32 %v2483, %v2440
        %v2507 = vmul.f32 %v2483, %v2441
        %v2508 = vmul.f32 %v2483, %v2442
        %v2509 = vmul.f32 %v2483, %v2443
        %v2510 = vmul.f32 %v2483, %v2444
        %v2511 = vmul.f32 %v2483, %v2445
        %v2512 = vmul.f32 %v2483, %v2446
        %v2513 = vmul.f32 %v2483, %v2447
        %v2514 = vmul.f32 %v2483, %v2448
        %v2515 = vmul.f32 %v2483, %v2449
        %v2516 = vmul.f32 %v2483, %v2450
        %v2517 = vmul.f32 %v2483, %v2451
        %v2518 = vmul.f32 %v2483, %v2452
        %v2519 = vmul.f32 %v2483, %v2453
        %v2520 = vmul.f32 %v2483, %v2454
        %v2521 = vmul.f32 %v2483, %v2455
        %v2522 = vmul.f32 %v2483, %v2456
        %v2523 = vmul.f32 %v2483, %v2457
        %v2524 = vmul.f32 %v2483, %v2458
        %v2525 = vmul.f32 %v2483, %v2459
        %v2526 = vmul.f32 %v2483, %v2460
        %v2527 = vmul.f32 %v2483, %v2461
        %v2528 = vmul.f32 %v2483, %v2462
        %v2529 = vmul.f32 %v2483, %v2463
        %v2530 = vmul.f32 %v2483, %v2464
        %v2531 = vmul.f32 %v2483, %v2465
        %v2532 = vmul.f32 %v2483, %v2466
        %v2533 = vmul.f32 %v2483, %v2467
        %v2534 = vmul.f32 %v2483, %v2468
        %v2535 = vmul.f32 %v2483, %v2469
        %v2536 = vmul.f32 %v2483, %v2470
        %v2537 = vmul.f32 %v2483, %v2471
        %v2538 = vmul.f32 %v2483, %v2472
        %v2539 = vmul.f32 %v2483, %v2473
        %v2540 = vmul.f32 %v2483, %v2474
        %v2541 = vmul.f32 %v2483, %v2475
        %v2542 = vmul.f32 %v2483, %v2476
        %v2543 = vmul.f32 %v2483, %v2477
        %v2544 = vmul.f32 %v2483, %v2478
        %v2545 = vmul.f32 %v2483, %v2479
        %v2546 = vmul.f32 %v2483, %v2480
        %v2547 = vmul.f32 %v2483, %v2481
        %v2548 = vadd.f32 %v2092, %v2484
        %v2549 = vadd.f32 %v2093, %v2485
        %v2550 = vadd.f32 %v2094, %v2486
        %v2551 = vadd.f32 %v2095, %v2487
        %v2552 = vadd.f32 %v2096, %v2488
        %v2553 = vadd.f32 %v2097, %v2489
        %v2554 = vadd.f32 %v2098, %v2490
        %v2555 = vadd.f32 %v2099, %v2491
        %v2556 = vadd.f32 %v2100, %v2492
        %v2557 = vadd.f32 %v2101, %v2493
        %v2558 = vadd.f32 %v2102, %v2494
        %v2559 = vadd.f32 %v2103, %v2495
        %v2560 = vadd.f32 %v2104, %v2496
        %v2561 = vadd.f32 %v2105, %v2497
        %v2562 = vadd.f32 %v2106, %v2498
        %v2563 = vadd.f32 %v2107, %v2499
        %v2564 = vadd.f32 %v2108, %v2500
        %v2565 = vadd.f32 %v2109, %v2501
        %v2566 = vadd.f32 %v2110, %v2502
        %v2567 = vadd.f32 %v2111, %v2503
        %v2568 = vadd.f32 %v2112, %v2504
        %v2569 = vadd.f32 %v2113, %v2505
        %v2570 = vadd.f32 %v2114, %v2506
        %v2571 = vadd.f32 %v2115, %v2507
        %v2572 = vadd.f32 %v2116, %v2508
        %v2573 = vadd.f32 %v2117, %v2509
        %v2574 = vadd.f32 %v2118, %v2510
        %v2575 = vadd.f32 %v2119, %v2511
        %v2576 = vadd.f32 %v2120, %v2512
        %v2577 = vadd.f32 %v2121, %v2513
        %v2578 = vadd.f32 %v2122, %v2514
        %v2579 = vadd.f32 %v2123, %v2515
        %v2580 = vadd.f32 %v2124, %v2516
        %v2581 = vadd.f32 %v2125, %v2517
        %v2582 = vadd.f32 %v2126, %v2518
        %v2583 = vadd.f32 %v2127, %v2519
        %v2584 = vadd.f32 %v2128, %v2520
        %v2585 = vadd.f32 %v2129, %v2521
        %v2586 = vadd.f32 %v2130, %v2522
        %v2587 = vadd.f32 %v2131, %v2523
        %v2588 = vadd.f32 %v2132, %v2524
        %v2589 = vadd.f32 %v2133, %v2525
        %v2590 = vadd.f32 %v2134, %v2526
        %v2591 = vadd.f32 %v2135, %v2527
        %v2592 = vadd.f32 %v2136, %v2528
        %v2593 = vadd.f32 %v2137, %v2529
        %v2594 = vadd.f32 %v2138, %v2530
        %v2595 = vadd.f32 %v2139, %v2531
        %v2596 = vadd.f32 %v2140, %v2532
        %v2597 = vadd.f32 %v2141, %v2533
        %v2598 = vadd.f32 %v2142, %v2534
        %v2599 = vadd.f32 %v2143, %v2535
        %v2600 = vadd.f32 %v2144, %v2536
        %v2601 = vadd.f32 %v2145, %v2537
        %v2602 = vadd.f32 %v2146, %v2538
        %v2603 = vadd.f32 %v2147, %v2539
        %v2604 = vadd.f32 %v2148, %v2540
        %v2605 = vadd.f32 %v2149, %v2541
        %v2606 = vadd.f32 %v2150, %v2542
        %v2607 = vadd.f32 %v2151, %v2543
        %v2608 = vadd.f32 %v2152, %v2544
        %v2609 = vadd.f32 %v2153, %v2545
        %v2610 = vadd.f32 %v2154, %v2546
        %v2611 = vadd.f32 %v2155, %v2547
        %s2612 = sld [smem:[#allocation2 + $0xa]]
        %v2613 = vstv %s2612
        %v2614 = vmul.f32 %v2613, %v201
        %v2615 = vmul.f32 %v2613, %v202
        %v2616 = vmul.f32 %v2613, %v203
        %v2617 = vmul.f32 %v2613, %v204
        %v2618 = vmul.f32 %v2613, %v205
        %v2619 = vmul.f32 %v2613, %v206
        %v2620 = vmul.f32 %v2613, %v207
        %v2621 = vmul.f32 %v2613, %v208
        %v2622 = vmul.f32 %v2613, %v209
        %v2623 = vmul.f32 %v2613, %v210
        %v2624 = vmul.f32 %v2613, %v211
        %v2625 = vmul.f32 %v2613, %v212
        %v2626 = vmul.f32 %v2613, %v213
        %v2627 = vmul.f32 %v2613, %v214
        %v2628 = vmul.f32 %v2613, %v215
        %v2629 = vmul.f32 %v2613, %v216
        %v2630 = vmul.f32 %v2613, %v217
        %v2631 = vmul.f32 %v2613, %v218
        %v2632 = vmul.f32 %v2613, %v219
        %v2633 = vmul.f32 %v2613, %v220
        %v2634 = vmul.f32 %v2613, %v221
        %v2635 = vmul.f32 %v2613, %v222
        %v2636 = vmul.f32 %v2613, %v223
        %v2637 = vmul.f32 %v2613, %v224
        %v2638 = vmul.f32 %v2613, %v225
        %v2639 = vmul.f32 %v2613, %v226
        %v2640 = vmul.f32 %v2613, %v227
        %v2641 = vmul.f32 %v2613, %v228
        %v2642 = vmul.f32 %v2613, %v229
        %v2643 = vmul.f32 %v2613, %v230
        %v2644 = vmul.f32 %v2613, %v231
        %v2645 = vmul.f32 %v2613, %v232
        %v2646 = vmul.f32 %v2613, %v233
        %v2647 = vmul.f32 %v2613, %v234
        %v2648 = vmul.f32 %v2613, %v235
        %v2649 = vmul.f32 %v2613, %v236
        %v2650 = vmul.f32 %v2613, %v237
        %v2651 = vmul.f32 %v2613, %v238
        %v2652 = vmul.f32 %v2613, %v239
        %v2653 = vmul.f32 %v2613, %v240
        %v2654 = vmul.f32 %v2613, %v241
        %v2655 = vmul.f32 %v2613, %v242
        %v2656 = vmul.f32 %v2613, %v243
        %v2657 = vmul.f32 %v2613, %v244
        %v2658 = vmul.f32 %v2613, %v245
        %v2659 = vmul.f32 %v2613, %v246
        %v2660 = vmul.f32 %v2613, %v247
        %v2661 = vmul.f32 %v2613, %v248
        %v2662 = vmul.f32 %v2613, %v249
        %v2663 = vmul.f32 %v2613, %v250
        %v2664 = vmul.f32 %v2613, %v251
        %v2665 = vmul.f32 %v2613, %v252
        %v2666 = vmul.f32 %v2613, %v253
        %v2667 = vmul.f32 %v2613, %v254
        %v2668 = vmul.f32 %v2613, %v255
        %v2669 = vmul.f32 %v2613, %v256
        %v2670 = vmul.f32 %v2613, %v257
        %v2671 = vmul.f32 %v2613, %v258
        %v2672 = vmul.f32 %v2613, %v259
        %v2673 = vmul.f32 %v2613, %v260
        %v2674 = vmul.f32 %v2613, %v261
        %v2675 = vmul.f32 %v2613, %v262
        %v2676 = vmul.f32 %v2613, %v263
        %v2677 = vmul.f32 %v2613, %v264
        %s2678 = sld [smem:[#allocation2 + $0xb]]
        %v2679 = vstv %s2678
        %v2680 = vmul.f32 %v2679, %v266
        %v2681 = vmul.f32 %v2679, %v267
        %v2682 = vmul.f32 %v2679, %v268
        %v2683 = vmul.f32 %v2679, %v269
        %v2684 = vmul.f32 %v2679, %v270
        %v2685 = vmul.f32 %v2679, %v271
        %v2686 = vmul.f32 %v2679, %v272
        %v2687 = vmul.f32 %v2679, %v273
        %v2688 = vmul.f32 %v2679, %v274
        %v2689 = vmul.f32 %v2679, %v275
        %v2690 = vmul.f32 %v2679, %v276
        %v2691 = vmul.f32 %v2679, %v277
        %v2692 = vmul.f32 %v2679, %v278
        %v2693 = vmul.f32 %v2679, %v279
        %v2694 = vmul.f32 %v2679, %v280
        %v2695 = vmul.f32 %v2679, %v281
        %v2696 = vmul.f32 %v2679, %v282
        %v2697 = vmul.f32 %v2679, %v283
        %v2698 = vmul.f32 %v2679, %v284
        %v2699 = vmul.f32 %v2679, %v285
        %v2700 = vmul.f32 %v2679, %v286
        %v2701 = vmul.f32 %v2679, %v287
        %v2702 = vmul.f32 %v2679, %v288
        %v2703 = vmul.f32 %v2679, %v289
        %v2704 = vmul.f32 %v2679, %v290
        %v2705 = vmul.f32 %v2679, %v291
        %v2706 = vmul.f32 %v2679, %v292
        %v2707 = vmul.f32 %v2679, %v293
        %v2708 = vmul.f32 %v2679, %v294
        %v2709 = vmul.f32 %v2679, %v295
        %v2710 = vmul.f32 %v2679, %v296
        %v2711 = vmul.f32 %v2679, %v297
        %v2712 = vmul.f32 %v2679, %v298
        %v2713 = vmul.f32 %v2679, %v299
        %v2714 = vmul.f32 %v2679, %v300
        %v2715 = vmul.f32 %v2679, %v301
        %v2716 = vmul.f32 %v2679, %v302
        %v2717 = vmul.f32 %v2679, %v303
        %v2718 = vmul.f32 %v2679, %v304
        %v2719 = vmul.f32 %v2679, %v305
        %v2720 = vmul.f32 %v2679, %v306
        %v2721 = vmul.f32 %v2679, %v307
        %v2722 = vmul.f32 %v2679, %v308
        %v2723 = vmul.f32 %v2679, %v309
        %v2724 = vmul.f32 %v2679, %v310
        %v2725 = vmul.f32 %v2679, %v311
        %v2726 = vmul.f32 %v2679, %v312
        %v2727 = vmul.f32 %v2679, %v313
        %v2728 = vmul.f32 %v2679, %v314
        %v2729 = vmul.f32 %v2679, %v315
        %v2730 = vmul.f32 %v2679, %v316
        %v2731 = vmul.f32 %v2679, %v317
        %v2732 = vmul.f32 %v2679, %v318
        %v2733 = vmul.f32 %v2679, %v319
        %v2734 = vmul.f32 %v2679, %v320
        %v2735 = vmul.f32 %v2679, %v321
        %v2736 = vmul.f32 %v2679, %v322
        %v2737 = vmul.f32 %v2679, %v323
        %v2738 = vmul.f32 %v2679, %v324
        %v2739 = vmul.f32 %v2679, %v325
        %v2740 = vmul.f32 %v2679, %v326
        %v2741 = vmul.f32 %v2679, %v327
        %v2742 = vmul.f32 %v2679, %v328
        %v2743 = vmul.f32 %v2679, %v329
        %v2744 = vadd.f32 %v2614, %v2680
        %v2745 = vadd.f32 %v2615, %v2681
        %v2746 = vadd.f32 %v2616, %v2682
        %v2747 = vadd.f32 %v2617, %v2683
        %v2748 = vadd.f32 %v2618, %v2684
        %v2749 = vadd.f32 %v2619, %v2685
        %v2750 = vadd.f32 %v2620, %v2686
        %v2751 = vadd.f32 %v2621, %v2687
        %v2752 = vadd.f32 %v2622, %v2688
        %v2753 = vadd.f32 %v2623, %v2689
        %v2754 = vadd.f32 %v2624, %v2690
        %v2755 = vadd.f32 %v2625, %v2691
        %v2756 = vadd.f32 %v2626, %v2692
        %v2757 = vadd.f32 %v2627, %v2693
        %v2758 = vadd.f32 %v2628, %v2694
        %v2759 = vadd.f32 %v2629, %v2695
        %v2760 = vadd.f32 %v2630, %v2696
        %v2761 = vadd.f32 %v2631, %v2697
        %v2762 = vadd.f32 %v2632, %v2698
        %v2763 = vadd.f32 %v2633, %v2699
        %v2764 = vadd.f32 %v2634, %v2700
        %v2765 = vadd.f32 %v2635, %v2701
        %v2766 = vadd.f32 %v2636, %v2702
        %v2767 = vadd.f32 %v2637, %v2703
        %v2768 = vadd.f32 %v2638, %v2704
        %v2769 = vadd.f32 %v2639, %v2705
        %v2770 = vadd.f32 %v2640, %v2706
        %v2771 = vadd.f32 %v2641, %v2707
        %v2772 = vadd.f32 %v2642, %v2708
        %v2773 = vadd.f32 %v2643, %v2709
        %v2774 = vadd.f32 %v2644, %v2710
        %v2775 = vadd.f32 %v2645, %v2711
        %v2776 = vadd.f32 %v2646, %v2712
        %v2777 = vadd.f32 %v2647, %v2713
        %v2778 = vadd.f32 %v2648, %v2714
        %v2779 = vadd.f32 %v2649, %v2715
        %v2780 = vadd.f32 %v2650, %v2716
        %v2781 = vadd.f32 %v2651, %v2717
        %v2782 = vadd.f32 %v2652, %v2718
        %v2783 = vadd.f32 %v2653, %v2719
        %v2784 = vadd.f32 %v2654, %v2720
        %v2785 = vadd.f32 %v2655, %v2721
        %v2786 = vadd.f32 %v2656, %v2722
        %v2787 = vadd.f32 %v2657, %v2723
        %v2788 = vadd.f32 %v2658, %v2724
        %v2789 = vadd.f32 %v2659, %v2725
        %v2790 = vadd.f32 %v2660, %v2726
        %v2791 = vadd.f32 %v2661, %v2727
        %v2792 = vadd.f32 %v2662, %v2728
        %v2793 = vadd.f32 %v2663, %v2729
        %v2794 = vadd.f32 %v2664, %v2730
        %v2795 = vadd.f32 %v2665, %v2731
        %v2796 = vadd.f32 %v2666, %v2732
        %v2797 = vadd.f32 %v2667, %v2733
        %v2798 = vadd.f32 %v2668, %v2734
        %v2799 = vadd.f32 %v2669, %v2735
        %v2800 = vadd.f32 %v2670, %v2736
        %v2801 = vadd.f32 %v2671, %v2737
        %v2802 = vadd.f32 %v2672, %v2738
        %v2803 = vadd.f32 %v2673, %v2739
        %v2804 = vadd.f32 %v2674, %v2740
        %v2805 = vadd.f32 %v2675, %v2741
        %v2806 = vadd.f32 %v2676, %v2742
        %v2807 = vadd.f32 %v2677, %v2743
        %s2808 = sld [smem:[#allocation2 + $0x15]]
        %v2809 = vstv %s2808
        %v2810 = vadd.f32 %v2744, %v2809
        %v2811 = vadd.f32 %v2745, %v2809
        %v2812 = vadd.f32 %v2746, %v2809
        %v2813 = vadd.f32 %v2747, %v2809
        %v2814 = vadd.f32 %v2748, %v2809
        %v2815 = vadd.f32 %v2749, %v2809
        %v2816 = vadd.f32 %v2750, %v2809
        %v2817 = vadd.f32 %v2751, %v2809
        %v2818 = vadd.f32 %v2752, %v2809
        %v2819 = vadd.f32 %v2753, %v2809
        %v2820 = vadd.f32 %v2754, %v2809
        %v2821 = vadd.f32 %v2755, %v2809
        %v2822 = vadd.f32 %v2756, %v2809
        %v2823 = vadd.f32 %v2757, %v2809
        %v2824 = vadd.f32 %v2758, %v2809
        %v2825 = vadd.f32 %v2759, %v2809
        %v2826 = vadd.f32 %v2760, %v2809
        %v2827 = vadd.f32 %v2761, %v2809
        %v2828 = vadd.f32 %v2762, %v2809
        %v2829 = vadd.f32 %v2763, %v2809
        %v2830 = vadd.f32 %v2764, %v2809
        %v2831 = vadd.f32 %v2765, %v2809
        %v2832 = vadd.f32 %v2766, %v2809
        %v2833 = vadd.f32 %v2767, %v2809
        %v2834 = vadd.f32 %v2768, %v2809
        %v2835 = vadd.f32 %v2769, %v2809
        %v2836 = vadd.f32 %v2770, %v2809
        %v2837 = vadd.f32 %v2771, %v2809
        %v2838 = vadd.f32 %v2772, %v2809
        %v2839 = vadd.f32 %v2773, %v2809
        %v2840 = vadd.f32 %v2774, %v2809
        %v2841 = vadd.f32 %v2775, %v2809
        %v2842 = vadd.f32 %v2776, %v2809
        %v2843 = vadd.f32 %v2777, %v2809
        %v2844 = vadd.f32 %v2778, %v2809
        %v2845 = vadd.f32 %v2779, %v2809
        %v2846 = vadd.f32 %v2780, %v2809
        %v2847 = vadd.f32 %v2781, %v2809
        %v2848 = vadd.f32 %v2782, %v2809
        %v2849 = vadd.f32 %v2783, %v2809
        %v2850 = vadd.f32 %v2784, %v2809
        %v2851 = vadd.f32 %v2785, %v2809
        %v2852 = vadd.f32 %v2786, %v2809
        %v2853 = vadd.f32 %v2787, %v2809
        %v2854 = vadd.f32 %v2788, %v2809
        %v2855 = vadd.f32 %v2789, %v2809
        %v2856 = vadd.f32 %v2790, %v2809
        %v2857 = vadd.f32 %v2791, %v2809
        %v2858 = vadd.f32 %v2792, %v2809
        %v2859 = vadd.f32 %v2793, %v2809
        %v2860 = vadd.f32 %v2794, %v2809
        %v2861 = vadd.f32 %v2795, %v2809
        %v2862 = vadd.f32 %v2796, %v2809
        %v2863 = vadd.f32 %v2797, %v2809
        %v2864 = vadd.f32 %v2798, %v2809
        %v2865 = vadd.f32 %v2799, %v2809
        %v2866 = vadd.f32 %v2800, %v2809
        %v2867 = vadd.f32 %v2801, %v2809
        %v2868 = vadd.f32 %v2802, %v2809
        %v2869 = vadd.f32 %v2803, %v2809
        %v2870 = vadd.f32 %v2804, %v2809
        %v2871 = vadd.f32 %v2805, %v2809
        %v2872 = vadd.f32 %v2806, %v2809
        %v2873 = vadd.f32 %v2807, %v2809
        %v2874 = vtanh.pop %v2810
        %v2875 = vtanh.pop %v2811
        %v2876 = vtanh.pop %v2812
        %v2877 = vtanh.pop %v2813
        %v2878 = vtanh.pop %v2814
        %v2879 = vtanh.pop %v2815
        %v2880 = vtanh.pop %v2816
        %v2881 = vtanh.pop %v2817
        %v2882 = vtanh.pop %v2818
        %v2883 = vtanh.pop %v2819
        %v2884 = vtanh.pop %v2820
        %v2885 = vtanh.pop %v2821
        %v2886 = vtanh.pop %v2822
        %v2887 = vtanh.pop %v2823
        %v2888 = vtanh.pop %v2824
        %v2889 = vtanh.pop %v2825
        %v2890 = vtanh.pop %v2826
        %v2891 = vtanh.pop %v2827
        %v2892 = vtanh.pop %v2828
        %v2893 = vtanh.pop %v2829
        %v2894 = vtanh.pop %v2830
        %v2895 = vtanh.pop %v2831
        %v2896 = vtanh.pop %v2832
        %v2897 = vtanh.pop %v2833
        %v2898 = vtanh.pop %v2834
        %v2899 = vtanh.pop %v2835
        %v2900 = vtanh.pop %v2836
        %v2901 = vtanh.pop %v2837
        %v2902 = vtanh.pop %v2838
        %v2903 = vtanh.pop %v2839
        %v2904 = vtanh.pop %v2840
        %v2905 = vtanh.pop %v2841
        %v2906 = vtanh.pop %v2842
        %v2907 = vtanh.pop %v2843
        %v2908 = vtanh.pop %v2844
        %v2909 = vtanh.pop %v2845
        %v2910 = vtanh.pop %v2846
        %v2911 = vtanh.pop %v2847
        %v2912 = vtanh.pop %v2848
        %v2913 = vtanh.pop %v2849
        %v2914 = vtanh.pop %v2850
        %v2915 = vtanh.pop %v2851
        %v2916 = vtanh.pop %v2852
        %v2917 = vtanh.pop %v2853
        %v2918 = vtanh.pop %v2854
        %v2919 = vtanh.pop %v2855
        %v2920 = vtanh.pop %v2856
        %v2921 = vtanh.pop %v2857
        %v2922 = vtanh.pop %v2858
        %v2923 = vtanh.pop %v2859
        %v2924 = vtanh.pop %v2860
        %v2925 = vtanh.pop %v2861
        %v2926 = vtanh.pop %v2862
        %v2927 = vtanh.pop %v2863
        %v2928 = vtanh.pop %v2864
        %v2929 = vtanh.pop %v2865
        %v2930 = vtanh.pop %v2866
        %v2931 = vtanh.pop %v2867
        %v2932 = vtanh.pop %v2868
        %v2933 = vtanh.pop %v2869
        %v2934 = vtanh.pop %v2870
        %v2935 = vtanh.pop %v2871
        %v2936 = vtanh.pop %v2872
        %v2937 = vtanh.pop %v2873
        %s2938 = sld [smem:[#allocation2 + $0x1d]]
        %v2939 = vstv %s2938
        %v2940 = vmul.f32 %v2939, %v2874
        %v2941 = vmul.f32 %v2939, %v2875
        %v2942 = vmul.f32 %v2939, %v2876
        %v2943 = vmul.f32 %v2939, %v2877
        %v2944 = vmul.f32 %v2939, %v2878
        %v2945 = vmul.f32 %v2939, %v2879
        %v2946 = vmul.f32 %v2939, %v2880
        %v2947 = vmul.f32 %v2939, %v2881
        %v2948 = vmul.f32 %v2939, %v2882
        %v2949 = vmul.f32 %v2939, %v2883
        %v2950 = vmul.f32 %v2939, %v2884
        %v2951 = vmul.f32 %v2939, %v2885
        %v2952 = vmul.f32 %v2939, %v2886
        %v2953 = vmul.f32 %v2939, %v2887
        %v2954 = vmul.f32 %v2939, %v2888
        %v2955 = vmul.f32 %v2939, %v2889
        %v2956 = vmul.f32 %v2939, %v2890
        %v2957 = vmul.f32 %v2939, %v2891
        %v2958 = vmul.f32 %v2939, %v2892
        %v2959 = vmul.f32 %v2939, %v2893
        %v2960 = vmul.f32 %v2939, %v2894
        %v2961 = vmul.f32 %v2939, %v2895
        %v2962 = vmul.f32 %v2939, %v2896
        %v2963 = vmul.f32 %v2939, %v2897
        %v2964 = vmul.f32 %v2939, %v2898
        %v2965 = vmul.f32 %v2939, %v2899
        %v2966 = vmul.f32 %v2939, %v2900
        %v2967 = vmul.f32 %v2939, %v2901
        %v2968 = vmul.f32 %v2939, %v2902
        %v2969 = vmul.f32 %v2939, %v2903
        %v2970 = vmul.f32 %v2939, %v2904
        %v2971 = vmul.f32 %v2939, %v2905
        %v2972 = vmul.f32 %v2939, %v2906
        %v2973 = vmul.f32 %v2939, %v2907
        %v2974 = vmul.f32 %v2939, %v2908
        %v2975 = vmul.f32 %v2939, %v2909
        %v2976 = vmul.f32 %v2939, %v2910
        %v2977 = vmul.f32 %v2939, %v2911
        %v2978 = vmul.f32 %v2939, %v2912
        %v2979 = vmul.f32 %v2939, %v2913
        %v2980 = vmul.f32 %v2939, %v2914
        %v2981 = vmul.f32 %v2939, %v2915
        %v2982 = vmul.f32 %v2939, %v2916
        %v2983 = vmul.f32 %v2939, %v2917
        %v2984 = vmul.f32 %v2939, %v2918
        %v2985 = vmul.f32 %v2939, %v2919
        %v2986 = vmul.f32 %v2939, %v2920
        %v2987 = vmul.f32 %v2939, %v2921
        %v2988 = vmul.f32 %v2939, %v2922
        %v2989 = vmul.f32 %v2939, %v2923
        %v2990 = vmul.f32 %v2939, %v2924
        %v2991 = vmul.f32 %v2939, %v2925
        %v2992 = vmul.f32 %v2939, %v2926
        %v2993 = vmul.f32 %v2939, %v2927
        %v2994 = vmul.f32 %v2939, %v2928
        %v2995 = vmul.f32 %v2939, %v2929
        %v2996 = vmul.f32 %v2939, %v2930
        %v2997 = vmul.f32 %v2939, %v2931
        %v2998 = vmul.f32 %v2939, %v2932
        %v2999 = vmul.f32 %v2939, %v2933
        %v3000 = vmul.f32 %v2939, %v2934
        %v3001 = vmul.f32 %v2939, %v2935
        %v3002 = vmul.f32 %v2939, %v2936
        %v3003 = vmul.f32 %v2939, %v2937
        %v3004 = vadd.f32 %v2548, %v2940
        %v3005 = vadd.f32 %v2549, %v2941
        %v3006 = vadd.f32 %v2550, %v2942
        %v3007 = vadd.f32 %v2551, %v2943
        %v3008 = vadd.f32 %v2552, %v2944
        %v3009 = vadd.f32 %v2553, %v2945
        %v3010 = vadd.f32 %v2554, %v2946
        %v3011 = vadd.f32 %v2555, %v2947
        %v3012 = vadd.f32 %v2556, %v2948
        %v3013 = vadd.f32 %v2557, %v2949
        %v3014 = vadd.f32 %v2558, %v2950
        %v3015 = vadd.f32 %v2559, %v2951
        %v3016 = vadd.f32 %v2560, %v2952
        %v3017 = vadd.f32 %v2561, %v2953
        %v3018 = vadd.f32 %v2562, %v2954
        %v3019 = vadd.f32 %v2563, %v2955
        %v3020 = vadd.f32 %v2564, %v2956
        %v3021 = vadd.f32 %v2565, %v2957
        %v3022 = vadd.f32 %v2566, %v2958
        %v3023 = vadd.f32 %v2567, %v2959
        %v3024 = vadd.f32 %v2568, %v2960
        %v3025 = vadd.f32 %v2569, %v2961
        %v3026 = vadd.f32 %v2570, %v2962
        %v3027 = vadd.f32 %v2571, %v2963
        %v3028 = vadd.f32 %v2572, %v2964
        %v3029 = vadd.f32 %v2573, %v2965
        %v3030 = vadd.f32 %v2574, %v2966
        %v3031 = vadd.f32 %v2575, %v2967
        %v3032 = vadd.f32 %v2576, %v2968
        %v3033 = vadd.f32 %v2577, %v2969
        %v3034 = vadd.f32 %v2578, %v2970
        %v3035 = vadd.f32 %v2579, %v2971
        %v3036 = vadd.f32 %v2580, %v2972
        %v3037 = vadd.f32 %v2581, %v2973
        %v3038 = vadd.f32 %v2582, %v2974
        %v3039 = vadd.f32 %v2583, %v2975
        %v3040 = vadd.f32 %v2584, %v2976
        %v3041 = vadd.f32 %v2585, %v2977
        %v3042 = vadd.f32 %v2586, %v2978
        %v3043 = vadd.f32 %v2587, %v2979
        %v3044 = vadd.f32 %v2588, %v2980
        %v3045 = vadd.f32 %v2589, %v2981
        %v3046 = vadd.f32 %v2590, %v2982
        %v3047 = vadd.f32 %v2591, %v2983
        %v3048 = vadd.f32 %v2592, %v2984
        %v3049 = vadd.f32 %v2593, %v2985
        %v3050 = vadd.f32 %v2594, %v2986
        %v3051 = vadd.f32 %v2595, %v2987
        %v3052 = vadd.f32 %v2596, %v2988
        %v3053 = vadd.f32 %v2597, %v2989
        %v3054 = vadd.f32 %v2598, %v2990
        %v3055 = vadd.f32 %v2599, %v2991
        %v3056 = vadd.f32 %v2600, %v2992
        %v3057 = vadd.f32 %v2601, %v2993
        %v3058 = vadd.f32 %v2602, %v2994
        %v3059 = vadd.f32 %v2603, %v2995
        %v3060 = vadd.f32 %v2604, %v2996
        %v3061 = vadd.f32 %v2605, %v2997
        %v3062 = vadd.f32 %v2606, %v2998
        %v3063 = vadd.f32 %v2607, %v2999
        %v3064 = vadd.f32 %v2608, %v3000
        %v3065 = vadd.f32 %v2609, %v3001
        %v3066 = vadd.f32 %v2610, %v3002
        %v3067 = vadd.f32 %v2611, %v3003
        %s3068 = sld [smem:[#allocation2 + $0xc]]
        %v3069 = vstv %s3068
        %v3070 = vmul.f32 %v3069, %v201
        %v3071 = vmul.f32 %v3069, %v202
        %v3072 = vmul.f32 %v3069, %v203
        %v3073 = vmul.f32 %v3069, %v204
        %v3074 = vmul.f32 %v3069, %v205
        %v3075 = vmul.f32 %v3069, %v206
        %v3076 = vmul.f32 %v3069, %v207
        %v3077 = vmul.f32 %v3069, %v208
        %v3078 = vmul.f32 %v3069, %v209
        %v3079 = vmul.f32 %v3069, %v210
        %v3080 = vmul.f32 %v3069, %v211
        %v3081 = vmul.f32 %v3069, %v212
        %v3082 = vmul.f32 %v3069, %v213
        %v3083 = vmul.f32 %v3069, %v214
        %v3084 = vmul.f32 %v3069, %v215
        %v3085 = vmul.f32 %v3069, %v216
        %v3086 = vmul.f32 %v3069, %v217
        %v3087 = vmul.f32 %v3069, %v218
        %v3088 = vmul.f32 %v3069, %v219
        %v3089 = vmul.f32 %v3069, %v220
        %v3090 = vmul.f32 %v3069, %v221
        %v3091 = vmul.f32 %v3069, %v222
        %v3092 = vmul.f32 %v3069, %v223
        %v3093 = vmul.f32 %v3069, %v224
        %v3094 = vmul.f32 %v3069, %v225
        %v3095 = vmul.f32 %v3069, %v226
        %v3096 = vmul.f32 %v3069, %v227
        %v3097 = vmul.f32 %v3069, %v228
        %v3098 = vmul.f32 %v3069, %v229
        %v3099 = vmul.f32 %v3069, %v230
        %v3100 = vmul.f32 %v3069, %v231
        %v3101 = vmul.f32 %v3069, %v232
        %v3102 = vmul.f32 %v3069, %v233
        %v3103 = vmul.f32 %v3069, %v234
        %v3104 = vmul.f32 %v3069, %v235
        %v3105 = vmul.f32 %v3069, %v236
        %v3106 = vmul.f32 %v3069, %v237
        %v3107 = vmul.f32 %v3069, %v238
        %v3108 = vmul.f32 %v3069, %v239
        %v3109 = vmul.f32 %v3069, %v240
        %v3110 = vmul.f32 %v3069, %v241
        %v3111 = vmul.f32 %v3069, %v242
        %v3112 = vmul.f32 %v3069, %v243
        %v3113 = vmul.f32 %v3069, %v244
        %v3114 = vmul.f32 %v3069, %v245
        %v3115 = vmul.f32 %v3069, %v246
        %v3116 = vmul.f32 %v3069, %v247
        %v3117 = vmul.f32 %v3069, %v248
        %v3118 = vmul.f32 %v3069, %v249
        %v3119 = vmul.f32 %v3069, %v250
        %v3120 = vmul.f32 %v3069, %v251
        %v3121 = vmul.f32 %v3069, %v252
        %v3122 = vmul.f32 %v3069, %v253
        %v3123 = vmul.f32 %v3069, %v254
        %v3124 = vmul.f32 %v3069, %v255
        %v3125 = vmul.f32 %v3069, %v256
        %v3126 = vmul.f32 %v3069, %v257
        %v3127 = vmul.f32 %v3069, %v258
        %v3128 = vmul.f32 %v3069, %v259
        %v3129 = vmul.f32 %v3069, %v260
        %v3130 = vmul.f32 %v3069, %v261
        %v3131 = vmul.f32 %v3069, %v262
        %v3132 = vmul.f32 %v3069, %v263
        %v3133 = vmul.f32 %v3069, %v264
        %s3134 = sld [smem:[#allocation2 + $0xd]]
        %v3135 = vstv %s3134
        %v3136 = vmul.f32 %v3135, %v266
        %v3137 = vmul.f32 %v3135, %v267
        %v3138 = vmul.f32 %v3135, %v268
        %v3139 = vmul.f32 %v3135, %v269
        %v3140 = vmul.f32 %v3135, %v270
        %v3141 = vmul.f32 %v3135, %v271
        %v3142 = vmul.f32 %v3135, %v272
        %v3143 = vmul.f32 %v3135, %v273
        %v3144 = vmul.f32 %v3135, %v274
        %v3145 = vmul.f32 %v3135, %v275
        %v3146 = vmul.f32 %v3135, %v276
        %v3147 = vmul.f32 %v3135, %v277
        %v3148 = vmul.f32 %v3135, %v278
        %v3149 = vmul.f32 %v3135, %v279
        %v3150 = vmul.f32 %v3135, %v280
        %v3151 = vmul.f32 %v3135, %v281
        %v3152 = vmul.f32 %v3135, %v282
        %v3153 = vmul.f32 %v3135, %v283
        %v3154 = vmul.f32 %v3135, %v284
        %v3155 = vmul.f32 %v3135, %v285
        %v3156 = vmul.f32 %v3135, %v286
        %v3157 = vmul.f32 %v3135, %v287
        %v3158 = vmul.f32 %v3135, %v288
        %v3159 = vmul.f32 %v3135, %v289
        %v3160 = vmul.f32 %v3135, %v290
        %v3161 = vmul.f32 %v3135, %v291
        %v3162 = vmul.f32 %v3135, %v292
        %v3163 = vmul.f32 %v3135, %v293
        %v3164 = vmul.f32 %v3135, %v294
        %v3165 = vmul.f32 %v3135, %v295
        %v3166 = vmul.f32 %v3135, %v296
        %v3167 = vmul.f32 %v3135, %v297
        %v3168 = vmul.f32 %v3135, %v298
        %v3169 = vmul.f32 %v3135, %v299
        %v3170 = vmul.f32 %v3135, %v300
        %v3171 = vmul.f32 %v3135, %v301
        %v3172 = vmul.f32 %v3135, %v302
        %v3173 = vmul.f32 %v3135, %v303
        %v3174 = vmul.f32 %v3135, %v304
        %v3175 = vmul.f32 %v3135, %v305
        %v3176 = vmul.f32 %v3135, %v306
        %v3177 = vmul.f32 %v3135, %v307
        %v3178 = vmul.f32 %v3135, %v308
        %v3179 = vmul.f32 %v3135, %v309
        %v3180 = vmul.f32 %v3135, %v310
        %v3181 = vmul.f32 %v3135, %v311
        %v3182 = vmul.f32 %v3135, %v312
        %v3183 = vmul.f32 %v3135, %v313
        %v3184 = vmul.f32 %v3135, %v314
        %v3185 = vmul.f32 %v3135, %v315
        %v3186 = vmul.f32 %v3135, %v316
        %v3187 = vmul.f32 %v3135, %v317
        %v3188 = vmul.f32 %v3135, %v318
        %v3189 = vmul.f32 %v3135, %v319
        %v3190 = vmul.f32 %v3135, %v320
        %v3191 = vmul.f32 %v3135, %v321
        %v3192 = vmul.f32 %v3135, %v322
        %v3193 = vmul.f32 %v3135, %v323
        %v3194 = vmul.f32 %v3135, %v324
        %v3195 = vmul.f32 %v3135, %v325
        %v3196 = vmul.f32 %v3135, %v326
        %v3197 = vmul.f32 %v3135, %v327
        %v3198 = vmul.f32 %v3135, %v328
        %v3199 = vmul.f32 %v3135, %v329
        %v3200 = vadd.f32 %v3070, %v3136
        %v3201 = vadd.f32 %v3071, %v3137
        %v3202 = vadd.f32 %v3072, %v3138
        %v3203 = vadd.f32 %v3073, %v3139
        %v3204 = vadd.f32 %v3074, %v3140
        %v3205 = vadd.f32 %v3075, %v3141
        %v3206 = vadd.f32 %v3076, %v3142
        %v3207 = vadd.f32 %v3077, %v3143
        %v3208 = vadd.f32 %v3078, %v3144
        %v3209 = vadd.f32 %v3079, %v3145
        %v3210 = vadd.f32 %v3080, %v3146
        %v3211 = vadd.f32 %v3081, %v3147
        %v3212 = vadd.f32 %v3082, %v3148
        %v3213 = vadd.f32 %v3083, %v3149
        %v3214 = vadd.f32 %v3084, %v3150
        %v3215 = vadd.f32 %v3085, %v3151
        %v3216 = vadd.f32 %v3086, %v3152
        %v3217 = vadd.f32 %v3087, %v3153
        %v3218 = vadd.f32 %v3088, %v3154
        %v3219 = vadd.f32 %v3089, %v3155
        %v3220 = vadd.f32 %v3090, %v3156
        %v3221 = vadd.f32 %v3091, %v3157
        %v3222 = vadd.f32 %v3092, %v3158
        %v3223 = vadd.f32 %v3093, %v3159
        %v3224 = vadd.f32 %v3094, %v3160
        %v3225 = vadd.f32 %v3095, %v3161
        %v3226 = vadd.f32 %v3096, %v3162
        %v3227 = vadd.f32 %v3097, %v3163
        %v3228 = vadd.f32 %v3098, %v3164
        %v3229 = vadd.f32 %v3099, %v3165
        %v3230 = vadd.f32 %v3100, %v3166
        %v3231 = vadd.f32 %v3101, %v3167
        %v3232 = vadd.f32 %v3102, %v3168
        %v3233 = vadd.f32 %v3103, %v3169
        %v3234 = vadd.f32 %v3104, %v3170
        %v3235 = vadd.f32 %v3105, %v3171
        %v3236 = vadd.f32 %v3106, %v3172
        %v3237 = vadd.f32 %v3107, %v3173
        %v3238 = vadd.f32 %v3108, %v3174
        %v3239 = vadd.f32 %v3109, %v3175
        %v3240 = vadd.f32 %v3110, %v3176
        %v3241 = vadd.f32 %v3111, %v3177
        %v3242 = vadd.f32 %v3112, %v3178
        %v3243 = vadd.f32 %v3113, %v3179
        %v3244 = vadd.f32 %v3114, %v3180
        %v3245 = vadd.f32 %v3115, %v3181
        %v3246 = vadd.f32 %v3116, %v3182
        %v3247 = vadd.f32 %v3117, %v3183
        %v3248 = vadd.f32 %v3118, %v3184
        %v3249 = vadd.f32 %v3119, %v3185
        %v3250 = vadd.f32 %v3120, %v3186
        %v3251 = vadd.f32 %v3121, %v3187
        %v3252 = vadd.f32 %v3122, %v3188
        %v3253 = vadd.f32 %v3123, %v3189
        %v3254 = vadd.f32 %v3124, %v3190
        %v3255 = vadd.f32 %v3125, %v3191
        %v3256 = vadd.f32 %v3126, %v3192
        %v3257 = vadd.f32 %v3127, %v3193
        %v3258 = vadd.f32 %v3128, %v3194
        %v3259 = vadd.f32 %v3129, %v3195
        %v3260 = vadd.f32 %v3130, %v3196
        %v3261 = vadd.f32 %v3131, %v3197
        %v3262 = vadd.f32 %v3132, %v3198
        %v3263 = vadd.f32 %v3133, %v3199
        %s3264 = sld [smem:[#allocation2 + $0x16]]
        %v3265 = vstv %s3264
        %v3266 = vadd.f32 %v3200, %v3265
        %v3267 = vadd.f32 %v3201, %v3265
        %v3268 = vadd.f32 %v3202, %v3265
        %v3269 = vadd.f32 %v3203, %v3265
        %v3270 = vadd.f32 %v3204, %v3265
        %v3271 = vadd.f32 %v3205, %v3265
        %v3272 = vadd.f32 %v3206, %v3265
        %v3273 = vadd.f32 %v3207, %v3265
        %v3274 = vadd.f32 %v3208, %v3265
        %v3275 = vadd.f32 %v3209, %v3265
        %v3276 = vadd.f32 %v3210, %v3265
        %v3277 = vadd.f32 %v3211, %v3265
        %v3278 = vadd.f32 %v3212, %v3265
        %v3279 = vadd.f32 %v3213, %v3265
        %v3280 = vadd.f32 %v3214, %v3265
        %v3281 = vadd.f32 %v3215, %v3265
        %v3282 = vadd.f32 %v3216, %v3265
        %v3283 = vadd.f32 %v3217, %v3265
        %v3284 = vadd.f32 %v3218, %v3265
        %v3285 = vadd.f32 %v3219, %v3265
        %v3286 = vadd.f32 %v3220, %v3265
        %v3287 = vadd.f32 %v3221, %v3265
        %v3288 = vadd.f32 %v3222, %v3265
        %v3289 = vadd.f32 %v3223, %v3265
        %v3290 = vadd.f32 %v3224, %v3265
        %v3291 = vadd.f32 %v3225, %v3265
        %v3292 = vadd.f32 %v3226, %v3265
        %v3293 = vadd.f32 %v3227, %v3265
        %v3294 = vadd.f32 %v3228, %v3265
        %v3295 = vadd.f32 %v3229, %v3265
        %v3296 = vadd.f32 %v3230, %v3265
        %v3297 = vadd.f32 %v3231, %v3265
        %v3298 = vadd.f32 %v3232, %v3265
        %v3299 = vadd.f32 %v3233, %v3265
        %v3300 = vadd.f32 %v3234, %v3265
        %v3301 = vadd.f32 %v3235, %v3265
        %v3302 = vadd.f32 %v3236, %v3265
        %v3303 = vadd.f32 %v3237, %v3265
        %v3304 = vadd.f32 %v3238, %v3265
        %v3305 = vadd.f32 %v3239, %v3265
        %v3306 = vadd.f32 %v3240, %v3265
        %v3307 = vadd.f32 %v3241, %v3265
        %v3308 = vadd.f32 %v3242, %v3265
        %v3309 = vadd.f32 %v3243, %v3265
        %v3310 = vadd.f32 %v3244, %v3265
        %v3311 = vadd.f32 %v3245, %v3265
        %v3312 = vadd.f32 %v3246, %v3265
        %v3313 = vadd.f32 %v3247, %v3265
        %v3314 = vadd.f32 %v3248, %v3265
        %v3315 = vadd.f32 %v3249, %v3265
        %v3316 = vadd.f32 %v3250, %v3265
        %v3317 = vadd.f32 %v3251, %v3265
        %v3318 = vadd.f32 %v3252, %v3265
        %v3319 = vadd.f32 %v3253, %v3265
        %v3320 = vadd.f32 %v3254, %v3265
        %v3321 = vadd.f32 %v3255, %v3265
        %v3322 = vadd.f32 %v3256, %v3265
        %v3323 = vadd.f32 %v3257, %v3265
        %v3324 = vadd.f32 %v3258, %v3265
        %v3325 = vadd.f32 %v3259, %v3265
        %v3326 = vadd.f32 %v3260, %v3265
        %v3327 = vadd.f32 %v3261, %v3265
        %v3328 = vadd.f32 %v3262, %v3265
        %v3329 = vadd.f32 %v3263, %v3265
        %v3330 = vtanh.pop %v3266
        %v3331 = vtanh.pop %v3267
        %v3332 = vtanh.pop %v3268
        %v3333 = vtanh.pop %v3269
        %v3334 = vtanh.pop %v3270
        %v3335 = vtanh.pop %v3271
        %v3336 = vtanh.pop %v3272
        %v3337 = vtanh.pop %v3273
        %v3338 = vtanh.pop %v3274
        %v3339 = vtanh.pop %v3275
        %v3340 = vtanh.pop %v3276
        %v3341 = vtanh.pop %v3277
        %v3342 = vtanh.pop %v3278
        %v3343 = vtanh.pop %v3279
        %v3344 = vtanh.pop %v3280
        %v3345 = vtanh.pop %v3281
        %v3346 = vtanh.pop %v3282
        %v3347 = vtanh.pop %v3283
        %v3348 = vtanh.pop %v3284
        %v3349 = vtanh.pop %v3285
        %v3350 = vtanh.pop %v3286
        %v3351 = vtanh.pop %v3287
        %v3352 = vtanh.pop %v3288
        %v3353 = vtanh.pop %v3289
        %v3354 = vtanh.pop %v3290
        %v3355 = vtanh.pop %v3291
        %v3356 = vtanh.pop %v3292
        %v3357 = vtanh.pop %v3293
        %v3358 = vtanh.pop %v3294
        %v3359 = vtanh.pop %v3295
        %v3360 = vtanh.pop %v3296
        %v3361 = vtanh.pop %v3297
        %v3362 = vtanh.pop %v3298
        %v3363 = vtanh.pop %v3299
        %v3364 = vtanh.pop %v3300
        %v3365 = vtanh.pop %v3301
        %v3366 = vtanh.pop %v3302
        %v3367 = vtanh.pop %v3303
        %v3368 = vtanh.pop %v3304
        %v3369 = vtanh.pop %v3305
        %v3370 = vtanh.pop %v3306
        %v3371 = vtanh.pop %v3307
        %v3372 = vtanh.pop %v3308
        %v3373 = vtanh.pop %v3309
        %v3374 = vtanh.pop %v3310
        %v3375 = vtanh.pop %v3311
        %v3376 = vtanh.pop %v3312
        %v3377 = vtanh.pop %v3313
        %v3378 = vtanh.pop %v3314
        %v3379 = vtanh.pop %v3315
        %v3380 = vtanh.pop %v3316
        %v3381 = vtanh.pop %v3317
        %v3382 = vtanh.pop %v3318
        %v3383 = vtanh.pop %v3319
        %v3384 = vtanh.pop %v3320
        %v3385 = vtanh.pop %v3321
        %v3386 = vtanh.pop %v3322
        %v3387 = vtanh.pop %v3323
        %v3388 = vtanh.pop %v3324
        %v3389 = vtanh.pop %v3325
        %v3390 = vtanh.pop %v3326
        %v3391 = vtanh.pop %v3327
        %v3392 = vtanh.pop %v3328
        %v3393 = vtanh.pop %v3329
        %s3394 = sld [smem:[#allocation2 + $0x1e]]
        %v3395 = vstv %s3394
        %v3396 = vmul.f32 %v3395, %v3330
        %v3397 = vmul.f32 %v3395, %v3331
        %v3398 = vmul.f32 %v3395, %v3332
        %v3399 = vmul.f32 %v3395, %v3333
        %v3400 = vmul.f32 %v3395, %v3334
        %v3401 = vmul.f32 %v3395, %v3335
        %v3402 = vmul.f32 %v3395, %v3336
        %v3403 = vmul.f32 %v3395, %v3337
        %v3404 = vmul.f32 %v3395, %v3338
        %v3405 = vmul.f32 %v3395, %v3339
        %v3406 = vmul.f32 %v3395, %v3340
        %v3407 = vmul.f32 %v3395, %v3341
        %v3408 = vmul.f32 %v3395, %v3342
        %v3409 = vmul.f32 %v3395, %v3343
        %v3410 = vmul.f32 %v3395, %v3344
        %v3411 = vmul.f32 %v3395, %v3345
        %v3412 = vmul.f32 %v3395, %v3346
        %v3413 = vmul.f32 %v3395, %v3347
        %v3414 = vmul.f32 %v3395, %v3348
        %v3415 = vmul.f32 %v3395, %v3349
        %v3416 = vmul.f32 %v3395, %v3350
        %v3417 = vmul.f32 %v3395, %v3351
        %v3418 = vmul.f32 %v3395, %v3352
        %v3419 = vmul.f32 %v3395, %v3353
        %v3420 = vmul.f32 %v3395, %v3354
        %v3421 = vmul.f32 %v3395, %v3355
        %v3422 = vmul.f32 %v3395, %v3356
        %v3423 = vmul.f32 %v3395, %v3357
        %v3424 = vmul.f32 %v3395, %v3358
        %v3425 = vmul.f32 %v3395, %v3359
        %v3426 = vmul.f32 %v3395, %v3360
        %v3427 = vmul.f32 %v3395, %v3361
        %v3428 = vmul.f32 %v3395, %v3362
        %v3429 = vmul.f32 %v3395, %v3363
        %v3430 = vmul.f32 %v3395, %v3364
        %v3431 = vmul.f32 %v3395, %v3365
        %v3432 = vmul.f32 %v3395, %v3366
        %v3433 = vmul.f32 %v3395, %v3367
        %v3434 = vmul.f32 %v3395, %v3368
        %v3435 = vmul.f32 %v3395, %v3369
        %v3436 = vmul.f32 %v3395, %v3370
        %v3437 = vmul.f32 %v3395, %v3371
        %v3438 = vmul.f32 %v3395, %v3372
        %v3439 = vmul.f32 %v3395, %v3373
        %v3440 = vmul.f32 %v3395, %v3374
        %v3441 = vmul.f32 %v3395, %v3375
        %v3442 = vmul.f32 %v3395, %v3376
        %v3443 = vmul.f32 %v3395, %v3377
        %v3444 = vmul.f32 %v3395, %v3378
        %v3445 = vmul.f32 %v3395, %v3379
        %v3446 = vmul.f32 %v3395, %v3380
        %v3447 = vmul.f32 %v3395, %v3381
        %v3448 = vmul.f32 %v3395, %v3382
        %v3449 = vmul.f32 %v3395, %v3383
        %v3450 = vmul.f32 %v3395, %v3384
        %v3451 = vmul.f32 %v3395, %v3385
        %v3452 = vmul.f32 %v3395, %v3386
        %v3453 = vmul.f32 %v3395, %v3387
        %v3454 = vmul.f32 %v3395, %v3388
        %v3455 = vmul.f32 %v3395, %v3389
        %v3456 = vmul.f32 %v3395, %v3390
        %v3457 = vmul.f32 %v3395, %v3391
        %v3458 = vmul.f32 %v3395, %v3392
        %v3459 = vmul.f32 %v3395, %v3393
        %v3460 = vadd.f32 %v3004, %v3396
        %v3461 = vadd.f32 %v3005, %v3397
        %v3462 = vadd.f32 %v3006, %v3398
        %v3463 = vadd.f32 %v3007, %v3399
        %v3464 = vadd.f32 %v3008, %v3400
        %v3465 = vadd.f32 %v3009, %v3401
        %v3466 = vadd.f32 %v3010, %v3402
        %v3467 = vadd.f32 %v3011, %v3403
        %v3468 = vadd.f32 %v3012, %v3404
        %v3469 = vadd.f32 %v3013, %v3405
        %v3470 = vadd.f32 %v3014, %v3406
        %v3471 = vadd.f32 %v3015, %v3407
        %v3472 = vadd.f32 %v3016, %v3408
        %v3473 = vadd.f32 %v3017, %v3409
        %v3474 = vadd.f32 %v3018, %v3410
        %v3475 = vadd.f32 %v3019, %v3411
        %v3476 = vadd.f32 %v3020, %v3412
        %v3477 = vadd.f32 %v3021, %v3413
        %v3478 = vadd.f32 %v3022, %v3414
        %v3479 = vadd.f32 %v3023, %v3415
        %v3480 = vadd.f32 %v3024, %v3416
        %v3481 = vadd.f32 %v3025, %v3417
        %v3482 = vadd.f32 %v3026, %v3418
        %v3483 = vadd.f32 %v3027, %v3419
        %v3484 = vadd.f32 %v3028, %v3420
        %v3485 = vadd.f32 %v3029, %v3421
        %v3486 = vadd.f32 %v3030, %v3422
        %v3487 = vadd.f32 %v3031, %v3423
        %v3488 = vadd.f32 %v3032, %v3424
        %v3489 = vadd.f32 %v3033, %v3425
        %v3490 = vadd.f32 %v3034, %v3426
        %v3491 = vadd.f32 %v3035, %v3427
        %v3492 = vadd.f32 %v3036, %v3428
        %v3493 = vadd.f32 %v3037, %v3429
        %v3494 = vadd.f32 %v3038, %v3430
        %v3495 = vadd.f32 %v3039, %v3431
        %v3496 = vadd.f32 %v3040, %v3432
        %v3497 = vadd.f32 %v3041, %v3433
        %v3498 = vadd.f32 %v3042, %v3434
        %v3499 = vadd.f32 %v3043, %v3435
        %v3500 = vadd.f32 %v3044, %v3436
        %v3501 = vadd.f32 %v3045, %v3437
        %v3502 = vadd.f32 %v3046, %v3438
        %v3503 = vadd.f32 %v3047, %v3439
        %v3504 = vadd.f32 %v3048, %v3440
        %v3505 = vadd.f32 %v3049, %v3441
        %v3506 = vadd.f32 %v3050, %v3442
        %v3507 = vadd.f32 %v3051, %v3443
        %v3508 = vadd.f32 %v3052, %v3444
        %v3509 = vadd.f32 %v3053, %v3445
        %v3510 = vadd.f32 %v3054, %v3446
        %v3511 = vadd.f32 %v3055, %v3447
        %v3512 = vadd.f32 %v3056, %v3448
        %v3513 = vadd.f32 %v3057, %v3449
        %v3514 = vadd.f32 %v3058, %v3450
        %v3515 = vadd.f32 %v3059, %v3451
        %v3516 = vadd.f32 %v3060, %v3452
        %v3517 = vadd.f32 %v3061, %v3453
        %v3518 = vadd.f32 %v3062, %v3454
        %v3519 = vadd.f32 %v3063, %v3455
        %v3520 = vadd.f32 %v3064, %v3456
        %v3521 = vadd.f32 %v3065, %v3457
        %v3522 = vadd.f32 %v3066, %v3458
        %v3523 = vadd.f32 %v3067, %v3459
        %s3524 = sld [smem:[#allocation2 + $0xe]]
        %v3525 = vstv %s3524
        %v3526 = vmul.f32 %v3525, %v201
        %v3527 = vmul.f32 %v3525, %v202
        %v3528 = vmul.f32 %v3525, %v203
        %v3529 = vmul.f32 %v3525, %v204
        %v3530 = vmul.f32 %v3525, %v205
        %v3531 = vmul.f32 %v3525, %v206
        %v3532 = vmul.f32 %v3525, %v207
        %v3533 = vmul.f32 %v3525, %v208
        %v3534 = vmul.f32 %v3525, %v209
        %v3535 = vmul.f32 %v3525, %v210
        %v3536 = vmul.f32 %v3525, %v211
        %v3537 = vmul.f32 %v3525, %v212
        %v3538 = vmul.f32 %v3525, %v213
        %v3539 = vmul.f32 %v3525, %v214
        %v3540 = vmul.f32 %v3525, %v215
        %v3541 = vmul.f32 %v3525, %v216
        %v3542 = vmul.f32 %v3525, %v217
        %v3543 = vmul.f32 %v3525, %v218
        %v3544 = vmul.f32 %v3525, %v219
        %v3545 = vmul.f32 %v3525, %v220
        %v3546 = vmul.f32 %v3525, %v221
        %v3547 = vmul.f32 %v3525, %v222
        %v3548 = vmul.f32 %v3525, %v223
        %v3549 = vmul.f32 %v3525, %v224
        %v3550 = vmul.f32 %v3525, %v225
        %v3551 = vmul.f32 %v3525, %v226
        %v3552 = vmul.f32 %v3525, %v227
        %v3553 = vmul.f32 %v3525, %v228
        %v3554 = vmul.f32 %v3525, %v229
        %v3555 = vmul.f32 %v3525, %v230
        %v3556 = vmul.f32 %v3525, %v231
        %v3557 = vmul.f32 %v3525, %v232
        %v3558 = vmul.f32 %v3525, %v233
        %v3559 = vmul.f32 %v3525, %v234
        %v3560 = vmul.f32 %v3525, %v235
        %v3561 = vmul.f32 %v3525, %v236
        %v3562 = vmul.f32 %v3525, %v237
        %v3563 = vmul.f32 %v3525, %v238
        %v3564 = vmul.f32 %v3525, %v239
        %v3565 = vmul.f32 %v3525, %v240
        %v3566 = vmul.f32 %v3525, %v241
        %v3567 = vmul.f32 %v3525, %v242
        %v3568 = vmul.f32 %v3525, %v243
        %v3569 = vmul.f32 %v3525, %v244
        %v3570 = vmul.f32 %v3525, %v245
        %v3571 = vmul.f32 %v3525, %v246
        %v3572 = vmul.f32 %v3525, %v247
        %v3573 = vmul.f32 %v3525, %v248
        %v3574 = vmul.f32 %v3525, %v249
        %v3575 = vmul.f32 %v3525, %v250
        %v3576 = vmul.f32 %v3525, %v251
        %v3577 = vmul.f32 %v3525, %v252
        %v3578 = vmul.f32 %v3525, %v253
        %v3579 = vmul.f32 %v3525, %v254
        %v3580 = vmul.f32 %v3525, %v255
        %v3581 = vmul.f32 %v3525, %v256
        %v3582 = vmul.f32 %v3525, %v257
        %v3583 = vmul.f32 %v3525, %v258
        %v3584 = vmul.f32 %v3525, %v259
        %v3585 = vmul.f32 %v3525, %v260
        %v3586 = vmul.f32 %v3525, %v261
        %v3587 = vmul.f32 %v3525, %v262
        %v3588 = vmul.f32 %v3525, %v263
        %v3589 = vmul.f32 %v3525, %v264
        %s3590 = sld [smem:[#allocation2 + $0xf]]
        %v3591 = vstv %s3590
        %v3592 = vmul.f32 %v3591, %v266
        %v3593 = vmul.f32 %v3591, %v267
        %v3594 = vmul.f32 %v3591, %v268
        %v3595 = vmul.f32 %v3591, %v269
        %v3596 = vmul.f32 %v3591, %v270
        %v3597 = vmul.f32 %v3591, %v271
        %v3598 = vmul.f32 %v3591, %v272
        %v3599 = vmul.f32 %v3591, %v273
        %v3600 = vmul.f32 %v3591, %v274
        %v3601 = vmul.f32 %v3591, %v275
        %v3602 = vmul.f32 %v3591, %v276
        %v3603 = vmul.f32 %v3591, %v277
        %v3604 = vmul.f32 %v3591, %v278
        %v3605 = vmul.f32 %v3591, %v279
        %v3606 = vmul.f32 %v3591, %v280
        %v3607 = vmul.f32 %v3591, %v281
        %v3608 = vmul.f32 %v3591, %v282
        %v3609 = vmul.f32 %v3591, %v283
        %v3610 = vmul.f32 %v3591, %v284
        %v3611 = vmul.f32 %v3591, %v285
        %v3612 = vmul.f32 %v3591, %v286
        %v3613 = vmul.f32 %v3591, %v287
        %v3614 = vmul.f32 %v3591, %v288
        %v3615 = vmul.f32 %v3591, %v289
        %v3616 = vmul.f32 %v3591, %v290
        %v3617 = vmul.f32 %v3591, %v291
        %v3618 = vmul.f32 %v3591, %v292
        %v3619 = vmul.f32 %v3591, %v293
        %v3620 = vmul.f32 %v3591, %v294
        %v3621 = vmul.f32 %v3591, %v295
        %v3622 = vmul.f32 %v3591, %v296
        %v3623 = vmul.f32 %v3591, %v297
        %v3624 = vmul.f32 %v3591, %v298
        %v3625 = vmul.f32 %v3591, %v299
        %v3626 = vmul.f32 %v3591, %v300
        %v3627 = vmul.f32 %v3591, %v301
        %v3628 = vmul.f32 %v3591, %v302
        %v3629 = vmul.f32 %v3591, %v303
        %v3630 = vmul.f32 %v3591, %v304
        %v3631 = vmul.f32 %v3591, %v305
        %v3632 = vmul.f32 %v3591, %v306
        %v3633 = vmul.f32 %v3591, %v307
        %v3634 = vmul.f32 %v3591, %v308
        %v3635 = vmul.f32 %v3591, %v309
        %v3636 = vmul.f32 %v3591, %v310
        %v3637 = vmul.f32 %v3591, %v311
        %v3638 = vmul.f32 %v3591, %v312
        %v3639 = vmul.f32 %v3591, %v313
        %v3640 = vmul.f32 %v3591, %v314
        %v3641 = vmul.f32 %v3591, %v315
        %v3642 = vmul.f32 %v3591, %v316
        %v3643 = vmul.f32 %v3591, %v317
        %v3644 = vmul.f32 %v3591, %v318
        %v3645 = vmul.f32 %v3591, %v319
        %v3646 = vmul.f32 %v3591, %v320
        %v3647 = vmul.f32 %v3591, %v321
        %v3648 = vmul.f32 %v3591, %v322
        %v3649 = vmul.f32 %v3591, %v323
        %v3650 = vmul.f32 %v3591, %v324
        %v3651 = vmul.f32 %v3591, %v325
        %v3652 = vmul.f32 %v3591, %v326
        %v3653 = vmul.f32 %v3591, %v327
        %v3654 = vmul.f32 %v3591, %v328
        %v3655 = vmul.f32 %v3591, %v329
        %v3656 = vadd.f32 %v3526, %v3592
        %v3657 = vadd.f32 %v3527, %v3593
        %v3658 = vadd.f32 %v3528, %v3594
        %v3659 = vadd.f32 %v3529, %v3595
        %v3660 = vadd.f32 %v3530, %v3596
        %v3661 = vadd.f32 %v3531, %v3597
        %v3662 = vadd.f32 %v3532, %v3598
        %v3663 = vadd.f32 %v3533, %v3599
        %v3664 = vadd.f32 %v3534, %v3600
        %v3665 = vadd.f32 %v3535, %v3601
        %v3666 = vadd.f32 %v3536, %v3602
        %v3667 = vadd.f32 %v3537, %v3603
        %v3668 = vadd.f32 %v3538, %v3604
        %v3669 = vadd.f32 %v3539, %v3605
        %v3670 = vadd.f32 %v3540, %v3606
        %v3671 = vadd.f32 %v3541, %v3607
        %v3672 = vadd.f32 %v3542, %v3608
        %v3673 = vadd.f32 %v3543, %v3609
        %v3674 = vadd.f32 %v3544, %v3610
        %v3675 = vadd.f32 %v3545, %v3611
        %v3676 = vadd.f32 %v3546, %v3612
        %v3677 = vadd.f32 %v3547, %v3613
        %v3678 = vadd.f32 %v3548, %v3614
        %v3679 = vadd.f32 %v3549, %v3615
        %v3680 = vadd.f32 %v3550, %v3616
        %v3681 = vadd.f32 %v3551, %v3617
        %v3682 = vadd.f32 %v3552, %v3618
        %v3683 = vadd.f32 %v3553, %v3619
        %v3684 = vadd.f32 %v3554, %v3620
        %v3685 = vadd.f32 %v3555, %v3621
        %v3686 = vadd.f32 %v3556, %v3622
        %v3687 = vadd.f32 %v3557, %v3623
        %v3688 = vadd.f32 %v3558, %v3624
        %v3689 = vadd.f32 %v3559, %v3625
        %v3690 = vadd.f32 %v3560, %v3626
        %v3691 = vadd.f32 %v3561, %v3627
        %v3692 = vadd.f32 %v3562, %v3628
        %v3693 = vadd.f32 %v3563, %v3629
        %v3694 = vadd.f32 %v3564, %v3630
        %v3695 = vadd.f32 %v3565, %v3631
        %v3696 = vadd.f32 %v3566, %v3632
        %v3697 = vadd.f32 %v3567, %v3633
        %v3698 = vadd.f32 %v3568, %v3634
        %v3699 = vadd.f32 %v3569, %v3635
        %v3700 = vadd.f32 %v3570, %v3636
        %v3701 = vadd.f32 %v3571, %v3637
        %v3702 = vadd.f32 %v3572, %v3638
        %v3703 = vadd.f32 %v3573, %v3639
        %v3704 = vadd.f32 %v3574, %v3640
        %v3705 = vadd.f32 %v3575, %v3641
        %v3706 = vadd.f32 %v3576, %v3642
        %v3707 = vadd.f32 %v3577, %v3643
        %v3708 = vadd.f32 %v3578, %v3644
        %v3709 = vadd.f32 %v3579, %v3645
        %v3710 = vadd.f32 %v3580, %v3646
        %v3711 = vadd.f32 %v3581, %v3647
        %v3712 = vadd.f32 %v3582, %v3648
        %v3713 = vadd.f32 %v3583, %v3649
        %v3714 = vadd.f32 %v3584, %v3650
        %v3715 = vadd.f32 %v3585, %v3651
        %v3716 = vadd.f32 %v3586, %v3652
        %v3717 = vadd.f32 %v3587, %v3653
        %v3718 = vadd.f32 %v3588, %v3654
        %v3719 = vadd.f32 %v3589, %v3655
        %s3720 = sld [smem:[#allocation2 + $0x17]]
        %v3721 = vstv %s3720
        %v3722 = vadd.f32 %v3656, %v3721
        %v3723 = vadd.f32 %v3657, %v3721
        %v3724 = vadd.f32 %v3658, %v3721
        %v3725 = vadd.f32 %v3659, %v3721
        %v3726 = vadd.f32 %v3660, %v3721
        %v3727 = vadd.f32 %v3661, %v3721
        %v3728 = vadd.f32 %v3662, %v3721
        %v3729 = vadd.f32 %v3663, %v3721
        %v3730 = vadd.f32 %v3664, %v3721
        %v3731 = vadd.f32 %v3665, %v3721
        %v3732 = vadd.f32 %v3666, %v3721
        %v3733 = vadd.f32 %v3667, %v3721
        %v3734 = vadd.f32 %v3668, %v3721
        %v3735 = vadd.f32 %v3669, %v3721
        %v3736 = vadd.f32 %v3670, %v3721
        %v3737 = vadd.f32 %v3671, %v3721
        %v3738 = vadd.f32 %v3672, %v3721
        %v3739 = vadd.f32 %v3673, %v3721
        %v3740 = vadd.f32 %v3674, %v3721
        %v3741 = vadd.f32 %v3675, %v3721
        %v3742 = vadd.f32 %v3676, %v3721
        %v3743 = vadd.f32 %v3677, %v3721
        %v3744 = vadd.f32 %v3678, %v3721
        %v3745 = vadd.f32 %v3679, %v3721
        %v3746 = vadd.f32 %v3680, %v3721
        %v3747 = vadd.f32 %v3681, %v3721
        %v3748 = vadd.f32 %v3682, %v3721
        %v3749 = vadd.f32 %v3683, %v3721
        %v3750 = vadd.f32 %v3684, %v3721
        %v3751 = vadd.f32 %v3685, %v3721
        %v3752 = vadd.f32 %v3686, %v3721
        %v3753 = vadd.f32 %v3687, %v3721
        %v3754 = vadd.f32 %v3688, %v3721
        %v3755 = vadd.f32 %v3689, %v3721
        %v3756 = vadd.f32 %v3690, %v3721
        %v3757 = vadd.f32 %v3691, %v3721
        %v3758 = vadd.f32 %v3692, %v3721
        %v3759 = vadd.f32 %v3693, %v3721
        %v3760 = vadd.f32 %v3694, %v3721
        %v3761 = vadd.f32 %v3695, %v3721
        %v3762 = vadd.f32 %v3696, %v3721
        %v3763 = vadd.f32 %v3697, %v3721
        %v3764 = vadd.f32 %v3698, %v3721
        %v3765 = vadd.f32 %v3699, %v3721
        %v3766 = vadd.f32 %v3700, %v3721
        %v3767 = vadd.f32 %v3701, %v3721
        %v3768 = vadd.f32 %v3702, %v3721
        %v3769 = vadd.f32 %v3703, %v3721
        %v3770 = vadd.f32 %v3704, %v3721
        %v3771 = vadd.f32 %v3705, %v3721
        %v3772 = vadd.f32 %v3706, %v3721
        %v3773 = vadd.f32 %v3707, %v3721
        %v3774 = vadd.f32 %v3708, %v3721
        %v3775 = vadd.f32 %v3709, %v3721
        %v3776 = vadd.f32 %v3710, %v3721
        %v3777 = vadd.f32 %v3711, %v3721
        %v3778 = vadd.f32 %v3712, %v3721
        %v3779 = vadd.f32 %v3713, %v3721
        %v3780 = vadd.f32 %v3714, %v3721
        %v3781 = vadd.f32 %v3715, %v3721
        %v3782 = vadd.f32 %v3716, %v3721
        %v3783 = vadd.f32 %v3717, %v3721
        %v3784 = vadd.f32 %v3718, %v3721
        %v3785 = vadd.f32 %v3719, %v3721
        %v3786 = vtanh.pop %v3722
        %v3787 = vtanh.pop %v3723
        %v3788 = vtanh.pop %v3724
        %v3789 = vtanh.pop %v3725
        %v3790 = vtanh.pop %v3726
        %v3791 = vtanh.pop %v3727
        %v3792 = vtanh.pop %v3728
        %v3793 = vtanh.pop %v3729
        %v3794 = vtanh.pop %v3730
        %v3795 = vtanh.pop %v3731
        %v3796 = vtanh.pop %v3732
        %v3797 = vtanh.pop %v3733
        %v3798 = vtanh.pop %v3734
        %v3799 = vtanh.pop %v3735
        %v3800 = vtanh.pop %v3736
        %v3801 = vtanh.pop %v3737
        %v3802 = vtanh.pop %v3738
        %v3803 = vtanh.pop %v3739
        %v3804 = vtanh.pop %v3740
        %v3805 = vtanh.pop %v3741
        %v3806 = vtanh.pop %v3742
        %v3807 = vtanh.pop %v3743
        %v3808 = vtanh.pop %v3744
        %v3809 = vtanh.pop %v3745
        %v3810 = vtanh.pop %v3746
        %v3811 = vtanh.pop %v3747
        %v3812 = vtanh.pop %v3748
        %v3813 = vtanh.pop %v3749
        %v3814 = vtanh.pop %v3750
        %v3815 = vtanh.pop %v3751
        %v3816 = vtanh.pop %v3752
        %v3817 = vtanh.pop %v3753
        %v3818 = vtanh.pop %v3754
        %v3819 = vtanh.pop %v3755
        %v3820 = vtanh.pop %v3756
        %v3821 = vtanh.pop %v3757
        %v3822 = vtanh.pop %v3758
        %v3823 = vtanh.pop %v3759
        %v3824 = vtanh.pop %v3760
        %v3825 = vtanh.pop %v3761
        %v3826 = vtanh.pop %v3762
        %v3827 = vtanh.pop %v3763
        %v3828 = vtanh.pop %v3764
        %v3829 = vtanh.pop %v3765
        %v3830 = vtanh.pop %v3766
        %v3831 = vtanh.pop %v3767
        %v3832 = vtanh.pop %v3768
        %v3833 = vtanh.pop %v3769
        %v3834 = vtanh.pop %v3770
        %v3835 = vtanh.pop %v3771
        %v3836 = vtanh.pop %v3772
        %v3837 = vtanh.pop %v3773
        %v3838 = vtanh.pop %v3774
        %v3839 = vtanh.pop %v3775
        %v3840 = vtanh.pop %v3776
        %v3841 = vtanh.pop %v3777
        %v3842 = vtanh.pop %v3778
        %v3843 = vtanh.pop %v3779
        %v3844 = vtanh.pop %v3780
        %v3845 = vtanh.pop %v3781
        %v3846 = vtanh.pop %v3782
        %v3847 = vtanh.pop %v3783
        %v3848 = vtanh.pop %v3784
        %v3849 = vtanh.pop %v3785
        %s3850 = sld [smem:[#allocation2 + $0x1f]]
        %v3851 = vstv %s3850
        %v3852 = vmul.f32 %v3851, %v3786
        %v3853 = vmul.f32 %v3851, %v3787
        %v3854 = vmul.f32 %v3851, %v3788
        %v3855 = vmul.f32 %v3851, %v3789
        %v3856 = vmul.f32 %v3851, %v3790
        %v3857 = vmul.f32 %v3851, %v3791
        %v3858 = vmul.f32 %v3851, %v3792
        %v3859 = vmul.f32 %v3851, %v3793
        %v3860 = vmul.f32 %v3851, %v3794
        %v3861 = vmul.f32 %v3851, %v3795
        %v3862 = vmul.f32 %v3851, %v3796
        %v3863 = vmul.f32 %v3851, %v3797
        %v3864 = vmul.f32 %v3851, %v3798
        %v3865 = vmul.f32 %v3851, %v3799
        %v3866 = vmul.f32 %v3851, %v3800
        %v3867 = vmul.f32 %v3851, %v3801
        %v3868 = vmul.f32 %v3851, %v3802
        %v3869 = vmul.f32 %v3851, %v3803
        %v3870 = vmul.f32 %v3851, %v3804
        %v3871 = vmul.f32 %v3851, %v3805
        %v3872 = vmul.f32 %v3851, %v3806
        %v3873 = vmul.f32 %v3851, %v3807
        %v3874 = vmul.f32 %v3851, %v3808
        %v3875 = vmul.f32 %v3851, %v3809
        %v3876 = vmul.f32 %v3851, %v3810
        %v3877 = vmul.f32 %v3851, %v3811
        %v3878 = vmul.f32 %v3851, %v3812
        %v3879 = vmul.f32 %v3851, %v3813
        %v3880 = vmul.f32 %v3851, %v3814
        %v3881 = vmul.f32 %v3851, %v3815
        %v3882 = vmul.f32 %v3851, %v3816
        %v3883 = vmul.f32 %v3851, %v3817
        %v3884 = vmul.f32 %v3851, %v3818
        %v3885 = vmul.f32 %v3851, %v3819
        %v3886 = vmul.f32 %v3851, %v3820
        %v3887 = vmul.f32 %v3851, %v3821
        %v3888 = vmul.f32 %v3851, %v3822
        %v3889 = vmul.f32 %v3851, %v3823
        %v3890 = vmul.f32 %v3851, %v3824
        %v3891 = vmul.f32 %v3851, %v3825
        %v3892 = vmul.f32 %v3851, %v3826
        %v3893 = vmul.f32 %v3851, %v3827
        %v3894 = vmul.f32 %v3851, %v3828
        %v3895 = vmul.f32 %v3851, %v3829
        %v3896 = vmul.f32 %v3851, %v3830
        %v3897 = vmul.f32 %v3851, %v3831
        %v3898 = vmul.f32 %v3851, %v3832
        %v3899 = vmul.f32 %v3851, %v3833
        %v3900 = vmul.f32 %v3851, %v3834
        %v3901 = vmul.f32 %v3851, %v3835
        %v3902 = vmul.f32 %v3851, %v3836
        %v3903 = vmul.f32 %v3851, %v3837
        %v3904 = vmul.f32 %v3851, %v3838
        %v3905 = vmul.f32 %v3851, %v3839
        %v3906 = vmul.f32 %v3851, %v3840
        %v3907 = vmul.f32 %v3851, %v3841
        %v3908 = vmul.f32 %v3851, %v3842
        %v3909 = vmul.f32 %v3851, %v3843
        %v3910 = vmul.f32 %v3851, %v3844
        %v3911 = vmul.f32 %v3851, %v3845
        %v3912 = vmul.f32 %v3851, %v3846
        %v3913 = vmul.f32 %v3851, %v3847
        %v3914 = vmul.f32 %v3851, %v3848
        %v3915 = vmul.f32 %v3851, %v3849
        %v3916 = vadd.f32 %v3460, %v3852
        %v3917 = vadd.f32 %v3461, %v3853
        %v3918 = vadd.f32 %v3462, %v3854
        %v3919 = vadd.f32 %v3463, %v3855
        %v3920 = vadd.f32 %v3464, %v3856
        %v3921 = vadd.f32 %v3465, %v3857
        %v3922 = vadd.f32 %v3466, %v3858
        %v3923 = vadd.f32 %v3467, %v3859
        %v3924 = vadd.f32 %v3468, %v3860
        %v3925 = vadd.f32 %v3469, %v3861
        %v3926 = vadd.f32 %v3470, %v3862
        %v3927 = vadd.f32 %v3471, %v3863
        %v3928 = vadd.f32 %v3472, %v3864
        %v3929 = vadd.f32 %v3473, %v3865
        %v3930 = vadd.f32 %v3474, %v3866
        %v3931 = vadd.f32 %v3475, %v3867
        %v3932 = vadd.f32 %v3476, %v3868
        %v3933 = vadd.f32 %v3477, %v3869
        %v3934 = vadd.f32 %v3478, %v3870
        %v3935 = vadd.f32 %v3479, %v3871
        %v3936 = vadd.f32 %v3480, %v3872
        %v3937 = vadd.f32 %v3481, %v3873
        %v3938 = vadd.f32 %v3482, %v3874
        %v3939 = vadd.f32 %v3483, %v3875
        %v3940 = vadd.f32 %v3484, %v3876
        %v3941 = vadd.f32 %v3485, %v3877
        %v3942 = vadd.f32 %v3486, %v3878
        %v3943 = vadd.f32 %v3487, %v3879
        %v3944 = vadd.f32 %v3488, %v3880
        %v3945 = vadd.f32 %v3489, %v3881
        %v3946 = vadd.f32 %v3490, %v3882
        %v3947 = vadd.f32 %v3491, %v3883
        %v3948 = vadd.f32 %v3492, %v3884
        %v3949 = vadd.f32 %v3493, %v3885
        %v3950 = vadd.f32 %v3494, %v3886
        %v3951 = vadd.f32 %v3495, %v3887
        %v3952 = vadd.f32 %v3496, %v3888
        %v3953 = vadd.f32 %v3497, %v3889
        %v3954 = vadd.f32 %v3498, %v3890
        %v3955 = vadd.f32 %v3499, %v3891
        %v3956 = vadd.f32 %v3500, %v3892
        %v3957 = vadd.f32 %v3501, %v3893
        %v3958 = vadd.f32 %v3502, %v3894
        %v3959 = vadd.f32 %v3503, %v3895
        %v3960 = vadd.f32 %v3504, %v3896
        %v3961 = vadd.f32 %v3505, %v3897
        %v3962 = vadd.f32 %v3506, %v3898
        %v3963 = vadd.f32 %v3507, %v3899
        %v3964 = vadd.f32 %v3508, %v3900
        %v3965 = vadd.f32 %v3509, %v3901
        %v3966 = vadd.f32 %v3510, %v3902
        %v3967 = vadd.f32 %v3511, %v3903
        %v3968 = vadd.f32 %v3512, %v3904
        %v3969 = vadd.f32 %v3513, %v3905
        %v3970 = vadd.f32 %v3514, %v3906
        %v3971 = vadd.f32 %v3515, %v3907
        %v3972 = vadd.f32 %v3516, %v3908
        %v3973 = vadd.f32 %v3517, %v3909
        %v3974 = vadd.f32 %v3518, %v3910
        %v3975 = vadd.f32 %v3519, %v3911
        %v3976 = vadd.f32 %v3520, %v3912
        %v3977 = vadd.f32 %v3521, %v3913
        %v3978 = vadd.f32 %v3522, %v3914
        %v3979 = vadd.f32 %v3523, %v3915
        %3980 = vst [vmem:[%s198] sm:$0xff] %v3916
        %3981 = vst [vmem:[%s198 + $0x8] sm:$0xff] %v3917
        %3982 = vst [vmem:[%s198 + $0x10] sm:$0xff] %v3918
        %3983 = vst [vmem:[%s198 + $0x18] sm:$0xff] %v3919
        %3984 = vst [vmem:[%s198 + $0x20] sm:$0xff] %v3920
        %3985 = vst [vmem:[%s198 + $0x28] sm:$0xff] %v3921
        %3986 = vst [vmem:[%s198 + $0x30] sm:$0xff] %v3922
        %3987 = vst [vmem:[%s198 + $0x38] sm:$0xff] %v3923
        %3988 = vst [vmem:[%s198 + $0x40] sm:$0xff] %v3924
        %3989 = vst [vmem:[%s198 + $0x48] sm:$0xff] %v3925
        %3990 = vst [vmem:[%s198 + $0x50] sm:$0xff] %v3926
        %3991 = vst [vmem:[%s198 + $0x58] sm:$0xff] %v3927
        %3992 = vst [vmem:[%s198 + $0x60] sm:$0xff] %v3928
        %3993 = vst [vmem:[%s198 + $0x68] sm:$0xff] %v3929
        %3994 = vst [vmem:[%s198 + $0x70] sm:$0xff] %v3930
        %3995 = vst [vmem:[%s198 + $0x78] sm:$0xff] %v3931
        %3996 = vst [vmem:[%s198 + $0x80] sm:$0xff] %v3932
        %3997 = vst [vmem:[%s198 + $0x88] sm:$0xff] %v3933
        %3998 = vst [vmem:[%s198 + $0x90] sm:$0xff] %v3934
        %3999 = vst [vmem:[%s198 + $0x98] sm:$0xff] %v3935
        %4000 = vst [vmem:[%s198 + $0xa0] sm:$0xff] %v3936
        %4001 = vst [vmem:[%s198 + $0xa8] sm:$0xff] %v3937
        %4002 = vst [vmem:[%s198 + $0xb0] sm:$0xff] %v3938
        %4003 = vst [vmem:[%s198 + $0xb8] sm:$0xff] %v3939
        %4004 = vst [vmem:[%s198 + $0xc0] sm:$0xff] %v3940
        %4005 = vst [vmem:[%s198 + $0xc8] sm:$0xff] %v3941
        %4006 = vst [vmem:[%s198 + $0xd0] sm:$0xff] %v3942
        %4007 = vst [vmem:[%s198 + $0xd8] sm:$0xff] %v3943
        %4008 = vst [vmem:[%s198 + $0xe0] sm:$0xff] %v3944
        %4009 = vst [vmem:[%s198 + $0xe8] sm:$0xff] %v3945
        %4010 = vst [vmem:[%s198 + $0xf0] sm:$0xff] %v3946
        %4011 = vst [vmem:[%s198 + $0xf8] sm:$0xff] %v3947
        %4012 = vst [vmem:[%s198 + $0x100] sm:$0xff] %v3948
        %4013 = vst [vmem:[%s198 + $0x108] sm:$0xff] %v3949
        %4014 = vst [vmem:[%s198 + $0x110] sm:$0xff] %v3950
        %4015 = vst [vmem:[%s198 + $0x118] sm:$0xff] %v3951
        %4016 = vst [vmem:[%s198 + $0x120] sm:$0xff] %v3952
        %4017 = vst [vmem:[%s198 + $0x128] sm:$0xff] %v3953
        %4018 = vst [vmem:[%s198 + $0x130] sm:$0xff] %v3954
        %4019 = vst [vmem:[%s198 + $0x138] sm:$0xff] %v3955
        %4020 = vst [vmem:[%s198 + $0x140] sm:$0xff] %v3956
        %4021 = vst [vmem:[%s198 + $0x148] sm:$0xff] %v3957
        %4022 = vst [vmem:[%s198 + $0x150] sm:$0xff] %v3958
        %4023 = vst [vmem:[%s198 + $0x158] sm:$0xff] %v3959
        %4024 = vst [vmem:[%s198 + $0x160] sm:$0xff] %v3960
        %4025 = vst [vmem:[%s198 + $0x168] sm:$0xff] %v3961
        %4026 = vst [vmem:[%s198 + $0x170] sm:$0xff] %v3962
        %4027 = vst [vmem:[%s198 + $0x178] sm:$0xff] %v3963
        %4028 = vst [vmem:[%s198 + $0x180] sm:$0xff] %v3964
        %4029 = vst [vmem:[%s198 + $0x188] sm:$0xff] %v3965
        %4030 = vst [vmem:[%s198 + $0x190] sm:$0xff] %v3966
        %4031 = vst [vmem:[%s198 + $0x198] sm:$0xff] %v3967
        %4032 = vst [vmem:[%s198 + $0x1a0] sm:$0xff] %v3968
        %4033 = vst [vmem:[%s198 + $0x1a8] sm:$0xff] %v3969
        %4034 = vst [vmem:[%s198 + $0x1b0] sm:$0xff] %v3970
        %4035 = vst [vmem:[%s198 + $0x1b8] sm:$0xff] %v3971
        %4036 = vst [vmem:[%s198 + $0x1c0] sm:$0xff] %v3972
        %4037 = vst [vmem:[%s198 + $0x1c8] sm:$0xff] %v3973
        %4038 = vst [vmem:[%s198 + $0x1d0] sm:$0xff] %v3974
        %4039 = vst [vmem:[%s198 + $0x1d8] sm:$0xff] %v3975
        %4040 = vst [vmem:[%s198 + $0x1e0] sm:$0xff] %v3976
        %4041 = vst [vmem:[%s198 + $0x1e8] sm:$0xff] %v3977
        %4042 = vst [vmem:[%s198 + $0x1f0] sm:$0xff] %v3978
        %4043 = vst [vmem:[%s198 + $0x1f8] sm:$0xff] %v3979
        %s4044 = sand.u32 %s75, 1
        %s4045 = scalar_lea.sflag [#allocation4], %s4044
        %s4046 = sand.u32 %s75, 1
        %s4047 = smul.addr %s4046, 512
        %s4048 = scalar_lea.vmem [#allocation7], %s4047
        // Predicated region
        $region37: #{tpu_custom_call.1} parent=27 // pred_check
          %p4049 = pneg %p85
        $region38: #{tpu_custom_call.1} parent=27 // pred_check_branch
          %4051 = sbr.rel (%p4049) target = $region40
        $region39: #{tpu_custom_call.1} parent=27 // pred_region
          %s4052 = smul.u32 64, %s20
          %s4054 = ssub.s32 8192, 8192
          %4055 = vsyncadd %s4045, %s4054
          %s4056 = smul.addr %s4052, 128
          %s4057 = scalar_lea.hbm %s2, %s4056
          %s4058 = sshll.u32 %s4048, 4
          %s4059 = int_to_ptr.vmem [resolvable:$true] %s4058
          %4064 = dma.vmem_to_hbm [thread:$0]  %s4059, 8192, %s4057, %s4045, 128, 128, 8
        $region40: #{tpu_custom_call.1} parent=27 // pred_fallthru
          _
      $region28: #{tpu_custom_call.1} parent=5 // pred_fallthru
        _
      %p4065 = scmp.le.s32.totalorder 2, %s15
      // Predicated region
      $region41: #{tpu_custom_call.1} parent=5 // pred_check
        %p4066 = pneg %p4065
      $region42: #{tpu_custom_call.1} parent=5 // pred_check_branch
        %4068 = sbr.rel (%p4066) target = $region44
      $region43: #{tpu_custom_call.1} parent=5 // pred_region
        %s4069 = ssub.s32 %s15, 2
        // Predicated region
        $region45: #{tpu_custom_call.1} parent=43 // pred_check
          %p4070 = pneg %p91
        $region46: #{tpu_custom_call.1} parent=43 // pred_check_branch
          %4072 = sbr.rel (%p4070) target = $region48
        $region47: #{tpu_custom_call.1} parent=43 // pred_region
          %s4073 = sand.u32 %s76, 1
          %s4074 = scalar_lea.sflag [#allocation4], %s4073
          %s4075 = sand.u32 %s76, 1
          %s4076 = smul.addr %s4075, 512
          %s4077 = scalar_lea.vmem [#allocation7], %s4076
          %4078 = dma.done %s4074, 8192
        $region48: #{tpu_custom_call.1} parent=43 // pred_fallthru
          _
      $region44: #{tpu_custom_call.1} parent=5 // pred_fallthru
        _
    $region6: #{tpu_custom_call.1} parent=1 // loop_footer
      %s19 = sadd.s32 1, %s15
    $region7: #{tpu_custom_call.1} parent=1 // loop_footer_branch
      %14 = sbr.rel target = $region3
    $region8: #{tpu_custom_call.1} parent=1 // loop_exit
      _
    %4079 = vsyncpa [#allocation3], 1
    %s4080 = scalar_lea.sflag [#allocation3], 1
    %4081 = vsyncpa %s4080, 1
    %4082 = vsyncpa [#allocation4], 1
    %s4083 = scalar_lea.sflag [#allocation4], 1
    %4084 = vsyncpa %s4083, 1
    %4085 = vsyncpa [#allocation5], 1
    %s4086 = scalar_lea.sflag [#allocation5], 1
    %4087 = vsyncpa %s4086, 1

</llo_original>
